<compile_context>
chip_gen: v6e
topology: v6e:2x2x1
jax: 0.10.0
libtpu: 0.0.40
codegen_flags: <defaults>
</compile_context>

<pallas_src>
import math

import jax
import jax.numpy as jnp
from jax import lax
from jax.experimental import pallas as pl
from jax.experimental.pallas import tpu as pltpu


def _make_kernel(num_heads, block_b, need_weights):
    """Kernel processes `block_b` batch elements per grid step."""
    H = num_heads

    def kernel(*refs):
        if need_weights:
            (x_ref, y_ref, mbias_ref,
             wq_ref, wk_ref, wv_ref, bq_ref, bk_ref, bv_ref,
             wo_ref, bo_ref, g1_ref, be1_ref,
             wf1_ref, bf1_ref, wf2_ref, bf2_ref, g2_ref, be2_ref,
             out_ref, attn_ref, ctx_ref) = refs
        else:
            (x_ref, y_ref, mbias_ref,
             wq_ref, wk_ref, wv_ref, bq_ref, bk_ref, bv_ref,
             wo_ref, bo_ref, g1_ref, be1_ref,
             wf1_ref, bf1_ref, wf2_ref, bf2_ref, g2_ref, be2_ref,
             out_ref, ctx_ref) = refs
            attn_ref = None

        cdt = wq_ref.dtype                    # MXU input dtype (bf16)
        Lq, E = x_ref.shape[1], x_ref.shape[2]
        Lk = y_ref.shape[1]
        Dh = E // H

        # Weights / biases: constant block index -> resident across grid steps.
        wq, wk, wv, wo = wq_ref[...], wk_ref[...], wv_ref[...], wo_ref[...]
        bq, bk, bv, bo = bq_ref[...], bk_ref[...], bv_ref[...], bo_ref[...]
        wf1, bf1, wf2, bf2 = wf1_ref[...], bf1_ref[...], wf2_ref[...], bf2_ref[...]
        g1, be1, g2, be2 = g1_ref[...], be1_ref[...], g2_ref[...], be2_ref[...]

        def layer_norm(z, gamma, beta):
            mu = jnp.mean(z, axis=-1, keepdims=True)
            zc = z - mu
            var = jnp.mean(zc * zc, axis=-1, keepdims=True)
            return zc * lax.rsqrt(var + 1e-5) * gamma + beta

        for b in range(block_b):
            x = x_ref[b]                                    # (Lq, E) f32
            y = y_ref[b]                                    # (Lk, E) f32
            # hoist the key-padding bias broadcast out of the head loop
            mb = jnp.broadcast_to(mbias_ref[b], (Lq, Lk))   # (Lq, Lk) f32

            xb = x.astype(cdt)
            yb = y.astype(cdt)

            # Input projections: K=E matmuls, bf16 in / f32 accumulate.
            # NOTE: the 1/sqrt(Dh) scale is pre-folded into wq/bq on the host.
            q = jnp.dot(xb, wq, preferred_element_type=jnp.float32) + bq
            k = jnp.dot(yb, wk, preferred_element_type=jnp.float32) + bk
            v = jnp.dot(yb, wv, preferred_element_type=jnp.float32) + bv
            qc, kc, vc = q.astype(cdt), k.astype(cdt), v.astype(cdt)

            attn_sum = jnp.zeros((Lq, Lk), jnp.float32)

            # Static per-head loop; contexts land in their lane slice of the
            # (Lq, E) scratch so one single K=E output projection follows.
            for h in range(H):
                sl = slice(h * Dh, (h + 1) * Dh)
                s = lax.dot_general(qc[:, sl], kc[:, sl],
                                    (((1,), (1,)), ((), ())),
                                    preferred_element_type=jnp.float32)
                s = s + mb
                s = s - jnp.max(s, axis=-1, keepdims=True)
                p = jnp.exp(s)
                denom = jnp.sum(p, axis=-1, keepdims=True)
                attn = p * pl.reciprocal(denom, approx=True)     # EUP divide
                if need_weights:
                    attn_sum = attn_sum + attn
                ctx_h = jnp.dot(attn.astype(cdt), vc[:, sl],
                                preferred_element_type=jnp.float32)
                ctx_ref[:, sl] = ctx_h                           # (Lq, Dh)

            if need_weights:
                attn_ref[b] = attn_sum * (1.0 / H)   # head-averaged weights

            # Single K=E output projection over the concatenated heads.
            attn_out = jnp.dot(ctx_ref[...].astype(cdt), wo,
                               preferred_element_type=jnp.float32) + bo

            # TODO(synk): dropout is identity (inference); training-mode RNG
            # dropout is not implemented.
            h1 = layer_norm(attn_out + x, g1, be1)

            ff = jnp.dot(h1.astype(cdt), wf1,
                         preferred_element_type=jnp.float32) + bf1
            ff = jnp.maximum(ff, 0.0)
            ff = jnp.dot(ff.astype(cdt), wf2,
                         preferred_element_type=jnp.float32) + bf2

            out_ref[b] = layer_norm(ff + h1, g2, be2)

    return kernel


def correlation_attention_layer(x, y, params, mask=None, *, need_weights=True,
                                compute_dtype=jnp.bfloat16, block_b=None):
    """x: (B, Lq, E), y: (B, Lk, E), mask: optional bool (B, Lk), True = ignore key."""
    B, Lq, E = x.shape
    Lk = y.shape[1]
    H = params["num_heads"]
    assert E % H == 0
    Dh = E // H
    FE = params["w_ff1"].shape[1]

    # Batch elements per grid step: amortize per-step pipeline overhead while
    # keeping >= 2 grid steps when possible (v7x dual-TC load balance).
    if block_b is None:
        block_b = 1
        for d in range(1, min(B, 8) + 1):
            if B % d == 0 and (B // d >= 2 or B == 1):
                block_b = d
    assert B % block_b == 0
    grid_b = B // block_b

    if mask is None:
        mbias = jnp.zeros((B, 1, Lk), jnp.float32)
    else:
        mbias = jnp.where(mask, -1e30, 0.0).astype(jnp.float32).reshape(B, 1, Lk)

    scale = 1.0 / math.sqrt(Dh)
    cdt = compute_dtype

    # Cast all matmul weight operands to bf16 on the host (native MXU input
    # width, halves resident VMEM). Biases stay f32, added post-accumulation.
    # Fold the softmax scale into the query projection.
    wq = (params["wq"] * scale).astype(cdt)
    wk = params["wk"].astype(cdt)
    wv = params["wv"].astype(cdt)
    wo = params["wo"].astype(cdt)
    wf1 = params["w_ff1"].astype(cdt)
    wf2 = params["w_ff2"].astype(cdt)

    def row2(name, s=1.0):
        return (params[name] * s).reshape(1, -1).astype(jnp.float32)

    bq, bk, bv, bo = row2("bq", scale), row2("bk"), row2("bv"), row2("bo")
    g1, be1 = row2("ln1_g"), row2("ln1_b")
    bf1, bf2 = row2("b_ff1"), row2("b_ff2")
    g2, be2 = row2("ln2_g"), row2("ln2_b")

    bmap3 = lambda i: (i, 0, 0)   # batch-tiled blocks
    fix2 = lambda i: (0, 0)       # weights/biases resident across grid steps

    in_specs = [
        pl.BlockSpec((block_b, Lq, E), bmap3),     # x
        pl.BlockSpec((block_b, Lk, E), bmap3),     # y
        pl.BlockSpec((block_b, 1, Lk), bmap3),     # mask bias
        pl.BlockSpec((E, E), fix2),                # wq (pre-scaled, bf16)
        pl.BlockSpec((E, E), fix2),                # wk
        pl.BlockSpec((E, E), fix2),                # wv
        pl.BlockSpec((1, E), fix2),                # bq
        pl.BlockSpec((1, E), fix2),                # bk
        pl.BlockSpec((1, E), fix2),                # bv
        pl.BlockSpec((E, E), fix2),                # wo
        pl.BlockSpec((1, E), fix2),                # bo
        pl.BlockSpec((1, E), fix2),                # ln1 gamma
        pl.BlockSpec((1, E), fix2),                # ln1 beta
        pl.BlockSpec((E, FE), fix2),               # ff w1
        pl.BlockSpec((1, FE), fix2),               # ff b1
        pl.BlockSpec((FE, E), fix2),               # ff w2
        pl.BlockSpec((1, E), fix2),                # ff b2
        pl.BlockSpec((1, E), fix2),                # ln2 gamma
        pl.BlockSpec((1, E), fix2),                # ln2 beta
    ]
    out_specs = [pl.BlockSpec((block_b, Lq, E), bmap3)]
    out_shape = [jax.ShapeDtypeStruct((B, Lq, E), jnp.float32)]
    if need_weights:
        out_specs.append(pl.BlockSpec((block_b, Lq, Lk), bmap3))
        out_shape.append(jax.ShapeDtypeStruct((B, Lq, Lk), jnp.float32))

    # Explicit VMEM budget: double-buffered weights + activation blocks +
    # scratch, with headroom; clamp to v7x's 64 MiB physical VMEM per core.
    wbytes = jnp.dtype(cdt).itemsize * (4 * E * E + 2 * E * FE)
    bbytes = 4 * (9 * E + FE)
    ablock = 4 * block_b * (2 * Lq * E + Lk * E + Lk
                            + (Lq * Lk if need_weights else 0))
    vmem_bytes = 2 * (wbytes + bbytes) + 2 * ablock + 4 * Lq * E
    vmem_limit = int(min(max(2 * vmem_bytes, 32 * 1024 * 1024),
                         64 * 1024 * 1024))

    outs = pl.pallas_call(
        _make_kernel(H, block_b, need_weights),
        grid=(grid_b,),
        in_specs=in_specs,
        out_specs=out_specs,
        out_shape=out_shape,
        scratch_shapes=[pltpu.VMEM((Lq, E), jnp.float32)],   # merged-head ctx
        compiler_params=pltpu.CompilerParams(
            dimension_semantics=("parallel",),
            vmem_limit_bytes=vmem_limit,
        ),
    )(x, y, mbias, wq, wk, wv, bq, bk, bv, wo, bo, g1, be1,
      wf1, bf1, wf2, bf2, g2, be2)

    if need_weights:
        return outs[0], outs[1]
    return outs[0], None


def init_params(key, embed_size, heads, forward_expansion):
    E = embed_size
    FE = forward_expansion * E
    ks = jax.random.split(key, 12)

    def lin(kw, kb, fan_in, fan_out):
        bound = 1.0 / math.sqrt(fan_in)
        w = jax.random.uniform(kw, (fan_in, fan_out), jnp.float32, -bound, bound)
        b = jax.random.uniform(kb, (fan_out,), jnp.float32, -bound, bound)
        return w, b

    wq, bq = lin(ks[0], ks[1], E, E)
    wk, bk = lin(ks[2], ks[3], E, E)
    wv, bv = lin(ks[4], ks[5], E, E)
    wo, bo = lin(ks[6], ks[7], E, E)
    w_ff1, b_ff1 = lin(ks[8], ks[9], E, FE)
    w_ff2, b_ff2 = lin(ks[10], ks[11], FE, E)
    ln1_g = 1.0 + 0.1 * jax.random.normal(jax.random.fold_in(key, 100), (E,), jnp.float32)
    ln1_b = 0.05 * jax.random.normal(jax.random.fold_in(key, 101), (E,), jnp.float32)
    ln2_g = 1.0 + 0.1 * jax.random.normal(jax.random.fold_in(key, 102), (E,), jnp.float32)
    ln2_b = 0.05 * jax.random.normal(jax.random.fold_in(key, 103), (E,), jnp.float32)
    return dict(num_heads=heads,
                wq=wq, wk=wk, wv=wv, wo=wo, bq=bq, bk=bk, bv=bv, bo=bo,
                w_ff1=w_ff1, b_ff1=b_ff1, w_ff2=w_ff2, b_ff2=b_ff2,
                ln1_g=ln1_g, ln1_b=ln1_b, ln2_g=ln2_g, ln2_b=ln2_b)


def reference(x, y, params, mask=None):
    """Pure-JAX f32 reference implementing torch MultiheadAttention + block semantics."""
    H = params["num_heads"]
    B, Lq, E = x.shape
    Lk = y.shape[1]
    Dh = E // H
    hi = jax.lax.Precision.HIGHEST

    q = jnp.einsum('ble,ef->blf', x, params["wq"], precision=hi) + params["bq"]
    k = jnp.einsum('ble,ef->blf', y, params["wk"], precision=hi) + params["bk"]
    v = jnp.einsum('ble,ef->blf', y, params["wv"], precision=hi) + params["bv"]
    qh = q.reshape(B, Lq, H, Dh).transpose(0, 2, 1, 3)
    kh = k.reshape(B, Lk, H, Dh).transpose(0, 2, 1, 3)
    vh = v.reshape(B, Lk, H, Dh).transpose(0, 2, 1, 3)
    s = jnp.einsum('bhqd,bhkd->bhqk', qh, kh, precision=hi) / math.sqrt(Dh)
    if mask is not None:
        s = s + jnp.where(mask, -1e30, 0.0)[:, None, None, :]
    attn = jax.nn.softmax(s, axis=-1)
    ctx = jnp.einsum('bhqk,bhkd->bhqd', attn, vh, precision=hi)
    ctx = ctx.transpose(0, 2, 1, 3).reshape(B, Lq, E)
    attn_out = jnp.einsum('ble,ef->blf', ctx, params["wo"], precision=hi) + params["bo"]
    attn_w = jnp.mean(attn, axis=1)

    def ln(z, g, b):
        mu = jnp.mean(z, -1, keepdims=True)
        var = jnp.mean((z - mu) ** 2, -1, keepdims=True)
        return (z - mu) / jnp.sqrt(var + 1e-5) * g + b

    h1 = ln(attn_out + x, params["ln1_g"], params["ln1_b"])
    ff = jnp.maximum(jnp.einsum('ble,ef->blf', h1, params["w_ff1"], precision=hi)
                     + params["b_ff1"], 0.0)
    ff = jnp.einsum('blf,fe->ble', ff, params["w_ff2"], precision=hi) + params["b_ff2"]
    out = ln(ff + h1, params["ln2_g"], params["ln2_b"])
    return out, attn_w


if __name__ == "__main__":
    key = jax.random.PRNGKey(0)
    kx, ky, kp = jax.random.split(key, 3)

    B, Lq, Lk, E, H, FX = 4, 8, 16, 32, 4, 4
    x = jax.random.normal(kx, (B, Lq, E), jnp.float32)
    y = jax.random.normal(ky, (B, Lk, E), jnp.float32)
    # key_padding_mask, torch semantics: True == ignore that key position.
    key_lens = jnp.array([16, 10, 5, 12], dtype=jnp.int32)
    mask = jnp.arange(Lk)[None, :] >= key_lens[:, None]

    params = init_params(kp, E, H, FX)

    out, attn_w = correlation_attention_layer(x, y, params, mask=mask)
    out = jax.block_until_ready(out)
    attn_w = jax.block_until_ready(attn_w)

    out_ref, attn_w_ref = reference(x, y, params, mask=mask)

    assert out.shape == (B, Lq, E) and attn_w.shape == (B, Lq, Lk)
    err_out = float(jnp.max(jnp.abs(out - out_ref)))
    err_attn = float(jnp.max(jnp.abs(attn_w - attn_w_ref)))
    # bf16 MXU inputs (f32 accumulation) -> relaxed tolerance vs f32 reference.
    assert err_out < 5e-2, f"out max-abs-err {err_out}"
    assert err_attn < 2e-2, f"attn max-abs-err {err_attn}"
    print("KERNEL_OK")
</pallas_src>

<mosaic_0001>
module attributes {stable_mosaic.version = 11 : i64} {
  func.func @kernel(%arg0: i32, %arg1: memref<2x8x32xf32, #tpu.memory_space<vmem>>, %arg2: memref<2x16x32xf32, #tpu.memory_space<vmem>>, %arg3: memref<2x1x16xf32, #tpu.memory_space<vmem>>, %arg4: memref<32x32xbf16, #tpu.memory_space<vmem>>, %arg5: memref<32x32xbf16, #tpu.memory_space<vmem>>, %arg6: memref<32x32xbf16, #tpu.memory_space<vmem>>, %arg7: memref<1x32xf32, #tpu.memory_space<vmem>>, %arg8: memref<1x32xf32, #tpu.memory_space<vmem>>, %arg9: memref<1x32xf32, #tpu.memory_space<vmem>>, %arg10: memref<32x32xbf16, #tpu.memory_space<vmem>>, %arg11: memref<1x32xf32, #tpu.memory_space<vmem>>, %arg12: memref<1x32xf32, #tpu.memory_space<vmem>>, %arg13: memref<1x32xf32, #tpu.memory_space<vmem>>, %arg14: memref<32x128xbf16, #tpu.memory_space<vmem>>, %arg15: memref<1x128xf32, #tpu.memory_space<vmem>>, %arg16: memref<128x32xbf16, #tpu.memory_space<vmem>>, %arg17: memref<1x32xf32, #tpu.memory_space<vmem>>, %arg18: memref<1x32xf32, #tpu.memory_space<vmem>>, %arg19: memref<1x32xf32, #tpu.memory_space<vmem>>, %arg20: memref<2x8x32xf32, #tpu.memory_space<vmem>>, %arg21: memref<2x8x16xf32, #tpu.memory_space<vmem>>, %arg22: memref<8x32xf32, #tpu.memory_space<vmem>>) attributes {dimension_semantics = [#tpu.dimension_semantics<parallel>], iteration_bounds = array<i64: 2>, scalar_prefetch = 0 : i64, scratch_operands = 1 : i64, tpu.core_type = #tpu.core_type<tc>, window_params = [{transform_indices = @transform_0, window_bounds = array<i64: 2, 8, 32>}, {transform_indices = @transform_1, window_bounds = array<i64: 2, 16, 32>}, {transform_indices = @transform_2, window_bounds = array<i64: 2, 1, 16>}, {pipeline_mode = #tpu.pipeline_mode<synchronous>, transform_indices = @transform_3, window_bounds = array<i64: 32, 32>}, {pipeline_mode = #tpu.pipeline_mode<synchronous>, transform_indices = @transform_4, window_bounds = array<i64: 32, 32>}, {pipeline_mode = #tpu.pipeline_mode<synchronous>, transform_indices = @transform_5, window_bounds = array<i64: 32, 32>}, {pipeline_mode = #tpu.pipeline_mode<synchronous>, transform_indices = @transform_6, window_bounds = array<i64: 1, 32>}, {pipeline_mode = #tpu.pipeline_mode<synchronous>, transform_indices = @transform_7, window_bounds = array<i64: 1, 32>}, {pipeline_mode = #tpu.pipeline_mode<synchronous>, transform_indices = @transform_8, window_bounds = array<i64: 1, 32>}, {pipeline_mode = #tpu.pipeline_mode<synchronous>, transform_indices = @transform_9, window_bounds = array<i64: 32, 32>}, {pipeline_mode = #tpu.pipeline_mode<synchronous>, transform_indices = @transform_10, window_bounds = array<i64: 1, 32>}, {pipeline_mode = #tpu.pipeline_mode<synchronous>, transform_indices = @transform_11, window_bounds = array<i64: 1, 32>}, {pipeline_mode = #tpu.pipeline_mode<synchronous>, transform_indices = @transform_12, window_bounds = array<i64: 1, 32>}, {pipeline_mode = #tpu.pipeline_mode<synchronous>, transform_indices = @transform_13, window_bounds = array<i64: 32, 128>}, {pipeline_mode = #tpu.pipeline_mode<synchronous>, transform_indices = @transform_14, window_bounds = array<i64: 1, 128>}, {pipeline_mode = #tpu.pipeline_mode<synchronous>, transform_indices = @transform_15, window_bounds = array<i64: 128, 32>}, {pipeline_mode = #tpu.pipeline_mode<synchronous>, transform_indices = @transform_16, window_bounds = array<i64: 1, 32>}, {pipeline_mode = #tpu.pipeline_mode<synchronous>, transform_indices = @transform_17, window_bounds = array<i64: 1, 32>}, {pipeline_mode = #tpu.pipeline_mode<synchronous>, transform_indices = @transform_18, window_bounds = array<i64: 1, 32>}, {transform_indices = @transform_19, window_bounds = array<i64: 2, 8, 32>}, {transform_indices = @transform_20, window_bounds = array<i64: 2, 8, 16>}]} {
    %c0 = arith.constant 0 : index
    %c0_0 = arith.constant 0 : index
    %0 = vector.load %arg4[%c0, %c0_0] : memref<32x32xbf16, #tpu.memory_space<vmem>>, vector<32x32xbf16>
    %c0_1 = arith.constant 0 : index
    %c0_2 = arith.constant 0 : index
    %1 = vector.load %arg5[%c0_1, %c0_2] : memref<32x32xbf16, #tpu.memory_space<vmem>>, vector<32x32xbf16>
    %c0_3 = arith.constant 0 : index
    %c0_4 = arith.constant 0 : index
    %2 = vector.load %arg6[%c0_3, %c0_4] : memref<32x32xbf16, #tpu.memory_space<vmem>>, vector<32x32xbf16>
    %c0_5 = arith.constant 0 : index
    %c0_6 = arith.constant 0 : index
    %3 = vector.load %arg10[%c0_5, %c0_6] : memref<32x32xbf16, #tpu.memory_space<vmem>>, vector<32x32xbf16>
    %c0_7 = arith.constant 0 : index
    %c0_8 = arith.constant 0 : index
    %4 = vector.load %arg7[%c0_7, %c0_8] : memref<1x32xf32, #tpu.memory_space<vmem>>, vector<1x32xf32>
    %c0_9 = arith.constant 0 : index
    %c0_10 = arith.constant 0 : index
    %5 = vector.load %arg8[%c0_9, %c0_10] : memref<1x32xf32, #tpu.memory_space<vmem>>, vector<1x32xf32>
    %c0_11 = arith.constant 0 : index
    %c0_12 = arith.constant 0 : index
    %6 = vector.load %arg9[%c0_11, %c0_12] : memref<1x32xf32, #tpu.memory_space<vmem>>, vector<1x32xf32>
    %c0_13 = arith.constant 0 : index
    %c0_14 = arith.constant 0 : index
    %7 = vector.load %arg11[%c0_13, %c0_14] : memref<1x32xf32, #tpu.memory_space<vmem>>, vector<1x32xf32>
    %c0_15 = arith.constant 0 : index
    %c0_16 = arith.constant 0 : index
    %8 = vector.load %arg14[%c0_15, %c0_16] : memref<32x128xbf16, #tpu.memory_space<vmem>>, vector<32x128xbf16>
    %c0_17 = arith.constant 0 : index
    %c0_18 = arith.constant 0 : index
    %9 = vector.load %arg15[%c0_17, %c0_18] : memref<1x128xf32, #tpu.memory_space<vmem>>, vector<1x128xf32>
    %c0_19 = arith.constant 0 : index
    %c0_20 = arith.constant 0 : index
    %10 = vector.load %arg16[%c0_19, %c0_20] : memref<128x32xbf16, #tpu.memory_space<vmem>>, vector<128x32xbf16>
    %c0_21 = arith.constant 0 : index
    %c0_22 = arith.constant 0 : index
    %11 = vector.load %arg17[%c0_21, %c0_22] : memref<1x32xf32, #tpu.memory_space<vmem>>, vector<1x32xf32>
    %c0_23 = arith.constant 0 : index
    %c0_24 = arith.constant 0 : index
    %12 = vector.load %arg12[%c0_23, %c0_24] : memref<1x32xf32, #tpu.memory_space<vmem>>, vector<1x32xf32>
    %c0_25 = arith.constant 0 : index
    %c0_26 = arith.constant 0 : index
    %13 = vector.load %arg13[%c0_25, %c0_26] : memref<1x32xf32, #tpu.memory_space<vmem>>, vector<1x32xf32>
    %c0_27 = arith.constant 0 : index
    %c0_28 = arith.constant 0 : index
    %14 = vector.load %arg18[%c0_27, %c0_28] : memref<1x32xf32, #tpu.memory_space<vmem>>, vector<1x32xf32>
    %c0_29 = arith.constant 0 : index
    %c0_30 = arith.constant 0 : index
    %15 = vector.load %arg19[%c0_29, %c0_30] : memref<1x32xf32, #tpu.memory_space<vmem>>, vector<1x32xf32>
    %c0_31 = arith.constant 0 : index
    %c0_32 = arith.constant 0 : index
    %c0_33 = arith.constant 0 : index
    %16 = vector.load %arg1[%c0_31, %c0_32, %c0_33] : memref<2x8x32xf32, #tpu.memory_space<vmem>>, vector<1x8x32xf32>
    %17 = vector.shape_cast %16 : vector<1x8x32xf32> to vector<8x32xf32>
    %c0_34 = arith.constant 0 : index
    %c0_35 = arith.constant 0 : index
    %c0_36 = arith.constant 0 : index
    %18 = vector.load %arg2[%c0_34, %c0_35, %c0_36] : memref<2x16x32xf32, #tpu.memory_space<vmem>>, vector<1x16x32xf32>
    %19 = vector.shape_cast %18 : vector<1x16x32xf32> to vector<16x32xf32>
    %c0_37 = arith.constant 0 : index
    %c0_38 = arith.constant 0 : index
    %c0_39 = arith.constant 0 : index
    %20 = vector.load %arg3[%c0_37, %c0_38, %c0_39] : memref<2x1x16xf32, #tpu.memory_space<vmem>>, vector<1x1x16xf32>
    %21 = vector.shape_cast %20 : vector<1x1x16xf32> to vector<1x16xf32>
    %22 = vector.shape_cast %21 : vector<1x16xf32> to vector<1x16xf32>
    %23 = vector.broadcast %22 : vector<1x16xf32> to vector<8x16xf32>
    %24 = arith.truncf %17 : vector<8x32xf32> to vector<8x32xbf16>
    %25 = arith.truncf %19 : vector<16x32xf32> to vector<16x32xbf16>
    %cst = arith.constant dense<0.000000e+00> : vector<8x32xf32>
    %26 = tpu.matmul %24, %0, %cst {dimension_numbers = #tpu.dot_dimension_numbers<[1], [0], [0], [1], [0, 0, 1, 1], [], []>} : vector<8x32xbf16>, vector<32x32xbf16>, vector<8x32xf32> -> vector<8x32xf32>
    %27 = vector.broadcast %4 : vector<1x32xf32> to vector<8x32xf32>
    %28 = arith.addf %26, %27 : vector<8x32xf32>
    %cst_40 = arith.constant dense<0.000000e+00> : vector<16x32xf32>
    %29 = tpu.matmul %25, %1, %cst_40 {dimension_numbers = #tpu.dot_dimension_numbers<[1], [0], [0], [1], [0, 0, 1, 1], [], []>} : vector<16x32xbf16>, vector<32x32xbf16>, vector<16x32xf32> -> vector<16x32xf32>
    %30 = vector.broadcast %5 : vector<1x32xf32> to vector<16x32xf32>
    %31 = arith.addf %29, %30 : vector<16x32xf32>
    %cst_41 = arith.constant dense<0.000000e+00> : vector<16x32xf32>
    %32 = tpu.matmul %25, %2, %cst_41 {dimension_numbers = #tpu.dot_dimension_numbers<[1], [0], [0], [1], [0, 0, 1, 1], [], []>} : vector<16x32xbf16>, vector<32x32xbf16>, vector<16x32xf32> -> vector<16x32xf32>
    %33 = vector.broadcast %6 : vector<1x32xf32> to vector<16x32xf32>
    %34 = arith.addf %32, %33 : vector<16x32xf32>
    %35 = arith.truncf %28 : vector<8x32xf32> to vector<8x32xbf16>
    %36 = arith.truncf %31 : vector<16x32xf32> to vector<16x32xbf16>
    %37 = arith.truncf %34 : vector<16x32xf32> to vector<16x32xbf16>
    %cst_42 = arith.constant 0.000000e+00 : f32
    %38 = vector.broadcast %cst_42 : f32 to vector<8x16xf32>
    %39 = vector.extract_strided_slice %35 {offsets = [0, 0], sizes = [8, 8], strides = [1, 1]} : vector<8x32xbf16> to vector<8x8xbf16>
    %40 = vector.extract_strided_slice %36 {offsets = [0, 0], sizes = [16, 8], strides = [1, 1]} : vector<16x32xbf16> to vector<16x8xbf16>
    %cst_43 = arith.constant dense<0.000000e+00> : vector<8x16xf32>
    %41 = tpu.matmul %39, %40, %cst_43 {dimension_numbers = #tpu.dot_dimension_numbers<[1], [1], [0], [0], [0, 0, 1, 0], [], []>} : vector<8x8xbf16>, vector<16x8xbf16>, vector<8x16xf32> -> vector<8x16xf32>
    %42 = arith.addf %41, %23 : vector<8x16xf32>
    %cst_44 = arith.constant dense<0xFF800000> : vector<8xf32>
    %43 = vector.multi_reduction <maximumf>, %42, %cst_44 [1] : vector<8x16xf32> to vector<8xf32>
    %44 = vector.shape_cast %43 : vector<8xf32> to vector<8x1xf32>
    %45 = vector.broadcast %44 : vector<8x1xf32> to vector<8x16xf32>
    %46 = arith.subf %42, %45 : vector<8x16xf32>
    %47 = math.exp %46 : vector<8x16xf32>
    %cst_45 = arith.constant dense<0.000000e+00> : vector<8xf32>
    %48 = vector.multi_reduction <add>, %47, %cst_45 [1] : vector<8x16xf32> to vector<8xf32>
    %49 = vector.shape_cast %48 : vector<8xf32> to vector<8x1xf32>
    %50 = tpu.reciprocal %49 {approx = true} : vector<8x1xf32> -> vector<8x1xf32>
    %51 = vector.broadcast %50 : vector<8x1xf32> to vector<8x16xf32>
    %52 = arith.mulf %47, %51 : vector<8x16xf32>
    %53 = arith.addf %38, %52 : vector<8x16xf32>
    %54 = arith.truncf %52 : vector<8x16xf32> to vector<8x16xbf16>
    %55 = vector.extract_strided_slice %37 {offsets = [0, 0], sizes = [16, 8], strides = [1, 1]} : vector<16x32xbf16> to vector<16x8xbf16>
    %cst_46 = arith.constant dense<0.000000e+00> : vector<8x8xf32>
    %56 = tpu.matmul %54, %55, %cst_46 {dimension_numbers = #tpu.dot_dimension_numbers<[1], [0], [0], [1], [0, 0, 1, 1], [], []>} : vector<8x16xbf16>, vector<16x8xbf16>, vector<8x8xf32> -> vector<8x8xf32>
    %c0_47 = arith.constant 0 : index
    %c0_48 = arith.constant 0 : index
    %57 = vector.load %arg22[%c0_47, %c0_48] : memref<8x32xf32, #tpu.memory_space<vmem>>, vector<8x8xf32>
    tpu.vector_store %arg22[%c0_47, %c0_48], %56 {strides = array<i32>} : memref<8x32xf32, #tpu.memory_space<vmem>>, vector<8x8xf32>,
    %58 = vector.extract_strided_slice %35 {offsets = [0, 8], sizes = [8, 8], strides = [1, 1]} : vector<8x32xbf16> to vector<8x8xbf16>
    %59 = vector.extract_strided_slice %36 {offsets = [0, 8], sizes = [16, 8], strides = [1, 1]} : vector<16x32xbf16> to vector<16x8xbf16>
    %cst_49 = arith.constant dense<0.000000e+00> : vector<8x16xf32>
    %60 = tpu.matmul %58, %59, %cst_49 {dimension_numbers = #tpu.dot_dimension_numbers<[1], [1], [0], [0], [0, 0, 1, 0], [], []>} : vector<8x8xbf16>, vector<16x8xbf16>, vector<8x16xf32> -> vector<8x16xf32>
    %61 = arith.addf %60, %23 : vector<8x16xf32>
    %cst_50 = arith.constant dense<0xFF800000> : vector<8xf32>
    %62 = vector.multi_reduction <maximumf>, %61, %cst_50 [1] : vector<8x16xf32> to vector<8xf32>
    %63 = vector.shape_cast %62 : vector<8xf32> to vector<8x1xf32>
    %64 = vector.broadcast %63 : vector<8x1xf32> to vector<8x16xf32>
    %65 = arith.subf %61, %64 : vector<8x16xf32>
    %66 = math.exp %65 : vector<8x16xf32>
    %cst_51 = arith.constant dense<0.000000e+00> : vector<8xf32>
    %67 = vector.multi_reduction <add>, %66, %cst_51 [1] : vector<8x16xf32> to vector<8xf32>
    %68 = vector.shape_cast %67 : vector<8xf32> to vector<8x1xf32>
    %69 = tpu.reciprocal %68 {approx = true} : vector<8x1xf32> -> vector<8x1xf32>
    %70 = vector.broadcast %69 : vector<8x1xf32> to vector<8x16xf32>
    %71 = arith.mulf %66, %70 : vector<8x16xf32>
    %72 = arith.addf %53, %71 : vector<8x16xf32>
    %73 = arith.truncf %71 : vector<8x16xf32> to vector<8x16xbf16>
    %74 = vector.extract_strided_slice %37 {offsets = [0, 8], sizes = [16, 8], strides = [1, 1]} : vector<16x32xbf16> to vector<16x8xbf16>
    %cst_52 = arith.constant dense<0.000000e+00> : vector<8x8xf32>
    %75 = tpu.matmul %73, %74, %cst_52 {dimension_numbers = #tpu.dot_dimension_numbers<[1], [0], [0], [1], [0, 0, 1, 1], [], []>} : vector<8x16xbf16>, vector<16x8xbf16>, vector<8x8xf32> -> vector<8x8xf32>
    %c0_53 = arith.constant 0 : index
    %c8 = arith.constant 8 : index
    %76 = vector.load %arg22[%c0_53, %c8] : memref<8x32xf32, #tpu.memory_space<vmem>>, vector<8x8xf32>
    tpu.vector_store %arg22[%c0_53, %c8], %75 {strides = array<i32>} : memref<8x32xf32, #tpu.memory_space<vmem>>, vector<8x8xf32>,
    %77 = vector.extract_strided_slice %35 {offsets = [0, 16], sizes = [8, 8], strides = [1, 1]} : vector<8x32xbf16> to vector<8x8xbf16>
    %78 = vector.extract_strided_slice %36 {offsets = [0, 16], sizes = [16, 8], strides = [1, 1]} : vector<16x32xbf16> to vector<16x8xbf16>
    %cst_54 = arith.constant dense<0.000000e+00> : vector<8x16xf32>
    %79 = tpu.matmul %77, %78, %cst_54 {dimension_numbers = #tpu.dot_dimension_numbers<[1], [1], [0], [0], [0, 0, 1, 0], [], []>} : vector<8x8xbf16>, vector<16x8xbf16>, vector<8x16xf32> -> vector<8x16xf32>
    %80 = arith.addf %79, %23 : vector<8x16xf32>
    %cst_55 = arith.constant dense<0xFF800000> : vector<8xf32>
    %81 = vector.multi_reduction <maximumf>, %80, %cst_55 [1] : vector<8x16xf32> to vector<8xf32>
    %82 = vector.shape_cast %81 : vector<8xf32> to vector<8x1xf32>
    %83 = vector.broadcast %82 : vector<8x1xf32> to vector<8x16xf32>
    %84 = arith.subf %80, %83 : vector<8x16xf32>
    %85 = math.exp %84 : vector<8x16xf32>
    %cst_56 = arith.constant dense<0.000000e+00> : vector<8xf32>
    %86 = vector.multi_reduction <add>, %85, %cst_56 [1] : vector<8x16xf32> to vector<8xf32>
    %87 = vector.shape_cast %86 : vector<8xf32> to vector<8x1xf32>
    %88 = tpu.reciprocal %87 {approx = true} : vector<8x1xf32> -> vector<8x1xf32>
    %89 = vector.broadcast %88 : vector<8x1xf32> to vector<8x16xf32>
    %90 = arith.mulf %85, %89 : vector<8x16xf32>
    %91 = arith.addf %72, %90 : vector<8x16xf32>
    %92 = arith.truncf %90 : vector<8x16xf32> to vector<8x16xbf16>
    %93 = vector.extract_strided_slice %37 {offsets = [0, 16], sizes = [16, 8], strides = [1, 1]} : vector<16x32xbf16> to vector<16x8xbf16>
    %cst_57 = arith.constant dense<0.000000e+00> : vector<8x8xf32>
    %94 = tpu.matmul %92, %93, %cst_57 {dimension_numbers = #tpu.dot_dimension_numbers<[1], [0], [0], [1], [0, 0, 1, 1], [], []>} : vector<8x16xbf16>, vector<16x8xbf16>, vector<8x8xf32> -> vector<8x8xf32>
    %c0_58 = arith.constant 0 : index
    %c16 = arith.constant 16 : index
    %95 = vector.load %arg22[%c0_58, %c16] : memref<8x32xf32, #tpu.memory_space<vmem>>, vector<8x8xf32>
    tpu.vector_store %arg22[%c0_58, %c16], %94 {strides = array<i32>} : memref<8x32xf32, #tpu.memory_space<vmem>>, vector<8x8xf32>,
    %96 = vector.extract_strided_slice %35 {offsets = [0, 24], sizes = [8, 8], strides = [1, 1]} : vector<8x32xbf16> to vector<8x8xbf16>
    %97 = vector.extract_strided_slice %36 {offsets = [0, 24], sizes = [16, 8], strides = [1, 1]} : vector<16x32xbf16> to vector<16x8xbf16>
    %cst_59 = arith.constant dense<0.000000e+00> : vector<8x16xf32>
    %98 = tpu.matmul %96, %97, %cst_59 {dimension_numbers = #tpu.dot_dimension_numbers<[1], [1], [0], [0], [0, 0, 1, 0], [], []>} : vector<8x8xbf16>, vector<16x8xbf16>, vector<8x16xf32> -> vector<8x16xf32>
    %99 = arith.addf %98, %23 : vector<8x16xf32>
    %cst_60 = arith.constant dense<0xFF800000> : vector<8xf32>
    %100 = vector.multi_reduction <maximumf>, %99, %cst_60 [1] : vector<8x16xf32> to vector<8xf32>
    %101 = vector.shape_cast %100 : vector<8xf32> to vector<8x1xf32>
    %102 = vector.broadcast %101 : vector<8x1xf32> to vector<8x16xf32>
    %103 = arith.subf %99, %102 : vector<8x16xf32>
    %104 = math.exp %103 : vector<8x16xf32>
    %cst_61 = arith.constant dense<0.000000e+00> : vector<8xf32>
    %105 = vector.multi_reduction <add>, %104, %cst_61 [1] : vector<8x16xf32> to vector<8xf32>
    %106 = vector.shape_cast %105 : vector<8xf32> to vector<8x1xf32>
    %107 = tpu.reciprocal %106 {approx = true} : vector<8x1xf32> -> vector<8x1xf32>
    %108 = vector.broadcast %107 : vector<8x1xf32> to vector<8x16xf32>
    %109 = arith.mulf %104, %108 : vector<8x16xf32>
    %110 = arith.addf %91, %109 : vector<8x16xf32>
    %111 = arith.truncf %109 : vector<8x16xf32> to vector<8x16xbf16>
    %112 = vector.extract_strided_slice %37 {offsets = [0, 24], sizes = [16, 8], strides = [1, 1]} : vector<16x32xbf16> to vector<16x8xbf16>
    %cst_62 = arith.constant dense<0.000000e+00> : vector<8x8xf32>
    %113 = tpu.matmul %111, %112, %cst_62 {dimension_numbers = #tpu.dot_dimension_numbers<[1], [0], [0], [1], [0, 0, 1, 1], [], []>} : vector<8x16xbf16>, vector<16x8xbf16>, vector<8x8xf32> -> vector<8x8xf32>
    %c0_63 = arith.constant 0 : index
    %c24 = arith.constant 24 : index
    %114 = vector.load %arg22[%c0_63, %c24] : memref<8x32xf32, #tpu.memory_space<vmem>>, vector<8x8xf32>
    tpu.vector_store %arg22[%c0_63, %c24], %113 {strides = array<i32>} : memref<8x32xf32, #tpu.memory_space<vmem>>, vector<8x8xf32>,
    %cst_64 = arith.constant 2.500000e-01 : f32
    %115 = vector.broadcast %cst_64 : f32 to vector<8x16xf32>
    %116 = arith.mulf %110, %115 : vector<8x16xf32>
    %c0_65 = arith.constant 0 : index
    %c0_66 = arith.constant 0 : index
    %c0_67 = arith.constant 0 : index
    %117 = vector.load %arg21[%c0_65, %c0_66, %c0_67] : memref<2x8x16xf32, #tpu.memory_space<vmem>>, vector<1x8x16xf32>
    %118 = vector.shape_cast %117 : vector<1x8x16xf32> to vector<8x16xf32>
    %119 = vector.shape_cast %116 : vector<8x16xf32> to vector<1x8x16xf32>
    tpu.vector_store %arg21[%c0_65, %c0_66, %c0_67], %119 {strides = array<i32>} : memref<2x8x16xf32, #tpu.memory_space<vmem>>, vector<1x8x16xf32>,
    %c0_68 = arith.constant 0 : index
    %c0_69 = arith.constant 0 : index
    %120 = vector.load %arg22[%c0_68, %c0_69] : memref<8x32xf32, #tpu.memory_space<vmem>>, vector<8x32xf32>
    %121 = arith.truncf %120 : vector<8x32xf32> to vector<8x32xbf16>
    %cst_70 = arith.constant dense<0.000000e+00> : vector<8x32xf32>
    %122 = tpu.matmul %121, %3, %cst_70 {dimension_numbers = #tpu.dot_dimension_numbers<[1], [0], [0], [1], [0, 0, 1, 1], [], []>} : vector<8x32xbf16>, vector<32x32xbf16>, vector<8x32xf32> -> vector<8x32xf32>
    %123 = vector.broadcast %7 : vector<1x32xf32> to vector<8x32xf32>
    %124 = arith.addf %122, %123 : vector<8x32xf32>
    %125 = arith.addf %124, %17 : vector<8x32xf32>
    %cst_71 = arith.constant dense<0.000000e+00> : vector<8xf32>
    %126 = vector.multi_reduction <add>, %125, %cst_71 [1] : vector<8x32xf32> to vector<8xf32>
    %127 = vector.shape_cast %126 : vector<8xf32> to vector<8x1xf32>
    %cst_72 = arith.constant 3.200000e+01 : f32
    %128 = vector.broadcast %cst_72 : f32 to vector<8x1xf32>
    %129 = arith.divf %127, %128 : vector<8x1xf32>
    %130 = vector.broadcast %129 : vector<8x1xf32> to vector<8x32xf32>
    %131 = arith.subf %125, %130 : vector<8x32xf32>
    %132 = arith.mulf %131, %131 : vector<8x32xf32>
    %cst_73 = arith.constant dense<0.000000e+00> : vector<8xf32>
    %133 = vector.multi_reduction <add>, %132, %cst_73 [1] : vector<8x32xf32> to vector<8xf32>
    %134 = vector.shape_cast %133 : vector<8xf32> to vector<8x1xf32>
    %cst_74 = arith.constant 3.200000e+01 : f32
    %135 = vector.broadcast %cst_74 : f32 to vector<8x1xf32>
    %136 = arith.divf %134, %135 : vector<8x1xf32>
    %cst_75 = arith.constant 9.99999974E-6 : f32
    %137 = vector.broadcast %cst_75 : f32 to vector<8x1xf32>
    %138 = arith.addf %136, %137 : vector<8x1xf32>
    %139 = math.rsqrt %138 : vector<8x1xf32>
    %140 = vector.broadcast %139 : vector<8x1xf32> to vector<8x32xf32>
    %141 = arith.mulf %131, %140 : vector<8x32xf32>
    %142 = vector.broadcast %12 : vector<1x32xf32> to vector<8x32xf32>
    %143 = arith.mulf %141, %142 : vector<8x32xf32>
    %144 = vector.broadcast %13 : vector<1x32xf32> to vector<8x32xf32>
    %145 = arith.addf %143, %144 : vector<8x32xf32>
    %146 = arith.truncf %145 : vector<8x32xf32> to vector<8x32xbf16>
    %cst_76 = arith.constant dense<0.000000e+00> : vector<8x128xf32>
    %147 = tpu.matmul %146, %8, %cst_76 {dimension_numbers = #tpu.dot_dimension_numbers<[1], [0], [0], [1], [0, 0, 1, 1], [], []>} : vector<8x32xbf16>, vector<32x128xbf16>, vector<8x128xf32> -> vector<8x128xf32>
    %148 = vector.broadcast %9 : vector<1x128xf32> to vector<8x128xf32>
    %149 = arith.addf %147, %148 : vector<8x128xf32>
    %cst_77 = arith.constant 0.000000e+00 : f32
    %150 = vector.broadcast %cst_77 : f32 to vector<8x128xf32>
    %151 = arith.maximumf %149, %150 : vector<8x128xf32>
    %152 = arith.truncf %151 : vector<8x128xf32> to vector<8x128xbf16>
    %cst_78 = arith.constant dense<0.000000e+00> : vector<8x32xf32>
    %153 = tpu.matmul %152, %10, %cst_78 {dimension_numbers = #tpu.dot_dimension_numbers<[1], [0], [0], [1], [0, 0, 1, 1], [], []>} : vector<8x128xbf16>, vector<128x32xbf16>, vector<8x32xf32> -> vector<8x32xf32>
    %154 = vector.broadcast %11 : vector<1x32xf32> to vector<8x32xf32>
    %155 = arith.addf %153, %154 : vector<8x32xf32>
    %156 = arith.addf %155, %145 : vector<8x32xf32>
    %cst_79 = arith.constant dense<0.000000e+00> : vector<8xf32>
    %157 = vector.multi_reduction <add>, %156, %cst_79 [1] : vector<8x32xf32> to vector<8xf32>
    %158 = vector.shape_cast %157 : vector<8xf32> to vector<8x1xf32>
    %cst_80 = arith.constant 3.200000e+01 : f32
    %159 = vector.broadcast %cst_80 : f32 to vector<8x1xf32>
    %160 = arith.divf %158, %159 : vector<8x1xf32>
    %161 = vector.broadcast %160 : vector<8x1xf32> to vector<8x32xf32>
    %162 = arith.subf %156, %161 : vector<8x32xf32>
    %163 = arith.mulf %162, %162 : vector<8x32xf32>
    %cst_81 = arith.constant dense<0.000000e+00> : vector<8xf32>
    %164 = vector.multi_reduction <add>, %163, %cst_81 [1] : vector<8x32xf32> to vector<8xf32>
    %165 = vector.shape_cast %164 : vector<8xf32> to vector<8x1xf32>
    %cst_82 = arith.constant 3.200000e+01 : f32
    %166 = vector.broadcast %cst_82 : f32 to vector<8x1xf32>
    %167 = arith.divf %165, %166 : vector<8x1xf32>
    %cst_83 = arith.constant 9.99999974E-6 : f32
    %168 = vector.broadcast %cst_83 : f32 to vector<8x1xf32>
    %169 = arith.addf %167, %168 : vector<8x1xf32>
    %170 = math.rsqrt %169 : vector<8x1xf32>
    %171 = vector.broadcast %170 : vector<8x1xf32> to vector<8x32xf32>
    %172 = arith.mulf %162, %171 : vector<8x32xf32>
    %173 = vector.broadcast %14 : vector<1x32xf32> to vector<8x32xf32>
    %174 = arith.mulf %172, %173 : vector<8x32xf32>
    %175 = vector.broadcast %15 : vector<1x32xf32> to vector<8x32xf32>
    %176 = arith.addf %174, %175 : vector<8x32xf32>
    %c0_84 = arith.constant 0 : index
    %c0_85 = arith.constant 0 : index
    %c0_86 = arith.constant 0 : index
    %177 = vector.load %arg20[%c0_84, %c0_85, %c0_86] : memref<2x8x32xf32, #tpu.memory_space<vmem>>, vector<1x8x32xf32>
    %178 = vector.shape_cast %177 : vector<1x8x32xf32> to vector<8x32xf32>
    %179 = vector.shape_cast %176 : vector<8x32xf32> to vector<1x8x32xf32>
    tpu.vector_store %arg20[%c0_84, %c0_85, %c0_86], %179 {strides = array<i32>} : memref<2x8x32xf32, #tpu.memory_space<vmem>>, vector<1x8x32xf32>,
    %c1 = arith.constant 1 : index
    %c0_87 = arith.constant 0 : index
    %c0_88 = arith.constant 0 : index
    %180 = vector.load %arg1[%c1, %c0_87, %c0_88] : memref<2x8x32xf32, #tpu.memory_space<vmem>>, vector<1x8x32xf32>
    %181 = vector.shape_cast %180 : vector<1x8x32xf32> to vector<8x32xf32>
    %c1_89 = arith.constant 1 : index
    %c0_90 = arith.constant 0 : index
    %c0_91 = arith.constant 0 : index
    %182 = vector.load %arg2[%c1_89, %c0_90, %c0_91] : memref<2x16x32xf32, #tpu.memory_space<vmem>>, vector<1x16x32xf32>
    %183 = vector.shape_cast %182 : vector<1x16x32xf32> to vector<16x32xf32>
    %c1_92 = arith.constant 1 : index
    %c0_93 = arith.constant 0 : index
    %c0_94 = arith.constant 0 : index
    %184 = vector.load %arg3[%c1_92, %c0_93, %c0_94] : memref<2x1x16xf32, #tpu.memory_space<vmem>>, vector<1x1x16xf32>
    %185 = vector.shape_cast %184 : vector<1x1x16xf32> to vector<1x16xf32>
    %186 = vector.shape_cast %185 : vector<1x16xf32> to vector<1x16xf32>
    %187 = vector.broadcast %186 : vector<1x16xf32> to vector<8x16xf32>
    %188 = arith.truncf %181 : vector<8x32xf32> to vector<8x32xbf16>
    %189 = arith.truncf %183 : vector<16x32xf32> to vector<16x32xbf16>
    %cst_95 = arith.constant dense<0.000000e+00> : vector<8x32xf32>
    %190 = tpu.matmul %188, %0, %cst_95 {dimension_numbers = #tpu.dot_dimension_numbers<[1], [0], [0], [1], [0, 0, 1, 1], [], []>} : vector<8x32xbf16>, vector<32x32xbf16>, vector<8x32xf32> -> vector<8x32xf32>
    %191 = vector.broadcast %4 : vector<1x32xf32> to vector<8x32xf32>
    %192 = arith.addf %190, %191 : vector<8x32xf32>
    %cst_96 = arith.constant dense<0.000000e+00> : vector<16x32xf32>
    %193 = tpu.matmul %189, %1, %cst_96 {dimension_numbers = #tpu.dot_dimension_numbers<[1], [0], [0], [1], [0, 0, 1, 1], [], []>} : vector<16x32xbf16>, vector<32x32xbf16>, vector<16x32xf32> -> vector<16x32xf32>
    %194 = vector.broadcast %5 : vector<1x32xf32> to vector<16x32xf32>
    %195 = arith.addf %193, %194 : vector<16x32xf32>
    %cst_97 = arith.constant dense<0.000000e+00> : vector<16x32xf32>
    %196 = tpu.matmul %189, %2, %cst_97 {dimension_numbers = #tpu.dot_dimension_numbers<[1], [0], [0], [1], [0, 0, 1, 1], [], []>} : vector<16x32xbf16>, vector<32x32xbf16>, vector<16x32xf32> -> vector<16x32xf32>
    %197 = vector.broadcast %6 : vector<1x32xf32> to vector<16x32xf32>
    %198 = arith.addf %196, %197 : vector<16x32xf32>
    %199 = arith.truncf %192 : vector<8x32xf32> to vector<8x32xbf16>
    %200 = arith.truncf %195 : vector<16x32xf32> to vector<16x32xbf16>
    %201 = arith.truncf %198 : vector<16x32xf32> to vector<16x32xbf16>
    %cst_98 = arith.constant 0.000000e+00 : f32
    %202 = vector.broadcast %cst_98 : f32 to vector<8x16xf32>
    %203 = vector.extract_strided_slice %199 {offsets = [0, 0], sizes = [8, 8], strides = [1, 1]} : vector<8x32xbf16> to vector<8x8xbf16>
    %204 = vector.extract_strided_slice %200 {offsets = [0, 0], sizes = [16, 8], strides = [1, 1]} : vector<16x32xbf16> to vector<16x8xbf16>
    %cst_99 = arith.constant dense<0.000000e+00> : vector<8x16xf32>
    %205 = tpu.matmul %203, %204, %cst_99 {dimension_numbers = #tpu.dot_dimension_numbers<[1], [1], [0], [0], [0, 0, 1, 0], [], []>} : vector<8x8xbf16>, vector<16x8xbf16>, vector<8x16xf32> -> vector<8x16xf32>
    %206 = arith.addf %205, %187 : vector<8x16xf32>
    %cst_100 = arith.constant dense<0xFF800000> : vector<8xf32>
    %207 = vector.multi_reduction <maximumf>, %206, %cst_100 [1] : vector<8x16xf32> to vector<8xf32>
    %208 = vector.shape_cast %207 : vector<8xf32> to vector<8x1xf32>
    %209 = vector.broadcast %208 : vector<8x1xf32> to vector<8x16xf32>
    %210 = arith.subf %206, %209 : vector<8x16xf32>
    %211 = math.exp %210 : vector<8x16xf32>
    %cst_101 = arith.constant dense<0.000000e+00> : vector<8xf32>
    %212 = vector.multi_reduction <add>, %211, %cst_101 [1] : vector<8x16xf32> to vector<8xf32>
    %213 = vector.shape_cast %212 : vector<8xf32> to vector<8x1xf32>
    %214 = tpu.reciprocal %213 {approx = true} : vector<8x1xf32> -> vector<8x1xf32>
    %215 = vector.broadcast %214 : vector<8x1xf32> to vector<8x16xf32>
    %216 = arith.mulf %211, %215 : vector<8x16xf32>
    %217 = arith.addf %202, %216 : vector<8x16xf32>
    %218 = arith.truncf %216 : vector<8x16xf32> to vector<8x16xbf16>
    %219 = vector.extract_strided_slice %201 {offsets = [0, 0], sizes = [16, 8], strides = [1, 1]} : vector<16x32xbf16> to vector<16x8xbf16>
    %cst_102 = arith.constant dense<0.000000e+00> : vector<8x8xf32>
    %220 = tpu.matmul %218, %219, %cst_102 {dimension_numbers = #tpu.dot_dimension_numbers<[1], [0], [0], [1], [0, 0, 1, 1], [], []>} : vector<8x16xbf16>, vector<16x8xbf16>, vector<8x8xf32> -> vector<8x8xf32>
    %c0_103 = arith.constant 0 : index
    %c0_104 = arith.constant 0 : index
    %221 = vector.load %arg22[%c0_103, %c0_104] : memref<8x32xf32, #tpu.memory_space<vmem>>, vector<8x8xf32>
    tpu.vector_store %arg22[%c0_103, %c0_104], %220 {strides = array<i32>} : memref<8x32xf32, #tpu.memory_space<vmem>>, vector<8x8xf32>,
    %222 = vector.extract_strided_slice %199 {offsets = [0, 8], sizes = [8, 8], strides = [1, 1]} : vector<8x32xbf16> to vector<8x8xbf16>
    %223 = vector.extract_strided_slice %200 {offsets = [0, 8], sizes = [16, 8], strides = [1, 1]} : vector<16x32xbf16> to vector<16x8xbf16>
    %cst_105 = arith.constant dense<0.000000e+00> : vector<8x16xf32>
    %224 = tpu.matmul %222, %223, %cst_105 {dimension_numbers = #tpu.dot_dimension_numbers<[1], [1], [0], [0], [0, 0, 1, 0], [], []>} : vector<8x8xbf16>, vector<16x8xbf16>, vector<8x16xf32> -> vector<8x16xf32>
    %225 = arith.addf %224, %187 : vector<8x16xf32>
    %cst_106 = arith.constant dense<0xFF800000> : vector<8xf32>
    %226 = vector.multi_reduction <maximumf>, %225, %cst_106 [1] : vector<8x16xf32> to vector<8xf32>
    %227 = vector.shape_cast %226 : vector<8xf32> to vector<8x1xf32>
    %228 = vector.broadcast %227 : vector<8x1xf32> to vector<8x16xf32>
    %229 = arith.subf %225, %228 : vector<8x16xf32>
    %230 = math.exp %229 : vector<8x16xf32>
    %cst_107 = arith.constant dense<0.000000e+00> : vector<8xf32>
    %231 = vector.multi_reduction <add>, %230, %cst_107 [1] : vector<8x16xf32> to vector<8xf32>
    %232 = vector.shape_cast %231 : vector<8xf32> to vector<8x1xf32>
    %233 = tpu.reciprocal %232 {approx = true} : vector<8x1xf32> -> vector<8x1xf32>
    %234 = vector.broadcast %233 : vector<8x1xf32> to vector<8x16xf32>
    %235 = arith.mulf %230, %234 : vector<8x16xf32>
    %236 = arith.addf %217, %235 : vector<8x16xf32>
    %237 = arith.truncf %235 : vector<8x16xf32> to vector<8x16xbf16>
    %238 = vector.extract_strided_slice %201 {offsets = [0, 8], sizes = [16, 8], strides = [1, 1]} : vector<16x32xbf16> to vector<16x8xbf16>
    %cst_108 = arith.constant dense<0.000000e+00> : vector<8x8xf32>
    %239 = tpu.matmul %237, %238, %cst_108 {dimension_numbers = #tpu.dot_dimension_numbers<[1], [0], [0], [1], [0, 0, 1, 1], [], []>} : vector<8x16xbf16>, vector<16x8xbf16>, vector<8x8xf32> -> vector<8x8xf32>
    %c0_109 = arith.constant 0 : index
    %c8_110 = arith.constant 8 : index
    %240 = vector.load %arg22[%c0_109, %c8_110] : memref<8x32xf32, #tpu.memory_space<vmem>>, vector<8x8xf32>
    tpu.vector_store %arg22[%c0_109, %c8_110], %239 {strides = array<i32>} : memref<8x32xf32, #tpu.memory_space<vmem>>, vector<8x8xf32>,
    %241 = vector.extract_strided_slice %199 {offsets = [0, 16], sizes = [8, 8], strides = [1, 1]} : vector<8x32xbf16> to vector<8x8xbf16>
    %242 = vector.extract_strided_slice %200 {offsets = [0, 16], sizes = [16, 8], strides = [1, 1]} : vector<16x32xbf16> to vector<16x8xbf16>
    %cst_111 = arith.constant dense<0.000000e+00> : vector<8x16xf32>
    %243 = tpu.matmul %241, %242, %cst_111 {dimension_numbers = #tpu.dot_dimension_numbers<[1], [1], [0], [0], [0, 0, 1, 0], [], []>} : vector<8x8xbf16>, vector<16x8xbf16>, vector<8x16xf32> -> vector<8x16xf32>
    %244 = arith.addf %243, %187 : vector<8x16xf32>
    %cst_112 = arith.constant dense<0xFF800000> : vector<8xf32>
    %245 = vector.multi_reduction <maximumf>, %244, %cst_112 [1] : vector<8x16xf32> to vector<8xf32>
    %246 = vector.shape_cast %245 : vector<8xf32> to vector<8x1xf32>
    %247 = vector.broadcast %246 : vector<8x1xf32> to vector<8x16xf32>
    %248 = arith.subf %244, %247 : vector<8x16xf32>
    %249 = math.exp %248 : vector<8x16xf32>
    %cst_113 = arith.constant dense<0.000000e+00> : vector<8xf32>
    %250 = vector.multi_reduction <add>, %249, %cst_113 [1] : vector<8x16xf32> to vector<8xf32>
    %251 = vector.shape_cast %250 : vector<8xf32> to vector<8x1xf32>
    %252 = tpu.reciprocal %251 {approx = true} : vector<8x1xf32> -> vector<8x1xf32>
    %253 = vector.broadcast %252 : vector<8x1xf32> to vector<8x16xf32>
    %254 = arith.mulf %249, %253 : vector<8x16xf32>
    %255 = arith.addf %236, %254 : vector<8x16xf32>
    %256 = arith.truncf %254 : vector<8x16xf32> to vector<8x16xbf16>
    %257 = vector.extract_strided_slice %201 {offsets = [0, 16], sizes = [16, 8], strides = [1, 1]} : vector<16x32xbf16> to vector<16x8xbf16>
    %cst_114 = arith.constant dense<0.000000e+00> : vector<8x8xf32>
    %258 = tpu.matmul %256, %257, %cst_114 {dimension_numbers = #tpu.dot_dimension_numbers<[1], [0], [0], [1], [0, 0, 1, 1], [], []>} : vector<8x16xbf16>, vector<16x8xbf16>, vector<8x8xf32> -> vector<8x8xf32>
    %c0_115 = arith.constant 0 : index
    %c16_116 = arith.constant 16 : index
    %259 = vector.load %arg22[%c0_115, %c16_116] : memref<8x32xf32, #tpu.memory_space<vmem>>, vector<8x8xf32>
    tpu.vector_store %arg22[%c0_115, %c16_116], %258 {strides = array<i32>} : memref<8x32xf32, #tpu.memory_space<vmem>>, vector<8x8xf32>,
    %260 = vector.extract_strided_slice %199 {offsets = [0, 24], sizes = [8, 8], strides = [1, 1]} : vector<8x32xbf16> to vector<8x8xbf16>
    %261 = vector.extract_strided_slice %200 {offsets = [0, 24], sizes = [16, 8], strides = [1, 1]} : vector<16x32xbf16> to vector<16x8xbf16>
    %cst_117 = arith.constant dense<0.000000e+00> : vector<8x16xf32>
    %262 = tpu.matmul %260, %261, %cst_117 {dimension_numbers = #tpu.dot_dimension_numbers<[1], [1], [0], [0], [0, 0, 1, 0], [], []>} : vector<8x8xbf16>, vector<16x8xbf16>, vector<8x16xf32> -> vector<8x16xf32>
    %263 = arith.addf %262, %187 : vector<8x16xf32>
    %cst_118 = arith.constant dense<0xFF800000> : vector<8xf32>
    %264 = vector.multi_reduction <maximumf>, %263, %cst_118 [1] : vector<8x16xf32> to vector<8xf32>
    %265 = vector.shape_cast %264 : vector<8xf32> to vector<8x1xf32>
    %266 = vector.broadcast %265 : vector<8x1xf32> to vector<8x16xf32>
    %267 = arith.subf %263, %266 : vector<8x16xf32>
    %268 = math.exp %267 : vector<8x16xf32>
    %cst_119 = arith.constant dense<0.000000e+00> : vector<8xf32>
    %269 = vector.multi_reduction <add>, %268, %cst_119 [1] : vector<8x16xf32> to vector<8xf32>
    %270 = vector.shape_cast %269 : vector<8xf32> to vector<8x1xf32>
    %271 = tpu.reciprocal %270 {approx = true} : vector<8x1xf32> -> vector<8x1xf32>
    %272 = vector.broadcast %271 : vector<8x1xf32> to vector<8x16xf32>
    %273 = arith.mulf %268, %272 : vector<8x16xf32>
    %274 = arith.addf %255, %273 : vector<8x16xf32>
    %275 = arith.truncf %273 : vector<8x16xf32> to vector<8x16xbf16>
    %276 = vector.extract_strided_slice %201 {offsets = [0, 24], sizes = [16, 8], strides = [1, 1]} : vector<16x32xbf16> to vector<16x8xbf16>
    %cst_120 = arith.constant dense<0.000000e+00> : vector<8x8xf32>
    %277 = tpu.matmul %275, %276, %cst_120 {dimension_numbers = #tpu.dot_dimension_numbers<[1], [0], [0], [1], [0, 0, 1, 1], [], []>} : vector<8x16xbf16>, vector<16x8xbf16>, vector<8x8xf32> -> vector<8x8xf32>
    %c0_121 = arith.constant 0 : index
    %c24_122 = arith.constant 24 : index
    %278 = vector.load %arg22[%c0_121, %c24_122] : memref<8x32xf32, #tpu.memory_space<vmem>>, vector<8x8xf32>
    tpu.vector_store %arg22[%c0_121, %c24_122], %277 {strides = array<i32>} : memref<8x32xf32, #tpu.memory_space<vmem>>, vector<8x8xf32>,
    %cst_123 = arith.constant 2.500000e-01 : f32
    %279 = vector.broadcast %cst_123 : f32 to vector<8x16xf32>
    %280 = arith.mulf %274, %279 : vector<8x16xf32>
    %c1_124 = arith.constant 1 : index
    %c0_125 = arith.constant 0 : index
    %c0_126 = arith.constant 0 : index
    %281 = vector.load %arg21[%c1_124, %c0_125, %c0_126] : memref<2x8x16xf32, #tpu.memory_space<vmem>>, vector<1x8x16xf32>
    %282 = vector.shape_cast %281 : vector<1x8x16xf32> to vector<8x16xf32>
    %283 = vector.shape_cast %280 : vector<8x16xf32> to vector<1x8x16xf32>
    tpu.vector_store %arg21[%c1_124, %c0_125, %c0_126], %283 {strides = array<i32>} : memref<2x8x16xf32, #tpu.memory_space<vmem>>, vector<1x8x16xf32>,
    %c0_127 = arith.constant 0 : index
    %c0_128 = arith.constant 0 : index
    %284 = vector.load %arg22[%c0_127, %c0_128] : memref<8x32xf32, #tpu.memory_space<vmem>>, vector<8x32xf32>
    %285 = arith.truncf %284 : vector<8x32xf32> to vector<8x32xbf16>
    %cst_129 = arith.constant dense<0.000000e+00> : vector<8x32xf32>
    %286 = tpu.matmul %285, %3, %cst_129 {dimension_numbers = #tpu.dot_dimension_numbers<[1], [0], [0], [1], [0, 0, 1, 1], [], []>} : vector<8x32xbf16>, vector<32x32xbf16>, vector<8x32xf32> -> vector<8x32xf32>
    %287 = vector.broadcast %7 : vector<1x32xf32> to vector<8x32xf32>
    %288 = arith.addf %286, %287 : vector<8x32xf32>
    %289 = arith.addf %288, %181 : vector<8x32xf32>
    %cst_130 = arith.constant dense<0.000000e+00> : vector<8xf32>
    %290 = vector.multi_reduction <add>, %289, %cst_130 [1] : vector<8x32xf32> to vector<8xf32>
    %291 = vector.shape_cast %290 : vector<8xf32> to vector<8x1xf32>
    %cst_131 = arith.constant 3.200000e+01 : f32
    %292 = vector.broadcast %cst_131 : f32 to vector<8x1xf32>
    %293 = arith.divf %291, %292 : vector<8x1xf32>
    %294 = vector.broadcast %293 : vector<8x1xf32> to vector<8x32xf32>
    %295 = arith.subf %289, %294 : vector<8x32xf32>
    %296 = arith.mulf %295, %295 : vector<8x32xf32>
    %cst_132 = arith.constant dense<0.000000e+00> : vector<8xf32>
    %297 = vector.multi_reduction <add>, %296, %cst_132 [1] : vector<8x32xf32> to vector<8xf32>
    %298 = vector.shape_cast %297 : vector<8xf32> to vector<8x1xf32>
    %cst_133 = arith.constant 3.200000e+01 : f32
    %299 = vector.broadcast %cst_133 : f32 to vector<8x1xf32>
    %300 = arith.divf %298, %299 : vector<8x1xf32>
    %cst_134 = arith.constant 9.99999974E-6 : f32
    %301 = vector.broadcast %cst_134 : f32 to vector<8x1xf32>
    %302 = arith.addf %300, %301 : vector<8x1xf32>
    %303 = math.rsqrt %302 : vector<8x1xf32>
    %304 = vector.broadcast %303 : vector<8x1xf32> to vector<8x32xf32>
    %305 = arith.mulf %295, %304 : vector<8x32xf32>
    %306 = vector.broadcast %12 : vector<1x32xf32> to vector<8x32xf32>
    %307 = arith.mulf %305, %306 : vector<8x32xf32>
    %308 = vector.broadcast %13 : vector<1x32xf32> to vector<8x32xf32>
    %309 = arith.addf %307, %308 : vector<8x32xf32>
    %310 = arith.truncf %309 : vector<8x32xf32> to vector<8x32xbf16>
    %cst_135 = arith.constant dense<0.000000e+00> : vector<8x128xf32>
    %311 = tpu.matmul %310, %8, %cst_135 {dimension_numbers = #tpu.dot_dimension_numbers<[1], [0], [0], [1], [0, 0, 1, 1], [], []>} : vector<8x32xbf16>, vector<32x128xbf16>, vector<8x128xf32> -> vector<8x128xf32>
    %312 = vector.broadcast %9 : vector<1x128xf32> to vector<8x128xf32>
    %313 = arith.addf %311, %312 : vector<8x128xf32>
    %cst_136 = arith.constant 0.000000e+00 : f32
    %314 = vector.broadcast %cst_136 : f32 to vector<8x128xf32>
    %315 = arith.maximumf %313, %314 : vector<8x128xf32>
    %316 = arith.truncf %315 : vector<8x128xf32> to vector<8x128xbf16>
    %cst_137 = arith.constant dense<0.000000e+00> : vector<8x32xf32>
    %317 = tpu.matmul %316, %10, %cst_137 {dimension_numbers = #tpu.dot_dimension_numbers<[1], [0], [0], [1], [0, 0, 1, 1], [], []>} : vector<8x128xbf16>, vector<128x32xbf16>, vector<8x32xf32> -> vector<8x32xf32>
    %318 = vector.broadcast %11 : vector<1x32xf32> to vector<8x32xf32>
    %319 = arith.addf %317, %318 : vector<8x32xf32>
    %320 = arith.addf %319, %309 : vector<8x32xf32>
    %cst_138 = arith.constant dense<0.000000e+00> : vector<8xf32>
    %321 = vector.multi_reduction <add>, %320, %cst_138 [1] : vector<8x32xf32> to vector<8xf32>
    %322 = vector.shape_cast %321 : vector<8xf32> to vector<8x1xf32>
    %cst_139 = arith.constant 3.200000e+01 : f32
    %323 = vector.broadcast %cst_139 : f32 to vector<8x1xf32>
    %324 = arith.divf %322, %323 : vector<8x1xf32>
    %325 = vector.broadcast %324 : vector<8x1xf32> to vector<8x32xf32>
    %326 = arith.subf %320, %325 : vector<8x32xf32>
    %327 = arith.mulf %326, %326 : vector<8x32xf32>
    %cst_140 = arith.constant dense<0.000000e+00> : vector<8xf32>
    %328 = vector.multi_reduction <add>, %327, %cst_140 [1] : vector<8x32xf32> to vector<8xf32>
    %329 = vector.shape_cast %328 : vector<8xf32> to vector<8x1xf32>
    %cst_141 = arith.constant 3.200000e+01 : f32
    %330 = vector.broadcast %cst_141 : f32 to vector<8x1xf32>
    %331 = arith.divf %329, %330 : vector<8x1xf32>
    %cst_142 = arith.constant 9.99999974E-6 : f32
    %332 = vector.broadcast %cst_142 : f32 to vector<8x1xf32>
    %333 = arith.addf %331, %332 : vector<8x1xf32>
    %334 = math.rsqrt %333 : vector<8x1xf32>
    %335 = vector.broadcast %334 : vector<8x1xf32> to vector<8x32xf32>
    %336 = arith.mulf %326, %335 : vector<8x32xf32>
    %337 = vector.broadcast %14 : vector<1x32xf32> to vector<8x32xf32>
    %338 = arith.mulf %336, %337 : vector<8x32xf32>
    %339 = vector.broadcast %15 : vector<1x32xf32> to vector<8x32xf32>
    %340 = arith.addf %338, %339 : vector<8x32xf32>
    %c1_143 = arith.constant 1 : index
    %c0_144 = arith.constant 0 : index
    %c0_145 = arith.constant 0 : index
    %341 = vector.load %arg20[%c1_143, %c0_144, %c0_145] : memref<2x8x32xf32, #tpu.memory_space<vmem>>, vector<1x8x32xf32>
    %342 = vector.shape_cast %341 : vector<1x8x32xf32> to vector<8x32xf32>
    %343 = vector.shape_cast %340 : vector<8x32xf32> to vector<1x8x32xf32>
    tpu.vector_store %arg20[%c1_143, %c0_144, %c0_145], %343 {strides = array<i32>} : memref<2x8x32xf32, #tpu.memory_space<vmem>>, vector<1x8x32xf32>,
    return
  }
  func.func @transform_0(%arg0: i32) -> (i32, i32, i32) {
    %c0_i32 = arith.constant 0 : i32
    %c0_i32_0 = arith.constant 0 : i32
    %c0_i32_1 = arith.constant 0 : i32
    return %arg0, %c0_i32, %c0_i32_0 : i32, i32, i32
  }
  func.func @transform_1(%arg0: i32) -> (i32, i32, i32) {
    %c0_i32 = arith.constant 0 : i32
    %c0_i32_0 = arith.constant 0 : i32
    %c0_i32_1 = arith.constant 0 : i32
    return %arg0, %c0_i32, %c0_i32_0 : i32, i32, i32
  }
  func.func @transform_2(%arg0: i32) -> (i32, i32, i32) {
    %c0_i32 = arith.constant 0 : i32
    %c0_i32_0 = arith.constant 0 : i32
    %c0_i32_1 = arith.constant 0 : i32
    return %arg0, %c0_i32, %c0_i32_0 : i32, i32, i32
  }
  func.func @transform_3(%arg0: i32) -> (i32, i32) {
    %c0_i32 = arith.constant 0 : i32
    %c0_i32_0 = arith.constant 0 : i32
    %c0_i32_1 = arith.constant 0 : i32
    return %c0_i32, %c0_i32_0 : i32, i32
  }
  func.func @transform_4(%arg0: i32) -> (i32, i32) {
    %c0_i32 = arith.constant 0 : i32
    %c0_i32_0 = arith.constant 0 : i32
    %c0_i32_1 = arith.constant 0 : i32
    return %c0_i32, %c0_i32_0 : i32, i32
  }
  func.func @transform_5(%arg0: i32) -> (i32, i32) {
    %c0_i32 = arith.constant 0 : i32
    %c0_i32_0 = arith.constant 0 : i32
    %c0_i32_1 = arith.constant 0 : i32
    return %c0_i32, %c0_i32_0 : i32, i32
  }
  func.func @transform_6(%arg0: i32) -> (i32, i32) {
    %c0_i32 = arith.constant 0 : i32
    %c0_i32_0 = arith.constant 0 : i32
    %c0_i32_1 = arith.constant 0 : i32
    return %c0_i32, %c0_i32_0 : i32, i32
  }
  func.func @transform_7(%arg0: i32) -> (i32, i32) {
    %c0_i32 = arith.constant 0 : i32
    %c0_i32_0 = arith.constant 0 : i32
    %c0_i32_1 = arith.constant 0 : i32
    return %c0_i32, %c0_i32_0 : i32, i32
  }
  func.func @transform_8(%arg0: i32) -> (i32, i32) {
    %c0_i32 = arith.constant 0 : i32
    %c0_i32_0 = arith.constant 0 : i32
    %c0_i32_1 = arith.constant 0 : i32
    return %c0_i32, %c0_i32_0 : i32, i32
  }
  func.func @transform_9(%arg0: i32) -> (i32, i32) {
    %c0_i32 = arith.constant 0 : i32
    %c0_i32_0 = arith.constant 0 : i32
    %c0_i32_1 = arith.constant 0 : i32
    return %c0_i32, %c0_i32_0 : i32, i32
  }
  func.func @transform_10(%arg0: i32) -> (i32, i32) {
    %c0_i32 = arith.constant 0 : i32
    %c0_i32_0 = arith.constant 0 : i32
    %c0_i32_1 = arith.constant 0 : i32
    return %c0_i32, %c0_i32_0 : i32, i32
  }
  func.func @transform_11(%arg0: i32) -> (i32, i32) {
    %c0_i32 = arith.constant 0 : i32
    %c0_i32_0 = arith.constant 0 : i32
    %c0_i32_1 = arith.constant 0 : i32
    return %c0_i32, %c0_i32_0 : i32, i32
  }
  func.func @transform_12(%arg0: i32) -> (i32, i32) {
    %c0_i32 = arith.constant 0 : i32
    %c0_i32_0 = arith.constant 0 : i32
    %c0_i32_1 = arith.constant 0 : i32
    return %c0_i32, %c0_i32_0 : i32, i32
  }
  func.func @transform_13(%arg0: i32) -> (i32, i32) {
    %c0_i32 = arith.constant 0 : i32
    %c0_i32_0 = arith.constant 0 : i32
    %c0_i32_1 = arith.constant 0 : i32
    return %c0_i32, %c0_i32_0 : i32, i32
  }
  func.func @transform_14(%arg0: i32) -> (i32, i32) {
    %c0_i32 = arith.constant 0 : i32
    %c0_i32_0 = arith.constant 0 : i32
    %c0_i32_1 = arith.constant 0 : i32
    return %c0_i32, %c0_i32_0 : i32, i32
  }
  func.func @transform_15(%arg0: i32) -> (i32, i32) {
    %c0_i32 = arith.constant 0 : i32
    %c0_i32_0 = arith.constant 0 : i32
    %c0_i32_1 = arith.constant 0 : i32
    return %c0_i32, %c0_i32_0 : i32, i32
  }
  func.func @transform_16(%arg0: i32) -> (i32, i32) {
    %c0_i32 = arith.constant 0 : i32
    %c0_i32_0 = arith.constant 0 : i32
    %c0_i32_1 = arith.constant 0 : i32
    return %c0_i32, %c0_i32_0 : i32, i32
  }
  func.func @transform_17(%arg0: i32) -> (i32, i32) {
    %c0_i32 = arith.constant 0 : i32
    %c0_i32_0 = arith.constant 0 : i32
    %c0_i32_1 = arith.constant 0 : i32
    return %c0_i32, %c0_i32_0 : i32, i32
  }
  func.func @transform_18(%arg0: i32) -> (i32, i32) {
    %c0_i32 = arith.constant 0 : i32
    %c0_i32_0 = arith.constant 0 : i32
    %c0_i32_1 = arith.constant 0 : i32
    return %c0_i32, %c0_i32_0 : i32, i32
  }
  func.func @transform_19(%arg0: i32) -> (i32, i32, i32) {
    %c0_i32 = arith.constant 0 : i32
    %c0_i32_0 = arith.constant 0 : i32
    %c0_i32_1 = arith.constant 0 : i32
    return %arg0, %c0_i32, %c0_i32_0 : i32, i32, i32
  }
  func.func @transform_20(%arg0: i32) -> (i32, i32, i32) {
    %c0_i32 = arith.constant 0 : i32
    %c0_i32_0 = arith.constant 0 : i32
    %c0_i32_1 = arith.constant 0 : i32
    return %arg0, %c0_i32, %c0_i32_0 : i32, i32, i32
  }
}

</mosaic_0001>

<llo_original>
// kernel: tpu_custom_call.1
$region0: #{tpu_custom_call.1}
  #allocation0 [shape = 'u32[]', space=smem, size = 0x4, offset = 0x4, fixed_abs, tag = 'smem constant byte address 0x4 - core index']
  #allocation1 [shape = 'u32[144,128]{1,0:T(1,128)}', space=vmem, size = 0x12000, scoped, tag = 'internal scratch']
  #allocation2 [shape = 'f32[8,32]{1,0:T(8,128)}', space=vmem, size = 0x1000, scoped, tag = 'scratch operand']
  %s0 = inlined_call_operand.hbm [shape: f32[4,8,32], index: 0, kind: input, shape index: {}]
  %s1 = inlined_call_operand.vmem [shape: f32[4,16,32], index: 1, kind: input, shape index: {}]
  %s2 = inlined_call_operand.hbm [shape: f32[4,1,16], index: 2, kind: input, shape index: {}]
  %s3 = inlined_call_operand.vmem [shape: bf16[32,32], index: 3, kind: input, shape index: {}]
  %s4 = inlined_call_operand.hbm [shape: bf16[32,32], index: 4, kind: input, shape index: {}]
  %s5 = inlined_call_operand.hbm [shape: bf16[32,32], index: 5, kind: input, shape index: {}]
  %s6 = inlined_call_operand.vmem [shape: f32[1,32], index: 6, kind: input, shape index: {}]
  %s7 = inlined_call_operand.vmem [shape: f32[1,32], index: 7, kind: input, shape index: {}]
  %s8 = inlined_call_operand.vmem [shape: f32[1,32], index: 8, kind: input, shape index: {}]
  %s9 = inlined_call_operand.hbm [shape: bf16[32,32], index: 9, kind: input, shape index: {}]
  %s10 = inlined_call_operand.vmem [shape: f32[1,32], index: 10, kind: input, shape index: {}]
  %s11 = inlined_call_operand.vmem [shape: f32[1,32], index: 11, kind: input, shape index: {}]
  %s12 = inlined_call_operand.vmem [shape: f32[1,32], index: 12, kind: input, shape index: {}]
  %s13 = inlined_call_operand.hbm [shape: bf16[32,128], index: 13, kind: input, shape index: {}]
  %s14 = inlined_call_operand.vmem [shape: f32[1,128], index: 14, kind: input, shape index: {}]
  %s15 = inlined_call_operand.vmem [shape: bf16[128,32], index: 15, kind: input, shape index: {}]
  %s16 = inlined_call_operand.vmem [shape: f32[1,32], index: 16, kind: input, shape index: {}]
  %s17 = inlined_call_operand.vmem [shape: f32[1,32], index: 17, kind: input, shape index: {}]
  %s18 = inlined_call_operand.vmem [shape: f32[1,32], index: 18, kind: input, shape index: {}]
  %s19 = inlined_call_operand.hbm [shape: f32[4,8,32], index: 19, kind: output, shape index: {0}]
  %s20 = inlined_call_operand.hbm [shape: f32[4,8,16], index: 20, kind: output, shape index: {1}]
  %21 = xla_tuple %s19, %s20
  %s22 = sld [smem:[#allocation0]]
  $region141: #{tpu_custom_call.1} parent=0
    _
  %s24 = ssub.s32 1, %s22
  %s25 = scalar_select 0, %s24, %s22
  $region1: #{tpu_custom_call.1} parent=0
    #allocation3 [shape = 'u8[16384]{0}', space=vmem, size = 0x4000, scoped, tag = 'input window, operand 0']
    #allocation4 [shape = 's32[2]{0}', space=sflag, size = 0x8, scoped, tag = 'scoped memory for tpu_custom_call.1']
    #allocation5 [shape = 's32[2]{0}', space=sflag, size = 0x8, scoped, tag = 'scoped memory for tpu_custom_call.1']
    #allocation6 [shape = 'u8[2048]{0}', space=vmem, size = 0x800, scoped, tag = 'input window, operand 2']
    #allocation7 [shape = 's32[2]{0}', space=sflag, size = 0x8, scoped, tag = 'scoped memory for tpu_custom_call.1']
    #allocation8 [shape = 'u8[8192]{0}', space=vmem, size = 0x2000, scoped, tag = 'input window, operand 4, single buffered']
    #allocation9 [shape = 'u8[8192]{0}', space=vmem, size = 0x2000, scoped, tag = 'input window, operand 5, single buffered']
    #allocation10 [shape = 's32[1]{0}', space=sflag, size = 0x4, scoped, tag = 'scoped memory for tpu_custom_call.1']
    #allocation11 [shape = 'u8[8192]{0}', space=vmem, size = 0x2000, scoped, tag = 'input window, operand 9, single buffered']
    #allocation12 [shape = 'u8[8192]{0}', space=vmem, size = 0x2000, scoped, tag = 'input window, operand 13, single buffered']
    #allocation13 [shape = 's32[1]{0}', space=sflag, size = 0x4, scoped, tag = 'scoped memory for tpu_custom_call.1']
    #allocation14 [shape = 'u8[16384]{0}', space=vmem, size = 0x4000, scoped, tag = 'output window, operand 0']
    #allocation15 [shape = 'u8[16384]{0}', space=vmem, size = 0x4000, scoped, tag = 'output window, operand 1']
    #allocation16 [shape = 's32[2]{0}', space=sflag, size = 0x8, scoped, tag = 'scoped memory for tpu_custom_call.1']
    %26 = vsyncpa [#allocation4], 0
    %s27 = scalar_lea.sflag [#allocation4], 1
    %28 = vsyncpa %s27, 0
    %29 = vsyncpa [#allocation7], 0
    %s30 = scalar_lea.sflag [#allocation7], 1
    %31 = vsyncpa %s30, 0
    %32 = vsyncpa [#allocation10], 0
    %33 = vsyncpa [#allocation13], 0
    %34 = vsyncpa [#allocation5], 0
    %s35 = scalar_lea.sflag [#allocation5], 1
    %36 = vsyncpa %s35, 0
    %37 = vsyncpa [#allocation16], 0
    %s38 = scalar_lea.sflag [#allocation16], 1
    %39 = vsyncpa %s38, 0
    loop: start=0, step=1, limit=4
    $region2: #{tpu_custom_call.1} parent=1 // loop_pre_header
      _
    $region3: #{tpu_custom_call.1} parent=1 // loop_header
      %s41 = sphi 0, %s45
      %p42 = scmp.ge.s32.totalorder %s41, 4
      %s51 = sphi 0, %s53
      %s54 = sphi 0, %s51
      %s55 = sphi 0, %s54
      %s71 = sphi 0, %s55
      %s77 = sphi 0, %s79
      %s80 = sphi 0, %s77
      %s81 = sphi 0, %s80
      %s97 = sphi 0, %s81
      %s103 = sphi 0, %s105
      %s106 = sphi 0, %s103
      %s107 = sphi 0, %s106
      %s123 = sphi 0, %s107
      %s127 = sphi 0, %s127
      %s129 = sphi 0, %s127
      %s130 = sphi 0, %s129
      %s144 = sphi 0, %s130
      %s148 = sphi 0, %s148
      %s150 = sphi 0, %s148
      %s151 = sphi 0, %s150
      %s165 = sphi 0, %s151
      %s169 = sphi 0, %s169
      %s171 = sphi 0, %s169
      %s172 = sphi 0, %s171
      %s186 = sphi 0, %s172
      %s190 = sphi 0, %s190
      %s192 = sphi 0, %s190
      %s193 = sphi 0, %s192
      %s207 = sphi 0, %s193
      %s211 = sphi 0, %s211
      %s213 = sphi 0, %s211
      %s214 = sphi 0, %s213
      %s228 = sphi 0, %s214
      %s232 = sphi 0, %s232
      %s234 = sphi 0, %s232
      %s235 = sphi 0, %s234
      %s249 = sphi 0, %s235
      %s253 = sphi 0, %s253
      %s255 = sphi 0, %s253
      %s256 = sphi 0, %s255
      %s270 = sphi 0, %s256
      %s274 = sphi 0, %s274
      %s276 = sphi 0, %s274
      %s277 = sphi 0, %s276
      %s291 = sphi 0, %s277
      %s295 = sphi 0, %s295
      %s297 = sphi 0, %s295
      %s298 = sphi 0, %s297
      %s312 = sphi 0, %s298
      %s316 = sphi 0, %s316
      %s318 = sphi 0, %s316
      %s319 = sphi 0, %s318
      %s333 = sphi 0, %s319
      %s337 = sphi 0, %s337
      %s339 = sphi 0, %s337
      %s340 = sphi 0, %s339
      %s354 = sphi 0, %s340
      %s358 = sphi 0, %s358
      %s360 = sphi 0, %s358
      %s361 = sphi 0, %s360
      %s375 = sphi 0, %s361
      %s379 = sphi 0, %s379
      %s381 = sphi 0, %s379
      %s382 = sphi 0, %s381
      %s396 = sphi 0, %s382
      %s400 = sphi 0, %s400
      %s402 = sphi 0, %s400
      %s403 = sphi 0, %s402
      %s417 = sphi 0, %s403
      %s421 = sphi 0, %s421
      %s423 = sphi 0, %s421
      %s424 = sphi 0, %s423
      %s438 = sphi 0, %s424
      %s442 = sphi 0, %s442
      %s444 = sphi 0, %s442
      %s445 = sphi 0, %s444
      %s459 = sphi 0, %s445
      %s465 = sphi 0, %s467
      %s468 = sphi 0, %s465
      %s469 = sphi 0, %s468
      %s485 = sphi 0, %s469
      %s491 = sphi 0, %s493
      %s494 = sphi 0, %s491
      %s495 = sphi 0, %s494
      %s511 = sphi 0, %s495
    $region4: #{tpu_custom_call.1} parent=1 // loop_header_branch
      %44 = sbr.rel (%p42) target = $region8
    $region5: #{tpu_custom_call.1} parent=1 // loop_body
      %s46 = ssub.s32 %s41, 1
      %s47 = ssub.s32 %s41, 2
      %s48 = sadd.s32 %s41, 1
      %s49 = ssub.s32 %s41, %s48
      %p50 = scmp.eq.s32.totalorder %s49, 0
      %s52 = sadd.s32 %s51, 1
      %s53 = scalar_select %p50, %s51, %s52
      %p56 = pneg %p50
      %p57 = scmp.eq.s32.totalorder %s41, 1
      %p58 = por %p56, %p57
      %p59 = scmp.ne.s32.totalorder %s51, %s54
      %p60 = scmp.eq.s32.totalorder %s41, 0
      %p61 = por %p59, %p60
      %p62 = scmp.ne.s32.totalorder %s51, %s54
      %p63 = scmp.eq.s32.totalorder %s46, 1
      %p64 = por %p62, %p63
      %p65 = scmp.ne.s32.totalorder %s54, %s55
      %p66 = scmp.eq.s32.totalorder %s46, 0
      %p67 = por %p65, %p66
      %p68 = scmp.ne.s32.totalorder %s54, %s55
      %p69 = scmp.eq.s32.totalorder %s47, 1
      %p70 = por %p68, %p69
      %p72 = scmp.ne.s32.totalorder %s55, %s71
      %p73 = scmp.eq.s32.totalorder %s47, 0
      %p74 = por %p72, %p73
      %s75 = ssub.s32 %s41, %s48
      %p76 = scmp.eq.s32.totalorder %s75, 0
      %s78 = sadd.s32 %s77, 1
      %s79 = scalar_select %p76, %s77, %s78
      %p82 = pneg %p76
      %p83 = scmp.eq.s32.totalorder %s41, 1
      %p84 = por %p82, %p83
      %p85 = scmp.ne.s32.totalorder %s77, %s80
      %p86 = scmp.eq.s32.totalorder %s41, 0
      %p87 = por %p85, %p86
      %p88 = scmp.ne.s32.totalorder %s77, %s80
      %p89 = scmp.eq.s32.totalorder %s46, 1
      %p90 = por %p88, %p89
      %p91 = scmp.ne.s32.totalorder %s80, %s81
      %p92 = scmp.eq.s32.totalorder %s46, 0
      %p93 = por %p91, %p92
      %p94 = scmp.ne.s32.totalorder %s80, %s81
      %p95 = scmp.eq.s32.totalorder %s47, 1
      %p96 = por %p94, %p95
      %p98 = scmp.ne.s32.totalorder %s81, %s97
      %p99 = scmp.eq.s32.totalorder %s47, 0
      %p100 = por %p98, %p99
      %s101 = ssub.s32 %s41, %s48
      %p102 = scmp.eq.s32.totalorder %s101, 0
      %s104 = sadd.s32 %s103, 1
      %s105 = scalar_select %p102, %s103, %s104
      %p108 = pneg %p102
      %p109 = scmp.eq.s32.totalorder %s41, 1
      %p110 = por %p108, %p109
      %p111 = scmp.ne.s32.totalorder %s103, %s106
      %p112 = scmp.eq.s32.totalorder %s41, 0
      %p113 = por %p111, %p112
      %p114 = scmp.ne.s32.totalorder %s103, %s106
      %p115 = scmp.eq.s32.totalorder %s46, 1
      %p116 = por %p114, %p115
      %p117 = scmp.ne.s32.totalorder %s106, %s107
      %p118 = scmp.eq.s32.totalorder %s46, 0
      %p119 = por %p117, %p118
      %p120 = scmp.ne.s32.totalorder %s106, %s107
      %p121 = scmp.eq.s32.totalorder %s47, 1
      %p122 = por %p120, %p121
      %p124 = scmp.ne.s32.totalorder %s107, %s123
      %p125 = scmp.eq.s32.totalorder %s47, 0
      %p126 = por %p124, %p125
      %s128 = sadd.s32 %s127, 1
      %p131 = scmp.eq.s32.totalorder %s41, 1
      %p132 = scmp.ne.s32.totalorder %s127, %s129
      %p133 = scmp.eq.s32.totalorder %s41, 0
      %p134 = por %p132, %p133
      %p135 = scmp.ne.s32.totalorder %s127, %s129
      %p136 = scmp.eq.s32.totalorder %s46, 1
      %p137 = por %p135, %p136
      %p138 = scmp.ne.s32.totalorder %s129, %s130
      %p139 = scmp.eq.s32.totalorder %s46, 0
      %p140 = por %p138, %p139
      %p141 = scmp.ne.s32.totalorder %s129, %s130
      %p142 = scmp.eq.s32.totalorder %s47, 1
      %p143 = por %p141, %p142
      %p145 = scmp.ne.s32.totalorder %s130, %s144
      %p146 = scmp.eq.s32.totalorder %s47, 0
      %p147 = por %p145, %p146
      %s149 = sadd.s32 %s148, 1
      %p152 = scmp.eq.s32.totalorder %s41, 1
      %p153 = scmp.ne.s32.totalorder %s148, %s150
      %p154 = scmp.eq.s32.totalorder %s41, 0
      %p155 = por %p153, %p154
      %p156 = scmp.ne.s32.totalorder %s148, %s150
      %p157 = scmp.eq.s32.totalorder %s46, 1
      %p158 = por %p156, %p157
      %p159 = scmp.ne.s32.totalorder %s150, %s151
      %p160 = scmp.eq.s32.totalorder %s46, 0
      %p161 = por %p159, %p160
      %p162 = scmp.ne.s32.totalorder %s150, %s151
      %p163 = scmp.eq.s32.totalorder %s47, 1
      %p164 = por %p162, %p163
      %p166 = scmp.ne.s32.totalorder %s151, %s165
      %p167 = scmp.eq.s32.totalorder %s47, 0
      %p168 = por %p166, %p167
      %s170 = sadd.s32 %s169, 1
      %p173 = scmp.eq.s32.totalorder %s41, 1
      %p174 = scmp.ne.s32.totalorder %s169, %s171
      %p175 = scmp.eq.s32.totalorder %s41, 0
      %p176 = por %p174, %p175
      %p177 = scmp.ne.s32.totalorder %s169, %s171
      %p178 = scmp.eq.s32.totalorder %s46, 1
      %p179 = por %p177, %p178
      %p180 = scmp.ne.s32.totalorder %s171, %s172
      %p181 = scmp.eq.s32.totalorder %s46, 0
      %p182 = por %p180, %p181
      %p183 = scmp.ne.s32.totalorder %s171, %s172
      %p184 = scmp.eq.s32.totalorder %s47, 1
      %p185 = por %p183, %p184
      %p187 = scmp.ne.s32.totalorder %s172, %s186
      %p188 = scmp.eq.s32.totalorder %s47, 0
      %p189 = por %p187, %p188
      %s191 = sadd.s32 %s190, 1
      %p194 = scmp.eq.s32.totalorder %s41, 1
      %p195 = scmp.ne.s32.totalorder %s190, %s192
      %p196 = scmp.eq.s32.totalorder %s41, 0
      %p197 = por %p195, %p196
      %p198 = scmp.ne.s32.totalorder %s190, %s192
      %p199 = scmp.eq.s32.totalorder %s46, 1
      %p200 = por %p198, %p199
      %p201 = scmp.ne.s32.totalorder %s192, %s193
      %p202 = scmp.eq.s32.totalorder %s46, 0
      %p203 = por %p201, %p202
      %p204 = scmp.ne.s32.totalorder %s192, %s193
      %p205 = scmp.eq.s32.totalorder %s47, 1
      %p206 = por %p204, %p205
      %p208 = scmp.ne.s32.totalorder %s193, %s207
      %p209 = scmp.eq.s32.totalorder %s47, 0
      %p210 = por %p208, %p209
      %s212 = sadd.s32 %s211, 1
      %p215 = scmp.eq.s32.totalorder %s41, 1
      %p216 = scmp.ne.s32.totalorder %s211, %s213
      %p217 = scmp.eq.s32.totalorder %s41, 0
      %p218 = por %p216, %p217
      %p219 = scmp.ne.s32.totalorder %s211, %s213
      %p220 = scmp.eq.s32.totalorder %s46, 1
      %p221 = por %p219, %p220
      %p222 = scmp.ne.s32.totalorder %s213, %s214
      %p223 = scmp.eq.s32.totalorder %s46, 0
      %p224 = por %p222, %p223
      %p225 = scmp.ne.s32.totalorder %s213, %s214
      %p226 = scmp.eq.s32.totalorder %s47, 1
      %p227 = por %p225, %p226
      %p229 = scmp.ne.s32.totalorder %s214, %s228
      %p230 = scmp.eq.s32.totalorder %s47, 0
      %p231 = por %p229, %p230
      %s233 = sadd.s32 %s232, 1
      %p236 = scmp.eq.s32.totalorder %s41, 1
      %p237 = scmp.ne.s32.totalorder %s232, %s234
      %p238 = scmp.eq.s32.totalorder %s41, 0
      %p239 = por %p237, %p238
      %p240 = scmp.ne.s32.totalorder %s232, %s234
      %p241 = scmp.eq.s32.totalorder %s46, 1
      %p242 = por %p240, %p241
      %p243 = scmp.ne.s32.totalorder %s234, %s235
      %p244 = scmp.eq.s32.totalorder %s46, 0
      %p245 = por %p243, %p244
      %p246 = scmp.ne.s32.totalorder %s234, %s235
      %p247 = scmp.eq.s32.totalorder %s47, 1
      %p248 = por %p246, %p247
      %p250 = scmp.ne.s32.totalorder %s235, %s249
      %p251 = scmp.eq.s32.totalorder %s47, 0
      %p252 = por %p250, %p251
      %s254 = sadd.s32 %s253, 1
      %p257 = scmp.eq.s32.totalorder %s41, 1
      %p258 = scmp.ne.s32.totalorder %s253, %s255
      %p259 = scmp.eq.s32.totalorder %s41, 0
      %p260 = por %p258, %p259
      %p261 = scmp.ne.s32.totalorder %s253, %s255
      %p262 = scmp.eq.s32.totalorder %s46, 1
      %p263 = por %p261, %p262
      %p264 = scmp.ne.s32.totalorder %s255, %s256
      %p265 = scmp.eq.s32.totalorder %s46, 0
      %p266 = por %p264, %p265
      %p267 = scmp.ne.s32.totalorder %s255, %s256
      %p268 = scmp.eq.s32.totalorder %s47, 1
      %p269 = por %p267, %p268
      %p271 = scmp.ne.s32.totalorder %s256, %s270
      %p272 = scmp.eq.s32.totalorder %s47, 0
      %p273 = por %p271, %p272
      %s275 = sadd.s32 %s274, 1
      %p278 = scmp.eq.s32.totalorder %s41, 1
      %p279 = scmp.ne.s32.totalorder %s274, %s276
      %p280 = scmp.eq.s32.totalorder %s41, 0
      %p281 = por %p279, %p280
      %p282 = scmp.ne.s32.totalorder %s274, %s276
      %p283 = scmp.eq.s32.totalorder %s46, 1
      %p284 = por %p282, %p283
      %p285 = scmp.ne.s32.totalorder %s276, %s277
      %p286 = scmp.eq.s32.totalorder %s46, 0
      %p287 = por %p285, %p286
      %p288 = scmp.ne.s32.totalorder %s276, %s277
      %p289 = scmp.eq.s32.totalorder %s47, 1
      %p290 = por %p288, %p289
      %p292 = scmp.ne.s32.totalorder %s277, %s291
      %p293 = scmp.eq.s32.totalorder %s47, 0
      %p294 = por %p292, %p293
      %s296 = sadd.s32 %s295, 1
      %p299 = scmp.eq.s32.totalorder %s41, 1
      %p300 = scmp.ne.s32.totalorder %s295, %s297
      %p301 = scmp.eq.s32.totalorder %s41, 0
      %p302 = por %p300, %p301
      %p303 = scmp.ne.s32.totalorder %s295, %s297
      %p304 = scmp.eq.s32.totalorder %s46, 1
      %p305 = por %p303, %p304
      %p306 = scmp.ne.s32.totalorder %s297, %s298
      %p307 = scmp.eq.s32.totalorder %s46, 0
      %p308 = por %p306, %p307
      %p309 = scmp.ne.s32.totalorder %s297, %s298
      %p310 = scmp.eq.s32.totalorder %s47, 1
      %p311 = por %p309, %p310
      %p313 = scmp.ne.s32.totalorder %s298, %s312
      %p314 = scmp.eq.s32.totalorder %s47, 0
      %p315 = por %p313, %p314
      %s317 = sadd.s32 %s316, 1
      %p320 = scmp.eq.s32.totalorder %s41, 1
      %p321 = scmp.ne.s32.totalorder %s316, %s318
      %p322 = scmp.eq.s32.totalorder %s41, 0
      %p323 = por %p321, %p322
      %p324 = scmp.ne.s32.totalorder %s316, %s318
      %p325 = scmp.eq.s32.totalorder %s46, 1
      %p326 = por %p324, %p325
      %p327 = scmp.ne.s32.totalorder %s318, %s319
      %p328 = scmp.eq.s32.totalorder %s46, 0
      %p329 = por %p327, %p328
      %p330 = scmp.ne.s32.totalorder %s318, %s319
      %p331 = scmp.eq.s32.totalorder %s47, 1
      %p332 = por %p330, %p331
      %p334 = scmp.ne.s32.totalorder %s319, %s333
      %p335 = scmp.eq.s32.totalorder %s47, 0
      %p336 = por %p334, %p335
      %s338 = sadd.s32 %s337, 1
      %p341 = scmp.eq.s32.totalorder %s41, 1
      %p342 = scmp.ne.s32.totalorder %s337, %s339
      %p343 = scmp.eq.s32.totalorder %s41, 0
      %p344 = por %p342, %p343
      %p345 = scmp.ne.s32.totalorder %s337, %s339
      %p346 = scmp.eq.s32.totalorder %s46, 1
      %p347 = por %p345, %p346
      %p348 = scmp.ne.s32.totalorder %s339, %s340
      %p349 = scmp.eq.s32.totalorder %s46, 0
      %p350 = por %p348, %p349
      %p351 = scmp.ne.s32.totalorder %s339, %s340
      %p352 = scmp.eq.s32.totalorder %s47, 1
      %p353 = por %p351, %p352
      %p355 = scmp.ne.s32.totalorder %s340, %s354
      %p356 = scmp.eq.s32.totalorder %s47, 0
      %p357 = por %p355, %p356
      %s359 = sadd.s32 %s358, 1
      %p362 = scmp.eq.s32.totalorder %s41, 1
      %p363 = scmp.ne.s32.totalorder %s358, %s360
      %p364 = scmp.eq.s32.totalorder %s41, 0
      %p365 = por %p363, %p364
      %p366 = scmp.ne.s32.totalorder %s358, %s360
      %p367 = scmp.eq.s32.totalorder %s46, 1
      %p368 = por %p366, %p367
      %p369 = scmp.ne.s32.totalorder %s360, %s361
      %p370 = scmp.eq.s32.totalorder %s46, 0
      %p371 = por %p369, %p370
      %p372 = scmp.ne.s32.totalorder %s360, %s361
      %p373 = scmp.eq.s32.totalorder %s47, 1
      %p374 = por %p372, %p373
      %p376 = scmp.ne.s32.totalorder %s361, %s375
      %p377 = scmp.eq.s32.totalorder %s47, 0
      %p378 = por %p376, %p377
      %s380 = sadd.s32 %s379, 1
      %p383 = scmp.eq.s32.totalorder %s41, 1
      %p384 = scmp.ne.s32.totalorder %s379, %s381
      %p385 = scmp.eq.s32.totalorder %s41, 0
      %p386 = por %p384, %p385
      %p387 = scmp.ne.s32.totalorder %s379, %s381
      %p388 = scmp.eq.s32.totalorder %s46, 1
      %p389 = por %p387, %p388
      %p390 = scmp.ne.s32.totalorder %s381, %s382
      %p391 = scmp.eq.s32.totalorder %s46, 0
      %p392 = por %p390, %p391
      %p393 = scmp.ne.s32.totalorder %s381, %s382
      %p394 = scmp.eq.s32.totalorder %s47, 1
      %p395 = por %p393, %p394
      %p397 = scmp.ne.s32.totalorder %s382, %s396
      %p398 = scmp.eq.s32.totalorder %s47, 0
      %p399 = por %p397, %p398
      %s401 = sadd.s32 %s400, 1
      %p404 = scmp.eq.s32.totalorder %s41, 1
      %p405 = scmp.ne.s32.totalorder %s400, %s402
      %p406 = scmp.eq.s32.totalorder %s41, 0
      %p407 = por %p405, %p406
      %p408 = scmp.ne.s32.totalorder %s400, %s402
      %p409 = scmp.eq.s32.totalorder %s46, 1
      %p410 = por %p408, %p409
      %p411 = scmp.ne.s32.totalorder %s402, %s403
      %p412 = scmp.eq.s32.totalorder %s46, 0
      %p413 = por %p411, %p412
      %p414 = scmp.ne.s32.totalorder %s402, %s403
      %p415 = scmp.eq.s32.totalorder %s47, 1
      %p416 = por %p414, %p415
      %p418 = scmp.ne.s32.totalorder %s403, %s417
      %p419 = scmp.eq.s32.totalorder %s47, 0
      %p420 = por %p418, %p419
      %s422 = sadd.s32 %s421, 1
      %p425 = scmp.eq.s32.totalorder %s41, 1
      %p426 = scmp.ne.s32.totalorder %s421, %s423
      %p427 = scmp.eq.s32.totalorder %s41, 0
      %p428 = por %p426, %p427
      %p429 = scmp.ne.s32.totalorder %s421, %s423
      %p430 = scmp.eq.s32.totalorder %s46, 1
      %p431 = por %p429, %p430
      %p432 = scmp.ne.s32.totalorder %s423, %s424
      %p433 = scmp.eq.s32.totalorder %s46, 0
      %p434 = por %p432, %p433
      %p435 = scmp.ne.s32.totalorder %s423, %s424
      %p436 = scmp.eq.s32.totalorder %s47, 1
      %p437 = por %p435, %p436
      %p439 = scmp.ne.s32.totalorder %s424, %s438
      %p440 = scmp.eq.s32.totalorder %s47, 0
      %p441 = por %p439, %p440
      %s443 = sadd.s32 %s442, 1
      %p446 = scmp.eq.s32.totalorder %s41, 1
      %p447 = scmp.ne.s32.totalorder %s442, %s444
      %p448 = scmp.eq.s32.totalorder %s41, 0
      %p449 = por %p447, %p448
      %p450 = scmp.ne.s32.totalorder %s442, %s444
      %p451 = scmp.eq.s32.totalorder %s46, 1
      %p452 = por %p450, %p451
      %p453 = scmp.ne.s32.totalorder %s444, %s445
      %p454 = scmp.eq.s32.totalorder %s46, 0
      %p455 = por %p453, %p454
      %p456 = scmp.ne.s32.totalorder %s444, %s445
      %p457 = scmp.eq.s32.totalorder %s47, 1
      %p458 = por %p456, %p457
      %p460 = scmp.ne.s32.totalorder %s445, %s459
      %p461 = scmp.eq.s32.totalorder %s47, 0
      %p462 = por %p460, %p461
      %s463 = ssub.s32 %s41, %s48
      %p464 = scmp.eq.s32.totalorder %s463, 0
      %s466 = sadd.s32 %s465, 1
      %s467 = scalar_select %p464, %s465, %s466
      %p470 = pneg %p464
      %p471 = scmp.eq.s32.totalorder %s41, 1
      %p472 = por %p470, %p471
      %p473 = scmp.ne.s32.totalorder %s465, %s468
      %p474 = scmp.eq.s32.totalorder %s41, 0
      %p475 = por %p473, %p474
      %p476 = scmp.ne.s32.totalorder %s465, %s468
      %p477 = scmp.eq.s32.totalorder %s46, 1
      %p478 = por %p476, %p477
      %p479 = scmp.ne.s32.totalorder %s468, %s469
      %p480 = scmp.eq.s32.totalorder %s46, 0
      %p481 = por %p479, %p480
      %p482 = scmp.ne.s32.totalorder %s468, %s469
      %p483 = scmp.eq.s32.totalorder %s47, 1
      %p484 = por %p482, %p483
      %p486 = scmp.ne.s32.totalorder %s469, %s485
      %p487 = scmp.eq.s32.totalorder %s47, 0
      %p488 = por %p486, %p487
      %s489 = ssub.s32 %s41, %s48
      %p490 = scmp.eq.s32.totalorder %s489, 0
      %s492 = sadd.s32 %s491, 1
      %s493 = scalar_select %p490, %s491, %s492
      %p496 = pneg %p490
      %p497 = scmp.eq.s32.totalorder %s41, 1
      %p498 = por %p496, %p497
      %p499 = scmp.ne.s32.totalorder %s491, %s494
      %p500 = scmp.eq.s32.totalorder %s41, 0
      %p501 = por %p499, %p500
      %p502 = scmp.ne.s32.totalorder %s491, %s494
      %p503 = scmp.eq.s32.totalorder %s46, 1
      %p504 = por %p502, %p503
      %p505 = scmp.ne.s32.totalorder %s494, %s495
      %p506 = scmp.eq.s32.totalorder %s46, 0
      %p507 = por %p505, %p506
      %p508 = scmp.ne.s32.totalorder %s494, %s495
      %p509 = scmp.eq.s32.totalorder %s47, 1
      %p510 = por %p508, %p509
      %p512 = scmp.ne.s32.totalorder %s495, %s511
      %p513 = scmp.eq.s32.totalorder %s47, 0
      %p514 = por %p512, %p513
      %p515 = scmp.le.s32.totalorder 1, %s41
      %p516 = scmp.lt.s32.totalorder %s41, 3
      %p517 = pnand %p515, %p516
      %p518 = pneg %p517
      // Predicated region
      $region9: #{tpu_custom_call.1} parent=5 // pred_check
        _
      $region10: #{tpu_custom_call.1} parent=5 // pred_check_branch
        %520 = sbr.rel (%p517) target = $region12
      $region11: #{tpu_custom_call.1} parent=5 // pred_region
        %s521 = ssub.s32 %s41, 1
        // Predicated region
        $region13: #{tpu_custom_call.1} parent=11 // pred_check
          %p522 = pneg %p140
        $region14: #{tpu_custom_call.1} parent=11 // pred_check_branch
          %524 = sbr.rel (%p522) target = $region16
        $region15: #{tpu_custom_call.1} parent=11 // pred_region
          _
        $region16: #{tpu_custom_call.1} parent=11 // pred_fallthru
          _
        // Predicated region
        $region17: #{tpu_custom_call.1} parent=11 // pred_check
          %p525 = pneg %p161
        $region18: #{tpu_custom_call.1} parent=11 // pred_check_branch
          %527 = sbr.rel (%p525) target = $region20
        $region19: #{tpu_custom_call.1} parent=11 // pred_region
          %s529 = ssub.s32 256, 256
          %530 = vsyncadd [#allocation7], %s529
          %s531 = sshll.u32 [#allocation8], 4
          %s532 = int_to_ptr.vmem [resolvable:$true] %s531
          %537 = dma.hbm_to_vmem [thread:$0]  %s4, 256, %s532, [#allocation7], 64, 64, 4
        $region20: #{tpu_custom_call.1} parent=11 // pred_fallthru
          _
        // Predicated region
        $region21: #{tpu_custom_call.1} parent=11 // pred_check
          %p538 = pneg %p182
        $region22: #{tpu_custom_call.1} parent=11 // pred_check_branch
          %540 = sbr.rel (%p538) target = $region24
        $region23: #{tpu_custom_call.1} parent=11 // pred_region
          %s542 = ssub.s32 256, 256
          %543 = vsyncadd [#allocation10], %s542
          %s544 = sshll.u32 [#allocation9], 4
          %s545 = int_to_ptr.vmem [resolvable:$true] %s544
          %550 = dma.hbm_to_vmem [thread:$0]  %s5, 256, %s545, [#allocation10], 64, 64, 4
        $region24: #{tpu_custom_call.1} parent=11 // pred_fallthru
          _
        // Predicated region
        $region25: #{tpu_custom_call.1} parent=11 // pred_check
          %p551 = pneg %p203
        $region26: #{tpu_custom_call.1} parent=11 // pred_check_branch
          %553 = sbr.rel (%p551) target = $region28
        $region27: #{tpu_custom_call.1} parent=11 // pred_region
          _
        $region28: #{tpu_custom_call.1} parent=11 // pred_fallthru
          _
        // Predicated region
        $region29: #{tpu_custom_call.1} parent=11 // pred_check
          %p554 = pneg %p224
        $region30: #{tpu_custom_call.1} parent=11 // pred_check_branch
          %556 = sbr.rel (%p554) target = $region32
        $region31: #{tpu_custom_call.1} parent=11 // pred_region
          _
        $region32: #{tpu_custom_call.1} parent=11 // pred_fallthru
          _
        // Predicated region
        $region33: #{tpu_custom_call.1} parent=11 // pred_check
          %p557 = pneg %p245
        $region34: #{tpu_custom_call.1} parent=11 // pred_check_branch
          %559 = sbr.rel (%p557) target = $region36
        $region35: #{tpu_custom_call.1} parent=11 // pred_region
          _
        $region36: #{tpu_custom_call.1} parent=11 // pred_fallthru
          _
        // Predicated region
        $region37: #{tpu_custom_call.1} parent=11 // pred_check
          %p560 = pneg %p266
        $region38: #{tpu_custom_call.1} parent=11 // pred_check_branch
          %562 = sbr.rel (%p560) target = $region40
        $region39: #{tpu_custom_call.1} parent=11 // pred_region
          %s564 = ssub.s32 256, 256
          %565 = vsyncadd [#allocation10], %s564
          %s566 = sshll.u32 [#allocation11], 4
          %s567 = int_to_ptr.vmem [resolvable:$true] %s566
          %572 = dma.hbm_to_vmem [thread:$0]  %s9, 256, %s567, [#allocation10], 64, 64, 4
        $region40: #{tpu_custom_call.1} parent=11 // pred_fallthru
          _
        // Predicated region
        $region41: #{tpu_custom_call.1} parent=11 // pred_check
          %p573 = pneg %p287
        $region42: #{tpu_custom_call.1} parent=11 // pred_check_branch
          %575 = sbr.rel (%p573) target = $region44
        $region43: #{tpu_custom_call.1} parent=11 // pred_region
          _
        $region44: #{tpu_custom_call.1} parent=11 // pred_fallthru
          _
        // Predicated region
        $region45: #{tpu_custom_call.1} parent=11 // pred_check
          %p576 = pneg %p308
        $region46: #{tpu_custom_call.1} parent=11 // pred_check_branch
          %578 = sbr.rel (%p576) target = $region48
        $region47: #{tpu_custom_call.1} parent=11 // pred_region
          _
        $region48: #{tpu_custom_call.1} parent=11 // pred_fallthru
          _
        // Predicated region
        $region49: #{tpu_custom_call.1} parent=11 // pred_check
          %p579 = pneg %p329
        $region50: #{tpu_custom_call.1} parent=11 // pred_check_branch
          %581 = sbr.rel (%p579) target = $region52
        $region51: #{tpu_custom_call.1} parent=11 // pred_region
          _
        $region52: #{tpu_custom_call.1} parent=11 // pred_fallthru
          _
        // Predicated region
        $region53: #{tpu_custom_call.1} parent=11 // pred_check
          %p582 = pneg %p350
        $region54: #{tpu_custom_call.1} parent=11 // pred_check_branch
          %584 = sbr.rel (%p582) target = $region56
        $region55: #{tpu_custom_call.1} parent=11 // pred_region
          %s586 = ssub.s32 256, 256
          %587 = vsyncadd [#allocation13], %s586
          %s588 = sshll.u32 [#allocation12], 4
          %s589 = int_to_ptr.vmem [resolvable:$true] %s588
          %594 = dma.hbm_to_vmem [thread:$0]  %s13, 256, %s589, [#allocation13], 64, 64, 4
        $region56: #{tpu_custom_call.1} parent=11 // pred_fallthru
          _
        // Predicated region
        $region57: #{tpu_custom_call.1} parent=11 // pred_check
          %p595 = pneg %p371
        $region58: #{tpu_custom_call.1} parent=11 // pred_check_branch
          %597 = sbr.rel (%p595) target = $region60
        $region59: #{tpu_custom_call.1} parent=11 // pred_region
          _
        $region60: #{tpu_custom_call.1} parent=11 // pred_fallthru
          _
        // Predicated region
        $region61: #{tpu_custom_call.1} parent=11 // pred_check
          %p598 = pneg %p392
        $region62: #{tpu_custom_call.1} parent=11 // pred_check_branch
          %600 = sbr.rel (%p598) target = $region64
        $region63: #{tpu_custom_call.1} parent=11 // pred_region
          _
        $region64: #{tpu_custom_call.1} parent=11 // pred_fallthru
          _
        // Predicated region
        $region65: #{tpu_custom_call.1} parent=11 // pred_check
          %p601 = pneg %p413
        $region66: #{tpu_custom_call.1} parent=11 // pred_check_branch
          %603 = sbr.rel (%p601) target = $region68
        $region67: #{tpu_custom_call.1} parent=11 // pred_region
          _
        $region68: #{tpu_custom_call.1} parent=11 // pred_fallthru
          _
        // Predicated region
        $region69: #{tpu_custom_call.1} parent=11 // pred_check
          %p604 = pneg %p434
        $region70: #{tpu_custom_call.1} parent=11 // pred_check_branch
          %606 = sbr.rel (%p604) target = $region72
        $region71: #{tpu_custom_call.1} parent=11 // pred_region
          _
        $region72: #{tpu_custom_call.1} parent=11 // pred_fallthru
          _
        // Predicated region
        $region73: #{tpu_custom_call.1} parent=11 // pred_check
          %p607 = pneg %p455
        $region74: #{tpu_custom_call.1} parent=11 // pred_check_branch
          %609 = sbr.rel (%p607) target = $region76
        $region75: #{tpu_custom_call.1} parent=11 // pred_region
          _
        $region76: #{tpu_custom_call.1} parent=11 // pred_fallthru
          _
      $region12: #{tpu_custom_call.1} parent=5 // pred_fallthru
        _
      %p610 = scmp.lt.s32.totalorder %s41, 2
      // Predicated region
      $region77: #{tpu_custom_call.1} parent=5 // pred_check
        %p611 = pneg %p610
      $region78: #{tpu_custom_call.1} parent=5 // pred_check_branch
        %613 = sbr.rel (%p611) target = $region80
      $region79: #{tpu_custom_call.1} parent=5 // pred_region
        // Predicated region
        $region81: #{tpu_custom_call.1} parent=79 // pred_check
          %p614 = pneg %p61
        $region82: #{tpu_custom_call.1} parent=79 // pred_check_branch
          %616 = sbr.rel (%p614) target = $region84
        $region83: #{tpu_custom_call.1} parent=79 // pred_region
          %s617 = sand.u32 %s51, 1
          %s618 = scalar_lea.sflag [#allocation4], %s617
          %s619 = sand.u32 %s51, 1
          %s620 = smul.addr %s619, 16
          %s621 = scalar_lea.vmem [#allocation3], %s620
          %s622 = smul.u32 2, %s41
          %s624 = ssub.s32 256, 256
          %625 = vsyncadd %s618, %s624
          %s626 = smul.addr %s622, 128
          %s627 = scalar_lea.hbm %s0, %s626
          %s628 = sshll.u32 %s621, 4
          %s629 = int_to_ptr.vmem [resolvable:$true] %s628
          %634 = dma.hbm_to_vmem [thread:$0]  %s627, 256, %s629, %s618, 128, 128, 8
        $region84: #{tpu_custom_call.1} parent=79 // pred_fallthru
          _
        // Predicated region
        $region85: #{tpu_custom_call.1} parent=79 // pred_check
          %p635 = pneg %p87
        $region86: #{tpu_custom_call.1} parent=79 // pred_check_branch
          %637 = sbr.rel (%p635) target = $region88
        $region87: #{tpu_custom_call.1} parent=79 // pred_region
          %s638 = smul.u32 2, %s41
          %p639 = scmp.lt.s32.totalorder %s638, 3
          %s640 = scalar_select %p639, %s638, 3
          %s641 = smul.addr %s640, 2
          %s642 = smul.addr %s641, 8
          %s643 = scalar_lea.vmem %s1, %s642
          %s644 = smul.u32 2, %s41
        $region88: #{tpu_custom_call.1} parent=79 // pred_fallthru
          _
        // Predicated region
        $region89: #{tpu_custom_call.1} parent=79 // pred_check
          %p645 = pneg %p113
        $region90: #{tpu_custom_call.1} parent=79 // pred_check_branch
          %647 = sbr.rel (%p645) target = $region92
        $region91: #{tpu_custom_call.1} parent=79 // pred_region
          %s648 = sand.u32 %s41, 1
          %s649 = scalar_lea.sflag [#allocation7], %s648
          %s650 = sand.u32 %s103, 1
          %s651 = smul.addr %s650, 2
          %s652 = scalar_lea.vmem [#allocation6], %s651
          %s653 = smul.u32 2, %s41
          %s655 = ssub.s32 32, 32
          %656 = vsyncadd %s649, %s655
          %s657 = smul.addr %s653, 16
          %s658 = scalar_lea.hbm %s2, %s657
          %s659 = sshll.u32 %s652, 4
          %s660 = int_to_ptr.vmem [resolvable:$true] %s659
          %665 = dma.hbm_to_vmem [thread:$0]  %s658, 32, %s660, %s649, 16, 16, 1
        $region92: #{tpu_custom_call.1} parent=79 // pred_fallthru
          _
      $region80: #{tpu_custom_call.1} parent=5 // pred_fallthru
        _
      %p666 = scmp.le.s32.totalorder 1, %s41
      %p667 = scmp.lt.s32.totalorder %s41, 3
      %p668 = pnand %p666, %p667
      %p669 = pneg %p668
      // Predicated region
      $region93: #{tpu_custom_call.1} parent=5 // pred_check
        _
      $region94: #{tpu_custom_call.1} parent=5 // pred_check_branch
        %671 = sbr.rel (%p668) target = $region96
      $region95: #{tpu_custom_call.1} parent=5 // pred_region
        %s672 = ssub.s32 %s41, 1
        %s673 = sand.u32 %s54, 1
        %s674 = scalar_lea.sflag [#allocation4], %s673
        %s675 = sand.u32 %s54, 1
        %s676 = smul.addr %s675, 16
        %s677 = scalar_lea.vmem [#allocation3], %s676
        // Predicated region
        $region97: #{tpu_custom_call.1} parent=95 // pred_check
          %p678 = pneg %p67
        $region98: #{tpu_custom_call.1} parent=95 // pred_check_branch
          %680 = sbr.rel (%p678) target = $region100
        $region99: #{tpu_custom_call.1} parent=95 // pred_region
          %681 = dma.done %s674, 256
        $region100: #{tpu_custom_call.1} parent=95 // pred_fallthru
          _
        %s682 = sand.u32 %s46, 1
        %s683 = scalar_lea.sflag [#allocation7], %s682
        %s684 = sand.u32 %s106, 1
        %s685 = smul.addr %s684, 2
        %s686 = scalar_lea.vmem [#allocation6], %s685
        // Predicated region
        $region101: #{tpu_custom_call.1} parent=95 // pred_check
          %p687 = pneg %p119
        $region102: #{tpu_custom_call.1} parent=95 // pred_check_branch
          %689 = sbr.rel (%p687) target = $region104
        $region103: #{tpu_custom_call.1} parent=95 // pred_region
          %690 = dma.done %s683, 32
        $region104: #{tpu_custom_call.1} parent=95 // pred_fallthru
          _
        // Predicated region
        $region105: #{tpu_custom_call.1} parent=95 // pred_check
          %p691 = pneg %p161
        $region106: #{tpu_custom_call.1} parent=95 // pred_check_branch
          %693 = sbr.rel (%p691) target = $region108
        $region107: #{tpu_custom_call.1} parent=95 // pred_region
          %694 = dma.done [#allocation7], 256
        $region108: #{tpu_custom_call.1} parent=95 // pred_fallthru
          _
        // Predicated region
        $region109: #{tpu_custom_call.1} parent=95 // pred_check
          %p695 = pneg %p182
        $region110: #{tpu_custom_call.1} parent=95 // pred_check_branch
          %697 = sbr.rel (%p695) target = $region112
        $region111: #{tpu_custom_call.1} parent=95 // pred_region
          %698 = dma.done [#allocation10], 256
        $region112: #{tpu_custom_call.1} parent=95 // pred_fallthru
          _
        // Predicated region
        $region113: #{tpu_custom_call.1} parent=95 // pred_check
          %p699 = pneg %p266
        $region114: #{tpu_custom_call.1} parent=95 // pred_check_branch
          %701 = sbr.rel (%p699) target = $region116
        $region115: #{tpu_custom_call.1} parent=95 // pred_region
          %702 = dma.done [#allocation10], 256
        $region116: #{tpu_custom_call.1} parent=95 // pred_fallthru
          _
        // Predicated region
        $region117: #{tpu_custom_call.1} parent=95 // pred_check
          %p703 = pneg %p350
        $region118: #{tpu_custom_call.1} parent=95 // pred_check_branch
          %705 = sbr.rel (%p703) target = $region120
        $region119: #{tpu_custom_call.1} parent=95 // pred_region
          %706 = dma.done [#allocation13], 256
        $region120: #{tpu_custom_call.1} parent=95 // pred_fallthru
          _
        %s707 = sand.u32 %s54, 1
        %s708 = scalar_lea.sflag [#allocation4], %s707
        %s709 = sand.u32 %s54, 1
        %s710 = smul.addr %s709, 16
        %s711 = scalar_lea.vmem [#allocation3], %s710
        %p712 = pneg %p67
        %p713 = pneg %p64
        %s714 = smul.u32 2, %s46
        %p715 = scmp.lt.s32.totalorder %s714, 3
        %s716 = scalar_select %p715, %s714, 3
        %s717 = smul.addr %s716, 2
        %s718 = smul.addr %s717, 8
        %s719 = scalar_lea.vmem %s1, %s718
        %p720 = pneg %p93
        %p721 = pneg %p90
        %s722 = sand.u32 %s46, 1
        %s723 = scalar_lea.sflag [#allocation7], %s722
        %s724 = sand.u32 %s106, 1
        %s725 = smul.addr %s724, 2
        %s726 = scalar_lea.vmem [#allocation6], %s725
        %p727 = pneg %p119
        %p728 = pneg %p116
        %p729 = pneg %p140
        %p730 = pneg %p137
        %p731 = pneg %p161
        %p732 = pneg %p158
        %p733 = pneg %p182
        %p734 = pneg %p179
        %p735 = pneg %p203
        %p736 = pneg %p200
        %p737 = pneg %p224
        %p738 = pneg %p221
        %p739 = pneg %p245
        %p740 = pneg %p242
        %p741 = pneg %p266
        %p742 = pneg %p263
        %p743 = pneg %p287
        %p744 = pneg %p284
        %p745 = pneg %p308
        %p746 = pneg %p305
        %p747 = pneg %p329
        %p748 = pneg %p326
        %p749 = pneg %p350
        %p750 = pneg %p347
        %p751 = pneg %p371
        %p752 = pneg %p368
        %p753 = pneg %p392
        %p754 = pneg %p389
        %p755 = pneg %p413
        %p756 = pneg %p410
        %p757 = pneg %p434
        %p758 = pneg %p431
        %p759 = pneg %p455
        %p760 = pneg %p452
        %p761 = pneg %p481
        %p762 = pneg %p478
        %s763 = sand.u32 %s468, 1
        %s764 = scalar_lea.sflag [#allocation5], %s763
        %s765 = sand.u32 %s468, 1
        %s766 = smul.addr %s765, 16
        %s767 = scalar_lea.vmem [#allocation14], %s766
        %p768 = pneg %p507
        %p769 = pneg %p504
        %s770 = sand.u32 %s494, 1
        %s771 = scalar_lea.sflag [#allocation16], %s770
        %s772 = sand.u32 %s494, 1
        %s773 = smul.addr %s772, 16
        %s774 = scalar_lea.vmem [#allocation15], %s773
        %s775 = smul.u32 2, %s46
        %s776 = smul.u32 2, %s46
        %p777 = scmp.lt.s32.totalorder %s776, 3
        %s778 = scalar_select %p777, %s776, 3
        %s779 = smul.addr %s778, 2
        %s780 = smul.addr %s779, 8
        %s781 = scalar_lea.vmem %s1, %s780
        %s782 = smul.u32 2, %s46
        %s783 = smul.u32 2, %s46
        %s784 = smul.u32 2, %s46
        %s785 = smul.u32 2, %s46
        %v787 = vld [vmem:[%s3] sm:$0xf]
        %v788 = vld [vmem:[%s3 + $0x4] sm:$0xf]
        %v789 = vld [vmem:[%s3 + $0x8] sm:$0xf]
        %v790 = vld [vmem:[%s3 + $0xc] sm:$0xf]
        %v791 = vld [vmem:[#allocation8] sm:$0xf]
        %v792 = vld [vmem:[#allocation8 + $0x4] sm:$0xf]
        %v793 = vld [vmem:[#allocation8 + $0x8] sm:$0xf]
        %v794 = vld [vmem:[#allocation8 + $0xc] sm:$0xf]
        %v795 = vld [vmem:[#allocation9] sm:$0xf]
        %v796 = vld [vmem:[#allocation9 + $0x4] sm:$0xf]
        %v797 = vld [vmem:[#allocation9 + $0x8] sm:$0xf]
        %v798 = vld [vmem:[#allocation9 + $0xc] sm:$0xf]
        %v799 = vld [vmem:[#allocation11] sm:$0xf]
        %v800 = vld [vmem:[#allocation11 + $0x4] sm:$0xf]
        %v801 = vld [vmem:[#allocation11 + $0x8] sm:$0xf]
        %v802 = vld [vmem:[#allocation11 + $0xc] sm:$0xf]
        %v803 = vld [vmem:[%s6] sm:$0x1]
        %v804 = vld [vmem:[%s7] sm:$0x1]
        %v805 = vld [vmem:[%s8] sm:$0x1]
        %v806 = vld [vmem:[%s10] sm:$0x1]
        %v807 = vld [vmem:[#allocation12] sm:$0xf]
        %v808 = vld [vmem:[#allocation12 + $0x4] sm:$0xf]
        %v809 = vld [vmem:[#allocation12 + $0x8] sm:$0xf]
        %v810 = vld [vmem:[#allocation12 + $0xc] sm:$0xf]
        %v811 = vld [vmem:[%s14] sm:$0x1]
        %v812 = vld [vmem:[%s15] sm:$0xf]
        %v813 = vld [vmem:[%s15 + $0x4] sm:$0xf]
        %v814 = vld [vmem:[%s15 + $0x8] sm:$0xf]
        %v815 = vld [vmem:[%s15 + $0xc] sm:$0xf]
        %v816 = vld [vmem:[%s15 + $0x10] sm:$0xf]
        %v817 = vld [vmem:[%s15 + $0x14] sm:$0xf]
        %v818 = vld [vmem:[%s15 + $0x18] sm:$0xf]
        %v819 = vld [vmem:[%s15 + $0x1c] sm:$0xf]
        %v820 = vld [vmem:[%s15 + $0x20] sm:$0xf]
        %v821 = vld [vmem:[%s15 + $0x24] sm:$0xf]
        %v822 = vld [vmem:[%s15 + $0x28] sm:$0xf]
        %v823 = vld [vmem:[%s15 + $0x2c] sm:$0xf]
        %v824 = vld [vmem:[%s15 + $0x30] sm:$0xf]
        %v825 = vld [vmem:[%s15 + $0x34] sm:$0xf]
        %v826 = vld [vmem:[%s15 + $0x38] sm:$0xf]
        %v827 = vld [vmem:[%s15 + $0x3c] sm:$0xf]
        %v828 = vld [vmem:[%s16] sm:$0x1]
        %v829 = vld [vmem:[%s11] sm:$0x1]
        %v830 = vld [vmem:[%s12] sm:$0x1]
        %v831 = vld [vmem:[%s17] sm:$0x1]
        %v832 = vld [vmem:[%s18] sm:$0x1]
        %v833 = vld [vmem:[%s677] sm:$0xff]
        %v834 = vld [vmem:[%s781] sm:$0xff]
        %v835 = vld [vmem:[%s781 + $0x8] sm:$0xff]
        %v836 = vld [vmem:[%s686] sm:$0x1]
        %v838 = vlaneseq
        %v839 = vshrl.u32 %v838, 7
        %v840 = vsub.s32 0, %v839
        %v841 = vrot.slane %v836, %v840
        %v843 = vpack.c.bf16 %v833, %v833
        %v844 = vpack.c.bf16 %v835, %v834
        %v846 = vlaneseq
        %v847 = vshrl.u32 %v846, 7
        %v848 = vsub.s32 0, %v847
        %v849 = vrot.slane %v803, %v848
        %v855 = vunpack.c.l.b16 %v787
        %v856 = vunpack.c.l.b16 %v788
        %v857 = vunpack.c.l.b16 %v789
        %v858 = vunpack.c.l.b16 %v790
        %v859 = vpack.c.b16 %v856, %v855
        %v860 = vpack.c.b16 %v858, %v857
        %vm863 = vcmask 261120
        %v865 = vsel %vm863, %v843, 0
        %867 = vmatprep.subr.bf16.mxu0 0
        %868 = vmatpush1.bf16.msra.mxu0 0
        %869 = vmatprep.subr.bf16.mxu0 0
        %870 = vmatpush1.bf16.msra.mxu0 0
        %871 = vmatprep.subr.bf16.mxu0 0
        %872 = vmatpush1.bf16.msra.mxu0 0
        %873 = vmatprep.subr.bf16.mxu0 0
        %874 = vmatpush1.bf16.msra.mxu0 0
        %875 = vmatprep.subr.bf16.mxu0 0
        %876 = vmatpush1.bf16.msra.mxu0 0
        %877 = vmatprep.subr.bf16.mxu0 0
        %878 = vmatpush1.bf16.msra.mxu0 0
        %879 = vmatprep.subr.bf16.mxu0 0
        %880 = vmatpush1.bf16.msra.mxu0 %v860
        %881 = vmatprep.subr.bf16.mxu0 0
        %882 = vmatpush1.bf16.msra.mxu0 %v859
        %883 = vmatprep.subr.bf16.mxu0 0
        %884 = vmatpush2.bf16.msra.mxu0 0
        %885 = vmatprep.subr.bf16.mxu0 0
        %886 = vmatpush2.bf16.msra.mxu0 0
        %887 = vmatprep.subr.bf16.mxu0 0
        %888 = vmatpush2.bf16.msra.mxu0 0
        %889 = vmatprep.subr.bf16.mxu0 0
        %890 = vmatpush2.bf16.msra.mxu0 0
        %891 = vmatprep.subr.bf16.mxu0 0
        %892 = vmatpush2.bf16.msra.mxu0 0
        %893 = vmatprep.subr.bf16.mxu0 0
        %894 = vmatpush2.bf16.msra.mxu0 0
        %895 = vmatprep.subr.bf16.mxu0 0
        %896 = vmatpush2.bf16.msra.mxu0 0
        %897 = vmatprep.subr.bf16.mxu0 0
        %898 = vmatpush2.bf16.msra.mxu0 0
        %899 = vmatprep.mubr.bf16.mxu0 0
        %900 = vmatmul.mubr.bf16.gmra.mxu0 %v865
        %v901 = vpop.f32.mrf.mxu0
        %v902 = vadd.f32 %v849, %v901
        %v903 = vpop.f32.mrf.mxu0
        %v904 = vpop.f32.mrf.mxu0
        %v905 = vpop.f32.mrf.mxu0
        %906 = vdwg.mxu0
        %v908 = vlaneseq
        %v909 = vshrl.u32 %v908, 7
        %v910 = vsub.s32 0, %v909
        %v911 = vrot.slane %v804, %v910
        %v917 = vunpack.c.l.b16 %v791
        %v918 = vunpack.c.l.b16 %v792
        %v919 = vunpack.c.l.b16 %v793
        %v920 = vunpack.c.l.b16 %v794
        %v921 = vpack.c.b16 %v918, %v917
        %v922 = vpack.c.b16 %v920, %v919
        %v926 = vsel %vm863, %v844, 0
        %928 = vmatprep.subr.bf16.mxu0 0
        %929 = vmatpush1.bf16.msra.mxu0 0
        %930 = vmatprep.subr.bf16.mxu0 0
        %931 = vmatpush1.bf16.msra.mxu0 0
        %932 = vmatprep.subr.bf16.mxu0 0
        %933 = vmatpush1.bf16.msra.mxu0 0
        %934 = vmatprep.subr.bf16.mxu0 0
        %935 = vmatpush1.bf16.msra.mxu0 0
        %936 = vmatprep.subr.bf16.mxu0 0
        %937 = vmatpush1.bf16.msra.mxu0 0
        %938 = vmatprep.subr.bf16.mxu0 0
        %939 = vmatpush1.bf16.msra.mxu0 0
        %940 = vmatprep.subr.bf16.mxu0 0
        %941 = vmatpush1.bf16.msra.mxu0 %v922
        %942 = vmatprep.subr.bf16.mxu0 0
        %943 = vmatpush1.bf16.msra.mxu0 %v921
        %944 = vmatprep.subr.bf16.mxu0 0
        %945 = vmatpush2.bf16.msra.mxu0 0
        %946 = vmatprep.subr.bf16.mxu0 0
        %947 = vmatpush2.bf16.msra.mxu0 0
        %948 = vmatprep.subr.bf16.mxu0 0
        %949 = vmatpush2.bf16.msra.mxu0 0
        %950 = vmatprep.subr.bf16.mxu0 0
        %951 = vmatpush2.bf16.msra.mxu0 0
        %952 = vmatprep.subr.bf16.mxu0 0
        %953 = vmatpush2.bf16.msra.mxu0 0
        %954 = vmatprep.subr.bf16.mxu0 0
        %955 = vmatpush2.bf16.msra.mxu0 0
        %956 = vmatprep.subr.bf16.mxu0 0
        %957 = vmatpush2.bf16.msra.mxu0 0
        %958 = vmatprep.subr.bf16.mxu0 0
        %959 = vmatpush2.bf16.msra.mxu0 0
        %960 = vmatprep.mubr.bf16.mxu0 0
        %961 = vmatmul.mubr.bf16.gmra.mxu0 %v926
        %v962 = vpop.f32.mrf.mxu0
        %v963 = vadd.f32 %v911, %v962
        %v964 = vpop.f32.mrf.mxu0
        %v965 = vpop.f32.mrf.mxu0
        %v966 = vadd.f32 %v911, %v965
        %v967 = vpop.f32.mrf.mxu0
        %968 = vdwg.mxu0
        %v970 = vlaneseq
        %v971 = vshrl.u32 %v970, 7
        %v972 = vsub.s32 0, %v971
        %v973 = vrot.slane %v805, %v972
        %v979 = vunpack.c.l.b16 %v795
        %v980 = vunpack.c.l.b16 %v796
        %v981 = vunpack.c.l.b16 %v797
        %v982 = vunpack.c.l.b16 %v798
        %v983 = vpack.c.b16 %v980, %v979
        %v984 = vpack.c.b16 %v982, %v981
        %987 = vmatprep.subr.bf16.mxu0 0
        %988 = vmatpush1.bf16.msra.mxu0 0
        %989 = vmatprep.subr.bf16.mxu0 0
        %990 = vmatpush1.bf16.msra.mxu0 0
        %991 = vmatprep.subr.bf16.mxu0 0
        %992 = vmatpush1.bf16.msra.mxu0 0
        %993 = vmatprep.subr.bf16.mxu0 0
        %994 = vmatpush1.bf16.msra.mxu0 0
        %995 = vmatprep.subr.bf16.mxu0 0
        %996 = vmatpush1.bf16.msra.mxu0 0
        %997 = vmatprep.subr.bf16.mxu0 0
        %998 = vmatpush1.bf16.msra.mxu0 0
        %999 = vmatprep.subr.bf16.mxu0 0
        %1000 = vmatpush1.bf16.msra.mxu0 %v984
        %1001 = vmatprep.subr.bf16.mxu0 0
        %1002 = vmatpush1.bf16.msra.mxu0 %v983
        %1003 = vmatprep.subr.bf16.mxu0 0
        %1004 = vmatpush2.bf16.msra.mxu0 0
        %1005 = vmatprep.subr.bf16.mxu0 0
        %1006 = vmatpush2.bf16.msra.mxu0 0
        %1007 = vmatprep.subr.bf16.mxu0 0
        %1008 = vmatpush2.bf16.msra.mxu0 0
        %1009 = vmatprep.subr.bf16.mxu0 0
        %1010 = vmatpush2.bf16.msra.mxu0 0
        %1011 = vmatprep.subr.bf16.mxu0 0
        %1012 = vmatpush2.bf16.msra.mxu0 0
        %1013 = vmatprep.subr.bf16.mxu0 0
        %1014 = vmatpush2.bf16.msra.mxu0 0
        %1015 = vmatprep.subr.bf16.mxu0 0
        %1016 = vmatpush2.bf16.msra.mxu0 0
        %1017 = vmatprep.subr.bf16.mxu0 0
        %1018 = vmatpush2.bf16.msra.mxu0 0
        %1019 = vmatprep.mubr.bf16.mxu0 0
        %1020 = vmatmul.mubr.bf16.gmra.mxu0 %v926
        %v1021 = vpop.f32.mrf.mxu0
        %v1022 = vadd.f32 %v973, %v1021
        %v1023 = vpop.f32.mrf.mxu0
        %v1024 = vpop.f32.mrf.mxu0
        %v1025 = vadd.f32 %v973, %v1024
        %v1026 = vpop.f32.mrf.mxu0
        %1027 = vdwg.mxu0
        %v1028 = vpack.c.bf16 %v902, %v902
        %v1029 = vpack.c.bf16 %v966, %v963
        %v1030 = vpack.c.bf16 %v1025, %v1022
        %vm1031 = vcmask 64512
        %v1033 = vsel %vm1031, %v1028, 0
        %v1036 = vsel %vm1031, %v1029, 0
        %1038 = vmatprep.subr.bf16.mxu0 0
        %1039 = vmatpush1.bf16.xpose.msra.mxu0 0
        %1040 = vmatprep.subr.bf16.mxu0 0
        %1041 = vmatpush1.bf16.xpose.msra.mxu0 0
        %1042 = vmatprep.subr.bf16.mxu0 0
        %1043 = vmatpush1.bf16.xpose.msra.mxu0 0
        %1044 = vmatprep.subr.bf16.mxu0 0
        %1045 = vmatpush1.bf16.xpose.msra.mxu0 0
        %1046 = vmatprep.subr.bf16.mxu0 0
        %1047 = vmatpush1.bf16.xpose.msra.mxu0 0
        %1048 = vmatprep.subr.bf16.mxu0 0
        %1049 = vmatpush1.bf16.xpose.msra.mxu0 0
        %1050 = vmatprep.subr.bf16.mxu0 0
        %1051 = vmatpush1.bf16.xpose.msra.mxu0 0
        %1052 = vmatprep.subr.bf16.mxu0 0
        %1053 = vmatpush1.bf16.xpose.msra.mxu0 %v1036
        %1054 = vmatprep.subr.bf16.mxu0 0
        %1055 = vmatpush2.bf16.xpose.msra.mxu0 0
        %1056 = vmatprep.subr.bf16.mxu0 0
        %1057 = vmatpush2.bf16.xpose.msra.mxu0 0
        %1058 = vmatprep.subr.bf16.mxu0 0
        %1059 = vmatpush2.bf16.xpose.msra.mxu0 0
        %1060 = vmatprep.subr.bf16.mxu0 0
        %1061 = vmatpush2.bf16.xpose.msra.mxu0 0
        %1062 = vmatprep.subr.bf16.mxu0 0
        %1063 = vmatpush2.bf16.xpose.msra.mxu0 0
        %1064 = vmatprep.subr.bf16.mxu0 0
        %1065 = vmatpush2.bf16.xpose.msra.mxu0 0
        %1066 = vmatprep.subr.bf16.mxu0 0
        %1067 = vmatpush2.bf16.xpose.msra.mxu0 0
        %1068 = vmatprep.subr.bf16.mxu0 0
        %1069 = vmatpush2.bf16.xpose.msra.mxu0 0
        %1070 = vmatprep.mubr.bf16.mxu0 0
        %1071 = vmatmul.mubr.bf16.gmra.mxu0 %v1033
        %v1072 = vpop.f32.mrf.mxu0
        %v1073 = vadd.f32 %v841, %v1072
        %v1074 = vpop.f32.mrf.mxu0
        %v1075 = vpop.f32.mrf.mxu0
        %v1076 = vpop.f32.mrf.mxu0
        %1077 = vdwg.mxu0
        %vm1078 = vcmask 130048
        %v1079 = vsel %vm1078, %v1073, -inf
        %1080 = vmax.xlane.f32.xlu0 %v1079
        %v1081 = vpop.xlane.xlu0 %1080
        %v1082 = vsub.f32 %v1073, %v1081
        %v1083 = vmul.f32 %v1082, 1.442695
        %v1084 = vpow.pop %v1083
        %v1085 = vsel %vm1078, %v1084, 0.0
        %1086 = vadd.xlane.f32.xlu0 %v1085
        %v1087 = vpop.xlane.xlu0 %1086
        %v1088 = vrcp.pop %v1087
        %v1089 = vmul.f32 %v1084, %v1088
        %v1090 = vadd.f32 %v1089, 0.0
        %v1091 = vpack.c.bf16 %v1089, %v1089
        %v1093 = vsel %vm1078, %v1091, 0
        %1095 = vmatprep.subr.bf16.mxu0 0
        %1096 = vmatpush1.bf16.msra.mxu0 0
        %1097 = vmatprep.subr.bf16.mxu0 0
        %1098 = vmatpush1.bf16.msra.mxu0 0
        %1099 = vmatprep.subr.bf16.mxu0 0
        %1100 = vmatpush1.bf16.msra.mxu0 0
        %1101 = vmatprep.subr.bf16.mxu0 0
        %1102 = vmatpush1.bf16.msra.mxu0 0
        %1103 = vmatprep.subr.bf16.mxu0 0
        %1104 = vmatpush1.bf16.msra.mxu0 0
        %1105 = vmatprep.subr.bf16.mxu0 0
        %1106 = vmatpush1.bf16.msra.mxu0 0
        %1107 = vmatprep.subr.bf16.mxu0 0
        %1108 = vmatpush1.bf16.msra.mxu0 0
        %1109 = vmatprep.subr.bf16.mxu0 0
        %1110 = vmatpush1.bf16.msra.mxu0 %v1030
        %1111 = vmatprep.subr.bf16.mxu0 0
        %1112 = vmatpush2.bf16.msra.mxu0 0
        %1113 = vmatprep.subr.bf16.mxu0 0
        %1114 = vmatpush2.bf16.msra.mxu0 0
        %1115 = vmatprep.subr.bf16.mxu0 0
        %1116 = vmatpush2.bf16.msra.mxu0 0
        %1117 = vmatprep.subr.bf16.mxu0 0
        %1118 = vmatpush2.bf16.msra.mxu0 0
        %1119 = vmatprep.subr.bf16.mxu0 0
        %1120 = vmatpush2.bf16.msra.mxu0 0
        %1121 = vmatprep.subr.bf16.mxu0 0
        %1122 = vmatpush2.bf16.msra.mxu0 0
        %1123 = vmatprep.subr.bf16.mxu0 0
        %1124 = vmatpush2.bf16.msra.mxu0 0
        %1125 = vmatprep.subr.bf16.mxu0 0
        %1126 = vmatpush2.bf16.msra.mxu0 0
        %1127 = vmatprep.mubr.bf16.mxu0 0
        %1128 = vmatmul.mubr.bf16.gmra.mxu0 %v1093
        %v1129 = vpop.f32.mrf.mxu0
        %v1130 = vadd.f32 0.0, %v1129
        %v1131 = vpop.f32.mrf.mxu0
        %v1132 = vpop.f32.mrf.mxu0
        %v1133 = vpop.f32.mrf.mxu0
        %1134 = vdwg.mxu0
        %1135 = vst.msk [vmem:[#allocation2] sm:$0xff] %vm1031, %v1130
        %1137 = vrot.lane.b32.xlu0 %v1028, 120
        %v1138 = vpop.permute.xlu0 %1137
        %1140 = vrot.lane.b32.xlu0 %v1029, 120
        %v1141 = vpop.permute.xlu0 %1140
        %v1143 = vsel %vm1031, %v1138, 0
        %v1146 = vsel %vm1031, %v1141, 0
        %1148 = vmatprep.subr.bf16.mxu0 0
        %1149 = vmatpush1.bf16.xpose.msra.mxu0 0
        %1150 = vmatprep.subr.bf16.mxu0 0
        %1151 = vmatpush1.bf16.xpose.msra.mxu0 0
        %1152 = vmatprep.subr.bf16.mxu0 0
        %1153 = vmatpush1.bf16.xpose.msra.mxu0 0
        %1154 = vmatprep.subr.bf16.mxu0 0
        %1155 = vmatpush1.bf16.xpose.msra.mxu0 0
        %1156 = vmatprep.subr.bf16.mxu0 0
        %1157 = vmatpush1.bf16.xpose.msra.mxu0 0
        %1158 = vmatprep.subr.bf16.mxu0 0
        %1159 = vmatpush1.bf16.xpose.msra.mxu0 0
        %1160 = vmatprep.subr.bf16.mxu0 0
        %1161 = vmatpush1.bf16.xpose.msra.mxu0 0
        %1162 = vmatprep.subr.bf16.mxu0 0
        %1163 = vmatpush1.bf16.xpose.msra.mxu0 %v1146
        %1164 = vmatprep.subr.bf16.mxu0 0
        %1165 = vmatpush2.bf16.xpose.msra.mxu0 0
        %1166 = vmatprep.subr.bf16.mxu0 0
        %1167 = vmatpush2.bf16.xpose.msra.mxu0 0
        %1168 = vmatprep.subr.bf16.mxu0 0
        %1169 = vmatpush2.bf16.xpose.msra.mxu0 0
        %1170 = vmatprep.subr.bf16.mxu0 0
        %1171 = vmatpush2.bf16.xpose.msra.mxu0 0
        %1172 = vmatprep.subr.bf16.mxu0 0
        %1173 = vmatpush2.bf16.xpose.msra.mxu0 0
        %1174 = vmatprep.subr.bf16.mxu0 0
        %1175 = vmatpush2.bf16.xpose.msra.mxu0 0
        %1176 = vmatprep.subr.bf16.mxu0 0
        %1177 = vmatpush2.bf16.xpose.msra.mxu0 0
        %1178 = vmatprep.subr.bf16.mxu0 0
        %1179 = vmatpush2.bf16.xpose.msra.mxu0 0
        %1180 = vmatprep.mubr.bf16.mxu0 0
        %1181 = vmatmul.mubr.bf16.gmra.mxu0 %v1143
        %v1182 = vpop.f32.mrf.mxu0
        %v1183 = vadd.f32 %v841, %v1182
        %v1184 = vpop.f32.mrf.mxu0
        %v1185 = vpop.f32.mrf.mxu0
        %v1186 = vpop.f32.mrf.mxu0
        %1187 = vdwg.mxu0
        %v1188 = vsel %vm1078, %v1183, -inf
        %1189 = vmax.xlane.f32.xlu0 %v1188
        %v1190 = vpop.xlane.xlu0 %1189
        %v1191 = vsub.f32 %v1183, %v1190
        %v1192 = vmul.f32 %v1191, 1.442695
        %v1193 = vpow.pop %v1192
        %v1194 = vsel %vm1078, %v1193, 0.0
        %1195 = vadd.xlane.f32.xlu0 %v1194
        %v1196 = vpop.xlane.xlu0 %1195
        %v1197 = vrcp.pop %v1196
        %v1198 = vmul.f32 %v1193, %v1197
        %v1199 = vadd.f32 %v1090, %v1198
        %v1200 = vpack.c.bf16 %v1198, %v1198
        %1202 = vrot.lane.b32.xlu0 %v1030, 120
        %v1203 = vpop.permute.xlu0 %1202
        %v1206 = vsel %vm1078, %v1200, 0
        %1208 = vmatprep.subr.bf16.mxu0 0
        %1209 = vmatpush1.bf16.msra.mxu0 0
        %1210 = vmatprep.subr.bf16.mxu0 0
        %1211 = vmatpush1.bf16.msra.mxu0 0
        %1212 = vmatprep.subr.bf16.mxu0 0
        %1213 = vmatpush1.bf16.msra.mxu0 0
        %1214 = vmatprep.subr.bf16.mxu0 0
        %1215 = vmatpush1.bf16.msra.mxu0 0
        %1216 = vmatprep.subr.bf16.mxu0 0
        %1217 = vmatpush1.bf16.msra.mxu0 0
        %1218 = vmatprep.subr.bf16.mxu0 0
        %1219 = vmatpush1.bf16.msra.mxu0 0
        %1220 = vmatprep.subr.bf16.mxu0 0
        %1221 = vmatpush1.bf16.msra.mxu0 0
        %1222 = vmatprep.subr.bf16.mxu0 0
        %1223 = vmatpush1.bf16.msra.mxu0 %v1203
        %1224 = vmatprep.subr.bf16.mxu0 0
        %1225 = vmatpush2.bf16.msra.mxu0 0
        %1226 = vmatprep.subr.bf16.mxu0 0
        %1227 = vmatpush2.bf16.msra.mxu0 0
        %1228 = vmatprep.subr.bf16.mxu0 0
        %1229 = vmatpush2.bf16.msra.mxu0 0
        %1230 = vmatprep.subr.bf16.mxu0 0
        %1231 = vmatpush2.bf16.msra.mxu0 0
        %1232 = vmatprep.subr.bf16.mxu0 0
        %1233 = vmatpush2.bf16.msra.mxu0 0
        %1234 = vmatprep.subr.bf16.mxu0 0
        %1235 = vmatpush2.bf16.msra.mxu0 0
        %1236 = vmatprep.subr.bf16.mxu0 0
        %1237 = vmatpush2.bf16.msra.mxu0 0
        %1238 = vmatprep.subr.bf16.mxu0 0
        %1239 = vmatpush2.bf16.msra.mxu0 0
        %1240 = vmatprep.mubr.bf16.mxu0 0
        %1241 = vmatmul.mubr.bf16.gmra.mxu0 %v1206
        %v1242 = vpop.f32.mrf.mxu0
        %v1243 = vadd.f32 0.0, %v1242
        %v1244 = vpop.f32.mrf.mxu0
        %v1245 = vpop.f32.mrf.mxu0
        %v1246 = vpop.f32.mrf.mxu0
        %1247 = vdwg.mxu0
        %1249 = vrot.lane.b32.xlu0 %v1243, 8
        %v1250 = vpop.permute.xlu0 %1249
        %vm1252 = vcmask 130112
        %1253 = vst.msk [vmem:[#allocation2] sm:$0xff] %vm1252, %v1250
        %1254 = vrot.lane.b32.xlu0 %v1028, 112
        %v1255 = vpop.permute.xlu0 %1254
        %1256 = vrot.lane.b32.xlu0 %v1029, 112
        %v1257 = vpop.permute.xlu0 %1256
        %v1259 = vsel %vm1031, %v1255, 0
        %v1262 = vsel %vm1031, %v1257, 0
        %1264 = vmatprep.subr.bf16.mxu0 0
        %1265 = vmatpush1.bf16.xpose.msra.mxu0 0
        %1266 = vmatprep.subr.bf16.mxu0 0
        %1267 = vmatpush1.bf16.xpose.msra.mxu0 0
        %1268 = vmatprep.subr.bf16.mxu0 0
        %1269 = vmatpush1.bf16.xpose.msra.mxu0 0
        %1270 = vmatprep.subr.bf16.mxu0 0
        %1271 = vmatpush1.bf16.xpose.msra.mxu0 0
        %1272 = vmatprep.subr.bf16.mxu0 0
        %1273 = vmatpush1.bf16.xpose.msra.mxu0 0
        %1274 = vmatprep.subr.bf16.mxu0 0
        %1275 = vmatpush1.bf16.xpose.msra.mxu0 0
        %1276 = vmatprep.subr.bf16.mxu0 0
        %1277 = vmatpush1.bf16.xpose.msra.mxu0 0
        %1278 = vmatprep.subr.bf16.mxu0 0
        %1279 = vmatpush1.bf16.xpose.msra.mxu0 %v1262
        %1280 = vmatprep.subr.bf16.mxu0 0
        %1281 = vmatpush2.bf16.xpose.msra.mxu0 0
        %1282 = vmatprep.subr.bf16.mxu0 0
        %1283 = vmatpush2.bf16.xpose.msra.mxu0 0
        %1284 = vmatprep.subr.bf16.mxu0 0
        %1285 = vmatpush2.bf16.xpose.msra.mxu0 0
        %1286 = vmatprep.subr.bf16.mxu0 0
        %1287 = vmatpush2.bf16.xpose.msra.mxu0 0
        %1288 = vmatprep.subr.bf16.mxu0 0
        %1289 = vmatpush2.bf16.xpose.msra.mxu0 0
        %1290 = vmatprep.subr.bf16.mxu0 0
        %1291 = vmatpush2.bf16.xpose.msra.mxu0 0
        %1292 = vmatprep.subr.bf16.mxu0 0
        %1293 = vmatpush2.bf16.xpose.msra.mxu0 0
        %1294 = vmatprep.subr.bf16.mxu0 0
        %1295 = vmatpush2.bf16.xpose.msra.mxu0 0
        %1296 = vmatprep.mubr.bf16.mxu0 0
        %1297 = vmatmul.mubr.bf16.gmra.mxu0 %v1259
        %v1298 = vpop.f32.mrf.mxu0
        %v1299 = vadd.f32 %v841, %v1298
        %v1300 = vpop.f32.mrf.mxu0
        %v1301 = vpop.f32.mrf.mxu0
        %v1302 = vpop.f32.mrf.mxu0
        %1303 = vdwg.mxu0
        %v1304 = vsel %vm1078, %v1299, -inf
        %1305 = vmax.xlane.f32.xlu0 %v1304
        %v1306 = vpop.xlane.xlu0 %1305
        %v1307 = vsub.f32 %v1299, %v1306
        %v1308 = vmul.f32 %v1307, 1.442695
        %v1309 = vpow.pop %v1308
        %v1310 = vsel %vm1078, %v1309, 0.0
        %1311 = vadd.xlane.f32.xlu0 %v1310
        %v1312 = vpop.xlane.xlu0 %1311
        %v1313 = vrcp.pop %v1312
        %v1314 = vmul.f32 %v1309, %v1313
        %v1315 = vadd.f32 %v1199, %v1314
        %v1316 = vpack.c.bf16 %v1314, %v1314
        %1317 = vrot.lane.b32.xlu0 %v1030, 112
        %v1318 = vpop.permute.xlu0 %1317
        %v1321 = vsel %vm1078, %v1316, 0
        %1323 = vmatprep.subr.bf16.mxu0 0
        %1324 = vmatpush1.bf16.msra.mxu0 0
        %1325 = vmatprep.subr.bf16.mxu0 0
        %1326 = vmatpush1.bf16.msra.mxu0 0
        %1327 = vmatprep.subr.bf16.mxu0 0
        %1328 = vmatpush1.bf16.msra.mxu0 0
        %1329 = vmatprep.subr.bf16.mxu0 0
        %1330 = vmatpush1.bf16.msra.mxu0 0
        %1331 = vmatprep.subr.bf16.mxu0 0
        %1332 = vmatpush1.bf16.msra.mxu0 0
        %1333 = vmatprep.subr.bf16.mxu0 0
        %1334 = vmatpush1.bf16.msra.mxu0 0
        %1335 = vmatprep.subr.bf16.mxu0 0
        %1336 = vmatpush1.bf16.msra.mxu0 0
        %1337 = vmatprep.subr.bf16.mxu0 0
        %1338 = vmatpush1.bf16.msra.mxu0 %v1318
        %1339 = vmatprep.subr.bf16.mxu0 0
        %1340 = vmatpush2.bf16.msra.mxu0 0
        %1341 = vmatprep.subr.bf16.mxu0 0
        %1342 = vmatpush2.bf16.msra.mxu0 0
        %1343 = vmatprep.subr.bf16.mxu0 0
        %1344 = vmatpush2.bf16.msra.mxu0 0
        %1345 = vmatprep.subr.bf16.mxu0 0
        %1346 = vmatpush2.bf16.msra.mxu0 0
        %1347 = vmatprep.subr.bf16.mxu0 0
        %1348 = vmatpush2.bf16.msra.mxu0 0
        %1349 = vmatprep.subr.bf16.mxu0 0
        %1350 = vmatpush2.bf16.msra.mxu0 0
        %1351 = vmatprep.subr.bf16.mxu0 0
        %1352 = vmatpush2.bf16.msra.mxu0 0
        %1353 = vmatprep.subr.bf16.mxu0 0
        %1354 = vmatpush2.bf16.msra.mxu0 0
        %1355 = vmatprep.mubr.bf16.mxu0 0
        %1356 = vmatmul.mubr.bf16.gmra.mxu0 %v1321
        %v1357 = vpop.f32.mrf.mxu0
        %v1358 = vadd.f32 0.0, %v1357
        %v1359 = vpop.f32.mrf.mxu0
        %v1360 = vpop.f32.mrf.mxu0
        %v1361 = vpop.f32.mrf.mxu0
        %1362 = vdwg.mxu0
        %1364 = vrot.lane.b32.xlu0 %v1358, 16
        %v1365 = vpop.permute.xlu0 %1364
        %vm1367 = vcmask 195712
        %1368 = vst.msk [vmem:[#allocation2] sm:$0xff] %vm1367, %v1365
        %1369 = vrot.lane.b32.xlu0 %v1028, 104
        %v1370 = vpop.permute.xlu0 %1369
        %1371 = vrot.lane.b32.xlu0 %v1029, 104
        %v1372 = vpop.permute.xlu0 %1371
        %v1374 = vsel %vm1031, %v1370, 0
        %v1377 = vsel %vm1031, %v1372, 0
        %1379 = vmatprep.subr.bf16.mxu0 0
        %1380 = vmatpush1.bf16.xpose.msra.mxu0 0
        %1381 = vmatprep.subr.bf16.mxu0 0
        %1382 = vmatpush1.bf16.xpose.msra.mxu0 0
        %1383 = vmatprep.subr.bf16.mxu0 0
        %1384 = vmatpush1.bf16.xpose.msra.mxu0 0
        %1385 = vmatprep.subr.bf16.mxu0 0
        %1386 = vmatpush1.bf16.xpose.msra.mxu0 0
        %1387 = vmatprep.subr.bf16.mxu0 0
        %1388 = vmatpush1.bf16.xpose.msra.mxu0 0
        %1389 = vmatprep.subr.bf16.mxu0 0
        %1390 = vmatpush1.bf16.xpose.msra.mxu0 0
        %1391 = vmatprep.subr.bf16.mxu0 0
        %1392 = vmatpush1.bf16.xpose.msra.mxu0 0
        %1393 = vmatprep.subr.bf16.mxu0 0
        %1394 = vmatpush1.bf16.xpose.msra.mxu0 %v1377
        %1395 = vmatprep.subr.bf16.mxu0 0
        %1396 = vmatpush2.bf16.xpose.msra.mxu0 0
        %1397 = vmatprep.subr.bf16.mxu0 0
        %1398 = vmatpush2.bf16.xpose.msra.mxu0 0
        %1399 = vmatprep.subr.bf16.mxu0 0
        %1400 = vmatpush2.bf16.xpose.msra.mxu0 0
        %1401 = vmatprep.subr.bf16.mxu0 0
        %1402 = vmatpush2.bf16.xpose.msra.mxu0 0
        %1403 = vmatprep.subr.bf16.mxu0 0
        %1404 = vmatpush2.bf16.xpose.msra.mxu0 0
        %1405 = vmatprep.subr.bf16.mxu0 0
        %1406 = vmatpush2.bf16.xpose.msra.mxu0 0
        %1407 = vmatprep.subr.bf16.mxu0 0
        %1408 = vmatpush2.bf16.xpose.msra.mxu0 0
        %1409 = vmatprep.subr.bf16.mxu0 0
        %1410 = vmatpush2.bf16.xpose.msra.mxu0 0
        %1411 = vmatprep.mubr.bf16.mxu0 0
        %1412 = vmatmul.mubr.bf16.gmra.mxu0 %v1374
        %v1413 = vpop.f32.mrf.mxu0
        %v1414 = vadd.f32 %v841, %v1413
        %v1415 = vpop.f32.mrf.mxu0
        %v1416 = vpop.f32.mrf.mxu0
        %v1417 = vpop.f32.mrf.mxu0
        %1418 = vdwg.mxu0
        %v1419 = vsel %vm1078, %v1414, -inf
        %1420 = vmax.xlane.f32.xlu0 %v1419
        %v1421 = vpop.xlane.xlu0 %1420
        %v1422 = vsub.f32 %v1414, %v1421
        %v1423 = vmul.f32 %v1422, 1.442695
        %v1424 = vpow.pop %v1423
        %v1425 = vsel %vm1078, %v1424, 0.0
        %1426 = vadd.xlane.f32.xlu0 %v1425
        %v1427 = vpop.xlane.xlu0 %1426
        %v1428 = vrcp.pop %v1427
        %v1429 = vmul.f32 %v1424, %v1428
        %v1430 = vadd.f32 %v1315, %v1429
        %v1431 = vpack.c.bf16 %v1429, %v1429
        %1432 = vrot.lane.b32.xlu0 %v1030, 104
        %v1433 = vpop.permute.xlu0 %1432
        %v1436 = vsel %vm1078, %v1431, 0
        %1438 = vmatprep.subr.bf16.mxu0 0
        %1439 = vmatpush1.bf16.msra.mxu0 0
        %1440 = vmatprep.subr.bf16.mxu0 0
        %1441 = vmatpush1.bf16.msra.mxu0 0
        %1442 = vmatprep.subr.bf16.mxu0 0
        %1443 = vmatpush1.bf16.msra.mxu0 0
        %1444 = vmatprep.subr.bf16.mxu0 0
        %1445 = vmatpush1.bf16.msra.mxu0 0
        %1446 = vmatprep.subr.bf16.mxu0 0
        %1447 = vmatpush1.bf16.msra.mxu0 0
        %1448 = vmatprep.subr.bf16.mxu0 0
        %1449 = vmatpush1.bf16.msra.mxu0 0
        %1450 = vmatprep.subr.bf16.mxu0 0
        %1451 = vmatpush1.bf16.msra.mxu0 0
        %1452 = vmatprep.subr.bf16.mxu0 0
        %1453 = vmatpush1.bf16.msra.mxu0 %v1433
        %1454 = vmatprep.subr.bf16.mxu0 0
        %1455 = vmatpush2.bf16.msra.mxu0 0
        %1456 = vmatprep.subr.bf16.mxu0 0
        %1457 = vmatpush2.bf16.msra.mxu0 0
        %1458 = vmatprep.subr.bf16.mxu0 0
        %1459 = vmatpush2.bf16.msra.mxu0 0
        %1460 = vmatprep.subr.bf16.mxu0 0
        %1461 = vmatpush2.bf16.msra.mxu0 0
        %1462 = vmatprep.subr.bf16.mxu0 0
        %1463 = vmatpush2.bf16.msra.mxu0 0
        %1464 = vmatprep.subr.bf16.mxu0 0
        %1465 = vmatpush2.bf16.msra.mxu0 0
        %1466 = vmatprep.subr.bf16.mxu0 0
        %1467 = vmatpush2.bf16.msra.mxu0 0
        %1468 = vmatprep.subr.bf16.mxu0 0
        %1469 = vmatpush2.bf16.msra.mxu0 0
        %1470 = vmatprep.mubr.bf16.mxu0 0
        %1471 = vmatmul.mubr.bf16.gmra.mxu0 %v1436
        %v1472 = vpop.f32.mrf.mxu0
        %v1473 = vadd.f32 0.0, %v1472
        %v1474 = vpop.f32.mrf.mxu0
        %v1475 = vpop.f32.mrf.mxu0
        %v1476 = vpop.f32.mrf.mxu0
        %1477 = vdwg.mxu0
        %1479 = vrot.lane.b32.xlu0 %v1473, 24
        %v1480 = vpop.permute.xlu0 %1479
        %vm1482 = vcmask 261312
        %1483 = vst.msk [vmem:[#allocation2] sm:$0xff] %vm1482, %v1480
        %v1484 = vmul.f32 %v1430, 0.25
        %1485 = vst.msk [vmem:[%s774] sm:$0xff] %vm1078, %v1484
        %v1486 = vld [vmem:[#allocation2] sm:$0xff]
        %v1487 = vpack.c.bf16 %v1486, %v1486
        %v1489 = vlaneseq
        %v1490 = vshrl.u32 %v1489, 7
        %v1491 = vsub.s32 0, %v1490
        %v1492 = vrot.slane %v806, %v1491
        %v1498 = vunpack.c.l.b16 %v799
        %v1499 = vunpack.c.l.b16 %v800
        %v1500 = vunpack.c.l.b16 %v801
        %v1501 = vunpack.c.l.b16 %v802
        %v1502 = vpack.c.b16 %v1499, %v1498
        %v1503 = vpack.c.b16 %v1501, %v1500
        %v1507 = vsel %vm863, %v1487, 0
        %1509 = vmatprep.subr.bf16.mxu0 0
        %1510 = vmatpush1.bf16.msra.mxu0 0
        %1511 = vmatprep.subr.bf16.mxu0 0
        %1512 = vmatpush1.bf16.msra.mxu0 0
        %1513 = vmatprep.subr.bf16.mxu0 0
        %1514 = vmatpush1.bf16.msra.mxu0 0
        %1515 = vmatprep.subr.bf16.mxu0 0
        %1516 = vmatpush1.bf16.msra.mxu0 0
        %1517 = vmatprep.subr.bf16.mxu0 0
        %1518 = vmatpush1.bf16.msra.mxu0 0
        %1519 = vmatprep.subr.bf16.mxu0 0
        %1520 = vmatpush1.bf16.msra.mxu0 0
        %1521 = vmatprep.subr.bf16.mxu0 0
        %1522 = vmatpush1.bf16.msra.mxu0 %v1503
        %1523 = vmatprep.subr.bf16.mxu0 0
        %1524 = vmatpush1.bf16.msra.mxu0 %v1502
        %1525 = vmatprep.subr.bf16.mxu0 0
        %1526 = vmatpush2.bf16.msra.mxu0 0
        %1527 = vmatprep.subr.bf16.mxu0 0
        %1528 = vmatpush2.bf16.msra.mxu0 0
        %1529 = vmatprep.subr.bf16.mxu0 0
        %1530 = vmatpush2.bf16.msra.mxu0 0
        %1531 = vmatprep.subr.bf16.mxu0 0
        %1532 = vmatpush2.bf16.msra.mxu0 0
        %1533 = vmatprep.subr.bf16.mxu0 0
        %1534 = vmatpush2.bf16.msra.mxu0 0
        %1535 = vmatprep.subr.bf16.mxu0 0
        %1536 = vmatpush2.bf16.msra.mxu0 0
        %1537 = vmatprep.subr.bf16.mxu0 0
        %1538 = vmatpush2.bf16.msra.mxu0 0
        %1539 = vmatprep.subr.bf16.mxu0 0
        %1540 = vmatpush2.bf16.msra.mxu0 0
        %1541 = vmatprep.mubr.bf16.mxu0 0
        %1542 = vmatmul.mubr.bf16.gmra.mxu0 %v1507
        %v1543 = vpop.f32.mrf.mxu0
        %v1544 = vadd.f32 %v1492, %v1543
        %v1545 = vpop.f32.mrf.mxu0
        %v1546 = vpop.f32.mrf.mxu0
        %v1547 = vpop.f32.mrf.mxu0
        %1548 = vdwg.mxu0
        %v1549 = vadd.f32 %v1544, %v833
        %v1550 = vsel %vm863, %v1549, 0.0
        %1551 = vadd.xlane.f32.xlu0 %v1550
        %v1552 = vpop.xlane.xlu0 %1551
        %v1553 = vrcp.pop 32.0
        %v1554 = vmul.f32 %v1552, %v1553
        %v1555 = vsub.f32 %v1549, %v1554
        %v1556 = vmul.f32 %v1555, %v1555
        %v1557 = vsel %vm863, %v1556, 0.0
        %1558 = vadd.xlane.f32.xlu0 %v1557
        %v1559 = vpop.xlane.xlu0 %1558
        %v1560 = vmul.f32 %v1559, %v1553
        %v1561 = vadd.f32 %v1560, 1e-05
        %v1562 = vrsqrt.pop %v1561
        %v1563 = vmul.f32 %v1555, %v1562
        %v1565 = vlaneseq
        %v1566 = vshrl.u32 %v1565, 7
        %v1567 = vsub.s32 0, %v1566
        %v1568 = vrot.slane %v829, %v1567
        %v1570 = vmul.f32 %v1563, %v1568
        %v1572 = vlaneseq
        %v1573 = vshrl.u32 %v1572, 7
        %v1574 = vsub.s32 0, %v1573
        %v1575 = vrot.slane %v830, %v1574
        %v1577 = vadd.f32 %v1570, %v1575
        %v1578 = vpack.c.bf16 %v1577, %v1577
        %v1580 = vlaneseq
        %v1581 = vshrl.u32 %v1580, 7
        %v1582 = vsub.s32 0, %v1581
        %v1583 = vrot.slane %v811, %v1582
        %v1589 = vunpack.c.l.b16 %v807
        %v1590 = vunpack.c.l.b16 %v808
        %v1591 = vunpack.c.l.b16 %v809
        %v1592 = vunpack.c.l.b16 %v810
        %v1593 = vpack.c.b16 %v1590, %v1589
        %v1594 = vpack.c.b16 %v1592, %v1591
        %v1598 = vsel %vm863, %v1578, 0
        %1600 = vmatprep.subr.bf16.mxu0 0
        %1601 = vmatpush1.bf16.msra.mxu0 0
        %1602 = vmatprep.subr.bf16.mxu0 0
        %1603 = vmatpush1.bf16.msra.mxu0 0
        %1604 = vmatprep.subr.bf16.mxu0 0
        %1605 = vmatpush1.bf16.msra.mxu0 0
        %1606 = vmatprep.subr.bf16.mxu0 0
        %1607 = vmatpush1.bf16.msra.mxu0 0
        %1608 = vmatprep.subr.bf16.mxu0 0
        %1609 = vmatpush1.bf16.msra.mxu0 0
        %1610 = vmatprep.subr.bf16.mxu0 0
        %1611 = vmatpush1.bf16.msra.mxu0 0
        %1612 = vmatprep.subr.bf16.mxu0 0
        %1613 = vmatpush1.bf16.msra.mxu0 %v1594
        %1614 = vmatprep.subr.bf16.mxu0 0
        %1615 = vmatpush1.bf16.msra.mxu0 %v1593
        %1616 = vmatprep.subr.bf16.mxu0 0
        %1617 = vmatpush2.bf16.msra.mxu0 0
        %1618 = vmatprep.subr.bf16.mxu0 0
        %1619 = vmatpush2.bf16.msra.mxu0 0
        %1620 = vmatprep.subr.bf16.mxu0 0
        %1621 = vmatpush2.bf16.msra.mxu0 0
        %1622 = vmatprep.subr.bf16.mxu0 0
        %1623 = vmatpush2.bf16.msra.mxu0 0
        %1624 = vmatprep.subr.bf16.mxu0 0
        %1625 = vmatpush2.bf16.msra.mxu0 0
        %1626 = vmatprep.subr.bf16.mxu0 0
        %1627 = vmatpush2.bf16.msra.mxu0 0
        %1628 = vmatprep.subr.bf16.mxu0 0
        %1629 = vmatpush2.bf16.msra.mxu0 0
        %1630 = vmatprep.subr.bf16.mxu0 0
        %1631 = vmatpush2.bf16.msra.mxu0 0
        %1632 = vmatprep.mubr.bf16.mxu0 0
        %1633 = vmatmul.mubr.bf16.gmra.mxu0 %v1598
        %v1634 = vpop.f32.mrf.mxu0
        %v1635 = vadd.f32 %v1583, %v1634
        %v1636 = vpop.f32.mrf.mxu0
        %v1637 = vpop.f32.mrf.mxu0
        %v1638 = vpop.f32.mrf.mxu0
        %1639 = vdwg.mxu0
        %v1640 = vmax.f32 %v1635, 0.0
        %v1641 = vpack.c.bf16 %v1640, %v1640
        %v1643 = vlaneseq
        %v1644 = vshrl.u32 %v1643, 7
        %v1645 = vsub.s32 0, %v1644
        %v1646 = vrot.slane %v828, %v1645
        %v1664 = vunpack.c.l.b16 %v812
        %v1665 = vunpack.c.l.b16 %v813
        %v1666 = vunpack.c.l.b16 %v814
        %v1667 = vunpack.c.l.b16 %v815
        %v1668 = vunpack.c.l.b16 %v816
        %v1669 = vunpack.c.l.b16 %v817
        %v1670 = vunpack.c.l.b16 %v818
        %v1671 = vunpack.c.l.b16 %v819
        %v1672 = vunpack.c.l.b16 %v820
        %v1673 = vunpack.c.l.b16 %v821
        %v1674 = vunpack.c.l.b16 %v822
        %v1675 = vunpack.c.l.b16 %v823
        %v1676 = vunpack.c.l.b16 %v824
        %v1677 = vunpack.c.l.b16 %v825
        %v1678 = vunpack.c.l.b16 %v826
        %v1679 = vunpack.c.l.b16 %v827
        %v1680 = vpack.c.b16 %v1665, %v1664
        %v1681 = vpack.c.b16 %v1667, %v1666
        %v1682 = vpack.c.b16 %v1669, %v1668
        %v1683 = vpack.c.b16 %v1671, %v1670
        %v1684 = vpack.c.b16 %v1673, %v1672
        %v1685 = vpack.c.b16 %v1675, %v1674
        %v1686 = vpack.c.b16 %v1677, %v1676
        %v1687 = vpack.c.b16 %v1679, %v1678
        %1696 = vmatprep.subr.bf16.mxu0 0
        %1697 = vmatpush1.bf16.msra.mxu0 %v1687
        %1698 = vmatprep.subr.bf16.mxu0 0
        %1699 = vmatpush1.bf16.msra.mxu0 %v1686
        %1700 = vmatprep.subr.bf16.mxu0 0
        %1701 = vmatpush1.bf16.msra.mxu0 %v1685
        %1702 = vmatprep.subr.bf16.mxu0 0
        %1703 = vmatpush1.bf16.msra.mxu0 %v1684
        %1704 = vmatprep.subr.bf16.mxu0 0
        %1705 = vmatpush1.bf16.msra.mxu0 %v1683
        %1706 = vmatprep.subr.bf16.mxu0 0
        %1707 = vmatpush1.bf16.msra.mxu0 %v1682
        %1708 = vmatprep.subr.bf16.mxu0 0
        %1709 = vmatpush1.bf16.msra.mxu0 %v1681
        %1710 = vmatprep.subr.bf16.mxu0 0
        %1711 = vmatpush1.bf16.msra.mxu0 %v1680
        %1712 = vmatprep.subr.bf16.mxu0 0
        %1713 = vmatpush2.bf16.msra.mxu0 0
        %1714 = vmatprep.subr.bf16.mxu0 0
        %1715 = vmatpush2.bf16.msra.mxu0 0
        %1716 = vmatprep.subr.bf16.mxu0 0
        %1717 = vmatpush2.bf16.msra.mxu0 0
        %1718 = vmatprep.subr.bf16.mxu0 0
        %1719 = vmatpush2.bf16.msra.mxu0 0
        %1720 = vmatprep.subr.bf16.mxu0 0
        %1721 = vmatpush2.bf16.msra.mxu0 0
        %1722 = vmatprep.subr.bf16.mxu0 0
        %1723 = vmatpush2.bf16.msra.mxu0 0
        %1724 = vmatprep.subr.bf16.mxu0 0
        %1725 = vmatpush2.bf16.msra.mxu0 0
        %1726 = vmatprep.subr.bf16.mxu0 0
        %1727 = vmatpush2.bf16.msra.mxu0 0
        %1728 = vmatprep.mubr.bf16.mxu0 0
        %1729 = vmatmul.mubr.bf16.gmra.mxu0 %v1641
        %v1730 = vpop.f32.mrf.mxu0
        %v1731 = vadd.f32 %v1646, %v1730
        %v1732 = vpop.f32.mrf.mxu0
        %v1733 = vpop.f32.mrf.mxu0
        %v1734 = vpop.f32.mrf.mxu0
        %1735 = vdwg.mxu0
        %v1736 = vadd.f32 %v1731, %v1577
        %v1737 = vsel %vm863, %v1736, 0.0
        %1738 = vadd.xlane.f32.xlu0 %v1737
        %v1739 = vpop.xlane.xlu0 %1738
        %v1740 = vmul.f32 %v1739, %v1553
        %v1741 = vsub.f32 %v1736, %v1740
        %v1742 = vmul.f32 %v1741, %v1741
        %v1743 = vsel %vm863, %v1742, 0.0
        %1744 = vadd.xlane.f32.xlu0 %v1743
        %v1745 = vpop.xlane.xlu0 %1744
        %v1746 = vmul.f32 %v1745, %v1553
        %v1747 = vadd.f32 %v1746, 1e-05
        %v1748 = vrsqrt.pop %v1747
        %v1749 = vmul.f32 %v1741, %v1748
        %v1751 = vlaneseq
        %v1752 = vshrl.u32 %v1751, 7
        %v1753 = vsub.s32 0, %v1752
        %v1754 = vrot.slane %v831, %v1753
        %v1756 = vmul.f32 %v1749, %v1754
        %v1758 = vlaneseq
        %v1759 = vshrl.u32 %v1758, 7
        %v1760 = vsub.s32 0, %v1759
        %v1761 = vrot.slane %v832, %v1760
        %v1763 = vadd.f32 %v1756, %v1761
        %1764 = vst.msk [vmem:[%s767] sm:$0xff] %vm863, %v1763
        %s1765 = scalar_lea.vmem %s677, 8 [#allocation3]
        %v1766 = vld [vmem:[%s1765] sm:$0xff]
        %s1767 = scalar_lea.vmem %s781, 16
        %v1768 = vld [vmem:[%s1767] sm:$0xff]
        %v1769 = vld [vmem:[%s1767 + $0x8] sm:$0xff]
        %s1770 = scalar_lea.vmem %s686, 1 [#allocation6]
        %v1771 = vld [vmem:[%s1770] sm:$0x1]
        %v1773 = vlaneseq
        %v1774 = vshrl.u32 %v1773, 7
        %v1775 = vsub.s32 0, %v1774
        %v1776 = vrot.slane %v1771, %v1775
        %v1778 = vpack.c.bf16 %v1766, %v1766
        %v1779 = vpack.c.bf16 %v1769, %v1768
        %v1781 = vsel %vm863, %v1778, 0
        %1783 = vmatprep.subr.bf16.mxu0 0
        %1784 = vmatpush1.bf16.msra.mxu0 0
        %1785 = vmatprep.subr.bf16.mxu0 0
        %1786 = vmatpush1.bf16.msra.mxu0 0
        %1787 = vmatprep.subr.bf16.mxu0 0
        %1788 = vmatpush1.bf16.msra.mxu0 0
        %1789 = vmatprep.subr.bf16.mxu0 0
        %1790 = vmatpush1.bf16.msra.mxu0 0
        %1791 = vmatprep.subr.bf16.mxu0 0
        %1792 = vmatpush1.bf16.msra.mxu0 0
        %1793 = vmatprep.subr.bf16.mxu0 0
        %1794 = vmatpush1.bf16.msra.mxu0 0
        %1795 = vmatprep.subr.bf16.mxu0 0
        %1796 = vmatpush1.bf16.msra.mxu0 %v860
        %1797 = vmatprep.subr.bf16.mxu0 0
        %1798 = vmatpush1.bf16.msra.mxu0 %v859
        %1799 = vmatprep.subr.bf16.mxu0 0
        %1800 = vmatpush2.bf16.msra.mxu0 0
        %1801 = vmatprep.subr.bf16.mxu0 0
        %1802 = vmatpush2.bf16.msra.mxu0 0
        %1803 = vmatprep.subr.bf16.mxu0 0
        %1804 = vmatpush2.bf16.msra.mxu0 0
        %1805 = vmatprep.subr.bf16.mxu0 0
        %1806 = vmatpush2.bf16.msra.mxu0 0
        %1807 = vmatprep.subr.bf16.mxu0 0
        %1808 = vmatpush2.bf16.msra.mxu0 0
        %1809 = vmatprep.subr.bf16.mxu0 0
        %1810 = vmatpush2.bf16.msra.mxu0 0
        %1811 = vmatprep.subr.bf16.mxu0 0
        %1812 = vmatpush2.bf16.msra.mxu0 0
        %1813 = vmatprep.subr.bf16.mxu0 0
        %1814 = vmatpush2.bf16.msra.mxu0 0
        %1815 = vmatprep.mubr.bf16.mxu0 0
        %1816 = vmatmul.mubr.bf16.gmra.mxu0 %v1781
        %v1817 = vpop.f32.mrf.mxu0
        %v1818 = vadd.f32 %v849, %v1817
        %v1819 = vpop.f32.mrf.mxu0
        %v1820 = vpop.f32.mrf.mxu0
        %v1821 = vpop.f32.mrf.mxu0
        %1822 = vdwg.mxu0
        %v1824 = vsel %vm863, %v1779, 0
        %1826 = vmatprep.subr.bf16.mxu0 0
        %1827 = vmatpush1.bf16.msra.mxu0 0
        %1828 = vmatprep.subr.bf16.mxu0 0
        %1829 = vmatpush1.bf16.msra.mxu0 0
        %1830 = vmatprep.subr.bf16.mxu0 0
        %1831 = vmatpush1.bf16.msra.mxu0 0
        %1832 = vmatprep.subr.bf16.mxu0 0
        %1833 = vmatpush1.bf16.msra.mxu0 0
        %1834 = vmatprep.subr.bf16.mxu0 0
        %1835 = vmatpush1.bf16.msra.mxu0 0
        %1836 = vmatprep.subr.bf16.mxu0 0
        %1837 = vmatpush1.bf16.msra.mxu0 0
        %1838 = vmatprep.subr.bf16.mxu0 0
        %1839 = vmatpush1.bf16.msra.mxu0 %v922
        %1840 = vmatprep.subr.bf16.mxu0 0
        %1841 = vmatpush1.bf16.msra.mxu0 %v921
        %1842 = vmatprep.subr.bf16.mxu0 0
        %1843 = vmatpush2.bf16.msra.mxu0 0
        %1844 = vmatprep.subr.bf16.mxu0 0
        %1845 = vmatpush2.bf16.msra.mxu0 0
        %1846 = vmatprep.subr.bf16.mxu0 0
        %1847 = vmatpush2.bf16.msra.mxu0 0
        %1848 = vmatprep.subr.bf16.mxu0 0
        %1849 = vmatpush2.bf16.msra.mxu0 0
        %1850 = vmatprep.subr.bf16.mxu0 0
        %1851 = vmatpush2.bf16.msra.mxu0 0
        %1852 = vmatprep.subr.bf16.mxu0 0
        %1853 = vmatpush2.bf16.msra.mxu0 0
        %1854 = vmatprep.subr.bf16.mxu0 0
        %1855 = vmatpush2.bf16.msra.mxu0 0
        %1856 = vmatprep.subr.bf16.mxu0 0
        %1857 = vmatpush2.bf16.msra.mxu0 0
        %1858 = vmatprep.mubr.bf16.mxu0 0
        %1859 = vmatmul.mubr.bf16.gmra.mxu0 %v1824
        %v1860 = vpop.f32.mrf.mxu0
        %v1861 = vadd.f32 %v911, %v1860
        %v1862 = vpop.f32.mrf.mxu0
        %v1863 = vpop.f32.mrf.mxu0
        %v1864 = vadd.f32 %v911, %v1863
        %v1865 = vpop.f32.mrf.mxu0
        %1866 = vdwg.mxu0
        %1867 = vmatprep.subr.bf16.mxu0 0
        %1868 = vmatpush1.bf16.msra.mxu0 0
        %1869 = vmatprep.subr.bf16.mxu0 0
        %1870 = vmatpush1.bf16.msra.mxu0 0
        %1871 = vmatprep.subr.bf16.mxu0 0
        %1872 = vmatpush1.bf16.msra.mxu0 0
        %1873 = vmatprep.subr.bf16.mxu0 0
        %1874 = vmatpush1.bf16.msra.mxu0 0
        %1875 = vmatprep.subr.bf16.mxu0 0
        %1876 = vmatpush1.bf16.msra.mxu0 0
        %1877 = vmatprep.subr.bf16.mxu0 0
        %1878 = vmatpush1.bf16.msra.mxu0 0
        %1879 = vmatprep.subr.bf16.mxu0 0
        %1880 = vmatpush1.bf16.msra.mxu0 %v984
        %1881 = vmatprep.subr.bf16.mxu0 0
        %1882 = vmatpush1.bf16.msra.mxu0 %v983
        %1883 = vmatprep.subr.bf16.mxu0 0
        %1884 = vmatpush2.bf16.msra.mxu0 0
        %1885 = vmatprep.subr.bf16.mxu0 0
        %1886 = vmatpush2.bf16.msra.mxu0 0
        %1887 = vmatprep.subr.bf16.mxu0 0
        %1888 = vmatpush2.bf16.msra.mxu0 0
        %1889 = vmatprep.subr.bf16.mxu0 0
        %1890 = vmatpush2.bf16.msra.mxu0 0
        %1891 = vmatprep.subr.bf16.mxu0 0
        %1892 = vmatpush2.bf16.msra.mxu0 0
        %1893 = vmatprep.subr.bf16.mxu0 0
        %1894 = vmatpush2.bf16.msra.mxu0 0
        %1895 = vmatprep.subr.bf16.mxu0 0
        %1896 = vmatpush2.bf16.msra.mxu0 0
        %1897 = vmatprep.subr.bf16.mxu0 0
        %1898 = vmatpush2.bf16.msra.mxu0 0
        %1899 = vmatprep.mubr.bf16.mxu0 0
        %1900 = vmatmul.mubr.bf16.gmra.mxu0 %v1824
        %v1901 = vpop.f32.mrf.mxu0
        %v1902 = vadd.f32 %v973, %v1901
        %v1903 = vpop.f32.mrf.mxu0
        %v1904 = vpop.f32.mrf.mxu0
        %v1905 = vadd.f32 %v973, %v1904
        %v1906 = vpop.f32.mrf.mxu0
        %1907 = vdwg.mxu0
        %v1908 = vpack.c.bf16 %v1818, %v1818
        %v1909 = vpack.c.bf16 %v1864, %v1861
        %v1910 = vpack.c.bf16 %v1905, %v1902
        %v1912 = vsel %vm1031, %v1908, 0
        %v1915 = vsel %vm1031, %v1909, 0
        %1917 = vmatprep.subr.bf16.mxu0 0
        %1918 = vmatpush1.bf16.xpose.msra.mxu0 0
        %1919 = vmatprep.subr.bf16.mxu0 0
        %1920 = vmatpush1.bf16.xpose.msra.mxu0 0
        %1921 = vmatprep.subr.bf16.mxu0 0
        %1922 = vmatpush1.bf16.xpose.msra.mxu0 0
        %1923 = vmatprep.subr.bf16.mxu0 0
        %1924 = vmatpush1.bf16.xpose.msra.mxu0 0
        %1925 = vmatprep.subr.bf16.mxu0 0
        %1926 = vmatpush1.bf16.xpose.msra.mxu0 0
        %1927 = vmatprep.subr.bf16.mxu0 0
        %1928 = vmatpush1.bf16.xpose.msra.mxu0 0
        %1929 = vmatprep.subr.bf16.mxu0 0
        %1930 = vmatpush1.bf16.xpose.msra.mxu0 0
        %1931 = vmatprep.subr.bf16.mxu0 0
        %1932 = vmatpush1.bf16.xpose.msra.mxu0 %v1915
        %1933 = vmatprep.subr.bf16.mxu0 0
        %1934 = vmatpush2.bf16.xpose.msra.mxu0 0
        %1935 = vmatprep.subr.bf16.mxu0 0
        %1936 = vmatpush2.bf16.xpose.msra.mxu0 0
        %1937 = vmatprep.subr.bf16.mxu0 0
        %1938 = vmatpush2.bf16.xpose.msra.mxu0 0
        %1939 = vmatprep.subr.bf16.mxu0 0
        %1940 = vmatpush2.bf16.xpose.msra.mxu0 0
        %1941 = vmatprep.subr.bf16.mxu0 0
        %1942 = vmatpush2.bf16.xpose.msra.mxu0 0
        %1943 = vmatprep.subr.bf16.mxu0 0
        %1944 = vmatpush2.bf16.xpose.msra.mxu0 0
        %1945 = vmatprep.subr.bf16.mxu0 0
        %1946 = vmatpush2.bf16.xpose.msra.mxu0 0
        %1947 = vmatprep.subr.bf16.mxu0 0
        %1948 = vmatpush2.bf16.xpose.msra.mxu0 0
        %1949 = vmatprep.mubr.bf16.mxu0 0
        %1950 = vmatmul.mubr.bf16.gmra.mxu0 %v1912
        %v1951 = vpop.f32.mrf.mxu0
        %v1952 = vadd.f32 %v1776, %v1951
        %v1953 = vpop.f32.mrf.mxu0
        %v1954 = vpop.f32.mrf.mxu0
        %v1955 = vpop.f32.mrf.mxu0
        %1956 = vdwg.mxu0
        %v1957 = vsel %vm1078, %v1952, -inf
        %1958 = vmax.xlane.f32.xlu0 %v1957
        %v1959 = vpop.xlane.xlu0 %1958
        %v1960 = vsub.f32 %v1952, %v1959
        %v1961 = vmul.f32 %v1960, 1.442695
        %v1962 = vpow.pop %v1961
        %v1963 = vsel %vm1078, %v1962, 0.0
        %1964 = vadd.xlane.f32.xlu0 %v1963
        %v1965 = vpop.xlane.xlu0 %1964
        %v1966 = vrcp.pop %v1965
        %v1967 = vmul.f32 %v1962, %v1966
        %v1968 = vadd.f32 %v1967, 0.0
        %v1969 = vpack.c.bf16 %v1967, %v1967
        %v1971 = vsel %vm1078, %v1969, 0
        %1973 = vmatprep.subr.bf16.mxu0 0
        %1974 = vmatpush1.bf16.msra.mxu0 0
        %1975 = vmatprep.subr.bf16.mxu0 0
        %1976 = vmatpush1.bf16.msra.mxu0 0
        %1977 = vmatprep.subr.bf16.mxu0 0
        %1978 = vmatpush1.bf16.msra.mxu0 0
        %1979 = vmatprep.subr.bf16.mxu0 0
        %1980 = vmatpush1.bf16.msra.mxu0 0
        %1981 = vmatprep.subr.bf16.mxu0 0
        %1982 = vmatpush1.bf16.msra.mxu0 0
        %1983 = vmatprep.subr.bf16.mxu0 0
        %1984 = vmatpush1.bf16.msra.mxu0 0
        %1985 = vmatprep.subr.bf16.mxu0 0
        %1986 = vmatpush1.bf16.msra.mxu0 0
        %1987 = vmatprep.subr.bf16.mxu0 0
        %1988 = vmatpush1.bf16.msra.mxu0 %v1910
        %1989 = vmatprep.subr.bf16.mxu0 0
        %1990 = vmatpush2.bf16.msra.mxu0 0
        %1991 = vmatprep.subr.bf16.mxu0 0
        %1992 = vmatpush2.bf16.msra.mxu0 0
        %1993 = vmatprep.subr.bf16.mxu0 0
        %1994 = vmatpush2.bf16.msra.mxu0 0
        %1995 = vmatprep.subr.bf16.mxu0 0
        %1996 = vmatpush2.bf16.msra.mxu0 0
        %1997 = vmatprep.subr.bf16.mxu0 0
        %1998 = vmatpush2.bf16.msra.mxu0 0
        %1999 = vmatprep.subr.bf16.mxu0 0
        %2000 = vmatpush2.bf16.msra.mxu0 0
        %2001 = vmatprep.subr.bf16.mxu0 0
        %2002 = vmatpush2.bf16.msra.mxu0 0
        %2003 = vmatprep.subr.bf16.mxu0 0
        %2004 = vmatpush2.bf16.msra.mxu0 0
        %2005 = vmatprep.mubr.bf16.mxu0 0
        %2006 = vmatmul.mubr.bf16.gmra.mxu0 %v1971
        %v2007 = vpop.f32.mrf.mxu0
        %v2008 = vadd.f32 0.0, %v2007
        %v2009 = vpop.f32.mrf.mxu0
        %v2010 = vpop.f32.mrf.mxu0
        %v2011 = vpop.f32.mrf.mxu0
        %2012 = vdwg.mxu0
        %2013 = vst.msk [vmem:[#allocation2] sm:$0xff] %vm1031, %v2008
        %2015 = vrot.lane.b32.xlu0 %v1908, 120
        %v2016 = vpop.permute.xlu0 %2015
        %2018 = vrot.lane.b32.xlu0 %v1909, 120
        %v2019 = vpop.permute.xlu0 %2018
        %v2021 = vsel %vm1031, %v2016, 0
        %v2024 = vsel %vm1031, %v2019, 0
        %2026 = vmatprep.subr.bf16.mxu0 0
        %2027 = vmatpush1.bf16.xpose.msra.mxu0 0
        %2028 = vmatprep.subr.bf16.mxu0 0
        %2029 = vmatpush1.bf16.xpose.msra.mxu0 0
        %2030 = vmatprep.subr.bf16.mxu0 0
        %2031 = vmatpush1.bf16.xpose.msra.mxu0 0
        %2032 = vmatprep.subr.bf16.mxu0 0
        %2033 = vmatpush1.bf16.xpose.msra.mxu0 0
        %2034 = vmatprep.subr.bf16.mxu0 0
        %2035 = vmatpush1.bf16.xpose.msra.mxu0 0
        %2036 = vmatprep.subr.bf16.mxu0 0
        %2037 = vmatpush1.bf16.xpose.msra.mxu0 0
        %2038 = vmatprep.subr.bf16.mxu0 0
        %2039 = vmatpush1.bf16.xpose.msra.mxu0 0
        %2040 = vmatprep.subr.bf16.mxu0 0
        %2041 = vmatpush1.bf16.xpose.msra.mxu0 %v2024
        %2042 = vmatprep.subr.bf16.mxu0 0
        %2043 = vmatpush2.bf16.xpose.msra.mxu0 0
        %2044 = vmatprep.subr.bf16.mxu0 0
        %2045 = vmatpush2.bf16.xpose.msra.mxu0 0
        %2046 = vmatprep.subr.bf16.mxu0 0
        %2047 = vmatpush2.bf16.xpose.msra.mxu0 0
        %2048 = vmatprep.subr.bf16.mxu0 0
        %2049 = vmatpush2.bf16.xpose.msra.mxu0 0
        %2050 = vmatprep.subr.bf16.mxu0 0
        %2051 = vmatpush2.bf16.xpose.msra.mxu0 0
        %2052 = vmatprep.subr.bf16.mxu0 0
        %2053 = vmatpush2.bf16.xpose.msra.mxu0 0
        %2054 = vmatprep.subr.bf16.mxu0 0
        %2055 = vmatpush2.bf16.xpose.msra.mxu0 0
        %2056 = vmatprep.subr.bf16.mxu0 0
        %2057 = vmatpush2.bf16.xpose.msra.mxu0 0
        %2058 = vmatprep.mubr.bf16.mxu0 0
        %2059 = vmatmul.mubr.bf16.gmra.mxu0 %v2021
        %v2060 = vpop.f32.mrf.mxu0
        %v2061 = vadd.f32 %v1776, %v2060
        %v2062 = vpop.f32.mrf.mxu0
        %v2063 = vpop.f32.mrf.mxu0
        %v2064 = vpop.f32.mrf.mxu0
        %2065 = vdwg.mxu0
        %v2066 = vsel %vm1078, %v2061, -inf
        %2067 = vmax.xlane.f32.xlu0 %v2066
        %v2068 = vpop.xlane.xlu0 %2067
        %v2069 = vsub.f32 %v2061, %v2068
        %v2070 = vmul.f32 %v2069, 1.442695
        %v2071 = vpow.pop %v2070
        %v2072 = vsel %vm1078, %v2071, 0.0
        %2073 = vadd.xlane.f32.xlu0 %v2072
        %v2074 = vpop.xlane.xlu0 %2073
        %v2075 = vrcp.pop %v2074
        %v2076 = vmul.f32 %v2071, %v2075
        %v2077 = vadd.f32 %v1968, %v2076
        %v2078 = vpack.c.bf16 %v2076, %v2076
        %2080 = vrot.lane.b32.xlu0 %v1910, 120
        %v2081 = vpop.permute.xlu0 %2080
        %v2084 = vsel %vm1078, %v2078, 0
        %2086 = vmatprep.subr.bf16.mxu0 0
        %2087 = vmatpush1.bf16.msra.mxu0 0
        %2088 = vmatprep.subr.bf16.mxu0 0
        %2089 = vmatpush1.bf16.msra.mxu0 0
        %2090 = vmatprep.subr.bf16.mxu0 0
        %2091 = vmatpush1.bf16.msra.mxu0 0
        %2092 = vmatprep.subr.bf16.mxu0 0
        %2093 = vmatpush1.bf16.msra.mxu0 0
        %2094 = vmatprep.subr.bf16.mxu0 0
        %2095 = vmatpush1.bf16.msra.mxu0 0
        %2096 = vmatprep.subr.bf16.mxu0 0
        %2097 = vmatpush1.bf16.msra.mxu0 0
        %2098 = vmatprep.subr.bf16.mxu0 0
        %2099 = vmatpush1.bf16.msra.mxu0 0
        %2100 = vmatprep.subr.bf16.mxu0 0
        %2101 = vmatpush1.bf16.msra.mxu0 %v2081
        %2102 = vmatprep.subr.bf16.mxu0 0
        %2103 = vmatpush2.bf16.msra.mxu0 0
        %2104 = vmatprep.subr.bf16.mxu0 0
        %2105 = vmatpush2.bf16.msra.mxu0 0
        %2106 = vmatprep.subr.bf16.mxu0 0
        %2107 = vmatpush2.bf16.msra.mxu0 0
        %2108 = vmatprep.subr.bf16.mxu0 0
        %2109 = vmatpush2.bf16.msra.mxu0 0
        %2110 = vmatprep.subr.bf16.mxu0 0
        %2111 = vmatpush2.bf16.msra.mxu0 0
        %2112 = vmatprep.subr.bf16.mxu0 0
        %2113 = vmatpush2.bf16.msra.mxu0 0
        %2114 = vmatprep.subr.bf16.mxu0 0
        %2115 = vmatpush2.bf16.msra.mxu0 0
        %2116 = vmatprep.subr.bf16.mxu0 0
        %2117 = vmatpush2.bf16.msra.mxu0 0
        %2118 = vmatprep.mubr.bf16.mxu0 0
        %2119 = vmatmul.mubr.bf16.gmra.mxu0 %v2084
        %v2120 = vpop.f32.mrf.mxu0
        %v2121 = vadd.f32 0.0, %v2120
        %v2122 = vpop.f32.mrf.mxu0
        %v2123 = vpop.f32.mrf.mxu0
        %v2124 = vpop.f32.mrf.mxu0
        %2125 = vdwg.mxu0
        %2127 = vrot.lane.b32.xlu0 %v2121, 8
        %v2128 = vpop.permute.xlu0 %2127
        %2130 = vst.msk [vmem:[#allocation2] sm:$0xff] %vm1252, %v2128
        %2131 = vrot.lane.b32.xlu0 %v1908, 112
        %v2132 = vpop.permute.xlu0 %2131
        %2133 = vrot.lane.b32.xlu0 %v1909, 112
        %v2134 = vpop.permute.xlu0 %2133
        %v2136 = vsel %vm1031, %v2132, 0
        %v2139 = vsel %vm1031, %v2134, 0
        %2141 = vmatprep.subr.bf16.mxu0 0
        %2142 = vmatpush1.bf16.xpose.msra.mxu0 0
        %2143 = vmatprep.subr.bf16.mxu0 0
        %2144 = vmatpush1.bf16.xpose.msra.mxu0 0
        %2145 = vmatprep.subr.bf16.mxu0 0
        %2146 = vmatpush1.bf16.xpose.msra.mxu0 0
        %2147 = vmatprep.subr.bf16.mxu0 0
        %2148 = vmatpush1.bf16.xpose.msra.mxu0 0
        %2149 = vmatprep.subr.bf16.mxu0 0
        %2150 = vmatpush1.bf16.xpose.msra.mxu0 0
        %2151 = vmatprep.subr.bf16.mxu0 0
        %2152 = vmatpush1.bf16.xpose.msra.mxu0 0
        %2153 = vmatprep.subr.bf16.mxu0 0
        %2154 = vmatpush1.bf16.xpose.msra.mxu0 0
        %2155 = vmatprep.subr.bf16.mxu0 0
        %2156 = vmatpush1.bf16.xpose.msra.mxu0 %v2139
        %2157 = vmatprep.subr.bf16.mxu0 0
        %2158 = vmatpush2.bf16.xpose.msra.mxu0 0
        %2159 = vmatprep.subr.bf16.mxu0 0
        %2160 = vmatpush2.bf16.xpose.msra.mxu0 0
        %2161 = vmatprep.subr.bf16.mxu0 0
        %2162 = vmatpush2.bf16.xpose.msra.mxu0 0
        %2163 = vmatprep.subr.bf16.mxu0 0
        %2164 = vmatpush2.bf16.xpose.msra.mxu0 0
        %2165 = vmatprep.subr.bf16.mxu0 0
        %2166 = vmatpush2.bf16.xpose.msra.mxu0 0
        %2167 = vmatprep.subr.bf16.mxu0 0
        %2168 = vmatpush2.bf16.xpose.msra.mxu0 0
        %2169 = vmatprep.subr.bf16.mxu0 0
        %2170 = vmatpush2.bf16.xpose.msra.mxu0 0
        %2171 = vmatprep.subr.bf16.mxu0 0
        %2172 = vmatpush2.bf16.xpose.msra.mxu0 0
        %2173 = vmatprep.mubr.bf16.mxu0 0
        %2174 = vmatmul.mubr.bf16.gmra.mxu0 %v2136
        %v2175 = vpop.f32.mrf.mxu0
        %v2176 = vadd.f32 %v1776, %v2175
        %v2177 = vpop.f32.mrf.mxu0
        %v2178 = vpop.f32.mrf.mxu0
        %v2179 = vpop.f32.mrf.mxu0
        %2180 = vdwg.mxu0
        %v2181 = vsel %vm1078, %v2176, -inf
        %2182 = vmax.xlane.f32.xlu0 %v2181
        %v2183 = vpop.xlane.xlu0 %2182
        %v2184 = vsub.f32 %v2176, %v2183
        %v2185 = vmul.f32 %v2184, 1.442695
        %v2186 = vpow.pop %v2185
        %v2187 = vsel %vm1078, %v2186, 0.0
        %2188 = vadd.xlane.f32.xlu0 %v2187
        %v2189 = vpop.xlane.xlu0 %2188
        %v2190 = vrcp.pop %v2189
        %v2191 = vmul.f32 %v2186, %v2190
        %v2192 = vadd.f32 %v2077, %v2191
        %v2193 = vpack.c.bf16 %v2191, %v2191
        %2194 = vrot.lane.b32.xlu0 %v1910, 112
        %v2195 = vpop.permute.xlu0 %2194
        %v2198 = vsel %vm1078, %v2193, 0
        %2200 = vmatprep.subr.bf16.mxu0 0
        %2201 = vmatpush1.bf16.msra.mxu0 0
        %2202 = vmatprep.subr.bf16.mxu0 0
        %2203 = vmatpush1.bf16.msra.mxu0 0
        %2204 = vmatprep.subr.bf16.mxu0 0
        %2205 = vmatpush1.bf16.msra.mxu0 0
        %2206 = vmatprep.subr.bf16.mxu0 0
        %2207 = vmatpush1.bf16.msra.mxu0 0
        %2208 = vmatprep.subr.bf16.mxu0 0
        %2209 = vmatpush1.bf16.msra.mxu0 0
        %2210 = vmatprep.subr.bf16.mxu0 0
        %2211 = vmatpush1.bf16.msra.mxu0 0
        %2212 = vmatprep.subr.bf16.mxu0 0
        %2213 = vmatpush1.bf16.msra.mxu0 0
        %2214 = vmatprep.subr.bf16.mxu0 0
        %2215 = vmatpush1.bf16.msra.mxu0 %v2195
        %2216 = vmatprep.subr.bf16.mxu0 0
        %2217 = vmatpush2.bf16.msra.mxu0 0
        %2218 = vmatprep.subr.bf16.mxu0 0
        %2219 = vmatpush2.bf16.msra.mxu0 0
        %2220 = vmatprep.subr.bf16.mxu0 0
        %2221 = vmatpush2.bf16.msra.mxu0 0
        %2222 = vmatprep.subr.bf16.mxu0 0
        %2223 = vmatpush2.bf16.msra.mxu0 0
        %2224 = vmatprep.subr.bf16.mxu0 0
        %2225 = vmatpush2.bf16.msra.mxu0 0
        %2226 = vmatprep.subr.bf16.mxu0 0
        %2227 = vmatpush2.bf16.msra.mxu0 0
        %2228 = vmatprep.subr.bf16.mxu0 0
        %2229 = vmatpush2.bf16.msra.mxu0 0
        %2230 = vmatprep.subr.bf16.mxu0 0
        %2231 = vmatpush2.bf16.msra.mxu0 0
        %2232 = vmatprep.mubr.bf16.mxu0 0
        %2233 = vmatmul.mubr.bf16.gmra.mxu0 %v2198
        %v2234 = vpop.f32.mrf.mxu0
        %v2235 = vadd.f32 0.0, %v2234
        %v2236 = vpop.f32.mrf.mxu0
        %v2237 = vpop.f32.mrf.mxu0
        %v2238 = vpop.f32.mrf.mxu0
        %2239 = vdwg.mxu0
        %2241 = vrot.lane.b32.xlu0 %v2235, 16
        %v2242 = vpop.permute.xlu0 %2241
        %2244 = vst.msk [vmem:[#allocation2] sm:$0xff] %vm1367, %v2242
        %2245 = vrot.lane.b32.xlu0 %v1908, 104
        %v2246 = vpop.permute.xlu0 %2245
        %2247 = vrot.lane.b32.xlu0 %v1909, 104
        %v2248 = vpop.permute.xlu0 %2247
        %v2250 = vsel %vm1031, %v2246, 0
        %v2253 = vsel %vm1031, %v2248, 0
        %2255 = vmatprep.subr.bf16.mxu0 0
        %2256 = vmatpush1.bf16.xpose.msra.mxu0 0
        %2257 = vmatprep.subr.bf16.mxu0 0
        %2258 = vmatpush1.bf16.xpose.msra.mxu0 0
        %2259 = vmatprep.subr.bf16.mxu0 0
        %2260 = vmatpush1.bf16.xpose.msra.mxu0 0
        %2261 = vmatprep.subr.bf16.mxu0 0
        %2262 = vmatpush1.bf16.xpose.msra.mxu0 0
        %2263 = vmatprep.subr.bf16.mxu0 0
        %2264 = vmatpush1.bf16.xpose.msra.mxu0 0
        %2265 = vmatprep.subr.bf16.mxu0 0
        %2266 = vmatpush1.bf16.xpose.msra.mxu0 0
        %2267 = vmatprep.subr.bf16.mxu0 0
        %2268 = vmatpush1.bf16.xpose.msra.mxu0 0
        %2269 = vmatprep.subr.bf16.mxu0 0
        %2270 = vmatpush1.bf16.xpose.msra.mxu0 %v2253
        %2271 = vmatprep.subr.bf16.mxu0 0
        %2272 = vmatpush2.bf16.xpose.msra.mxu0 0
        %2273 = vmatprep.subr.bf16.mxu0 0
        %2274 = vmatpush2.bf16.xpose.msra.mxu0 0
        %2275 = vmatprep.subr.bf16.mxu0 0
        %2276 = vmatpush2.bf16.xpose.msra.mxu0 0
        %2277 = vmatprep.subr.bf16.mxu0 0
        %2278 = vmatpush2.bf16.xpose.msra.mxu0 0
        %2279 = vmatprep.subr.bf16.mxu0 0
        %2280 = vmatpush2.bf16.xpose.msra.mxu0 0
        %2281 = vmatprep.subr.bf16.mxu0 0
        %2282 = vmatpush2.bf16.xpose.msra.mxu0 0
        %2283 = vmatprep.subr.bf16.mxu0 0
        %2284 = vmatpush2.bf16.xpose.msra.mxu0 0
        %2285 = vmatprep.subr.bf16.mxu0 0
        %2286 = vmatpush2.bf16.xpose.msra.mxu0 0
        %2287 = vmatprep.mubr.bf16.mxu0 0
        %2288 = vmatmul.mubr.bf16.gmra.mxu0 %v2250
        %v2289 = vpop.f32.mrf.mxu0
        %v2290 = vadd.f32 %v1776, %v2289
        %v2291 = vpop.f32.mrf.mxu0
        %v2292 = vpop.f32.mrf.mxu0
        %v2293 = vpop.f32.mrf.mxu0
        %2294 = vdwg.mxu0
        %v2295 = vsel %vm1078, %v2290, -inf
        %2296 = vmax.xlane.f32.xlu0 %v2295
        %v2297 = vpop.xlane.xlu0 %2296
        %v2298 = vsub.f32 %v2290, %v2297
        %v2299 = vmul.f32 %v2298, 1.442695
        %v2300 = vpow.pop %v2299
        %v2301 = vsel %vm1078, %v2300, 0.0
        %2302 = vadd.xlane.f32.xlu0 %v2301
        %v2303 = vpop.xlane.xlu0 %2302
        %v2304 = vrcp.pop %v2303
        %v2305 = vmul.f32 %v2300, %v2304
        %v2306 = vadd.f32 %v2192, %v2305
        %v2307 = vpack.c.bf16 %v2305, %v2305
        %2308 = vrot.lane.b32.xlu0 %v1910, 104
        %v2309 = vpop.permute.xlu0 %2308
        %v2312 = vsel %vm1078, %v2307, 0
        %2314 = vmatprep.subr.bf16.mxu0 0
        %2315 = vmatpush1.bf16.msra.mxu0 0
        %2316 = vmatprep.subr.bf16.mxu0 0
        %2317 = vmatpush1.bf16.msra.mxu0 0
        %2318 = vmatprep.subr.bf16.mxu0 0
        %2319 = vmatpush1.bf16.msra.mxu0 0
        %2320 = vmatprep.subr.bf16.mxu0 0
        %2321 = vmatpush1.bf16.msra.mxu0 0
        %2322 = vmatprep.subr.bf16.mxu0 0
        %2323 = vmatpush1.bf16.msra.mxu0 0
        %2324 = vmatprep.subr.bf16.mxu0 0
        %2325 = vmatpush1.bf16.msra.mxu0 0
        %2326 = vmatprep.subr.bf16.mxu0 0
        %2327 = vmatpush1.bf16.msra.mxu0 0
        %2328 = vmatprep.subr.bf16.mxu0 0
        %2329 = vmatpush1.bf16.msra.mxu0 %v2309
        %2330 = vmatprep.subr.bf16.mxu0 0
        %2331 = vmatpush2.bf16.msra.mxu0 0
        %2332 = vmatprep.subr.bf16.mxu0 0
        %2333 = vmatpush2.bf16.msra.mxu0 0
        %2334 = vmatprep.subr.bf16.mxu0 0
        %2335 = vmatpush2.bf16.msra.mxu0 0
        %2336 = vmatprep.subr.bf16.mxu0 0
        %2337 = vmatpush2.bf16.msra.mxu0 0
        %2338 = vmatprep.subr.bf16.mxu0 0
        %2339 = vmatpush2.bf16.msra.mxu0 0
        %2340 = vmatprep.subr.bf16.mxu0 0
        %2341 = vmatpush2.bf16.msra.mxu0 0
        %2342 = vmatprep.subr.bf16.mxu0 0
        %2343 = vmatpush2.bf16.msra.mxu0 0
        %2344 = vmatprep.subr.bf16.mxu0 0
        %2345 = vmatpush2.bf16.msra.mxu0 0
        %2346 = vmatprep.mubr.bf16.mxu0 0
        %2347 = vmatmul.mubr.bf16.gmra.mxu0 %v2312
        %v2348 = vpop.f32.mrf.mxu0
        %v2349 = vadd.f32 0.0, %v2348
        %v2350 = vpop.f32.mrf.mxu0
        %v2351 = vpop.f32.mrf.mxu0
        %v2352 = vpop.f32.mrf.mxu0
        %2353 = vdwg.mxu0
        %2355 = vrot.lane.b32.xlu0 %v2349, 24
        %v2356 = vpop.permute.xlu0 %2355
        %2358 = vst.msk [vmem:[#allocation2] sm:$0xff] %vm1482, %v2356
        %v2359 = vmul.f32 %v2306, 0.25
        %s2360 = scalar_lea.vmem %s774, 8 [#allocation15]
        %2361 = vst.msk [vmem:[%s2360] sm:$0xff] %vm1078, %v2359
        %v2362 = vld [vmem:[#allocation2] sm:$0xff]
        %v2363 = vpack.c.bf16 %v2362, %v2362
        %v2365 = vsel %vm863, %v2363, 0
        %2367 = vmatprep.subr.bf16.mxu0 0
        %2368 = vmatpush1.bf16.msra.mxu0 0
        %2369 = vmatprep.subr.bf16.mxu0 0
        %2370 = vmatpush1.bf16.msra.mxu0 0
        %2371 = vmatprep.subr.bf16.mxu0 0
        %2372 = vmatpush1.bf16.msra.mxu0 0
        %2373 = vmatprep.subr.bf16.mxu0 0
        %2374 = vmatpush1.bf16.msra.mxu0 0
        %2375 = vmatprep.subr.bf16.mxu0 0
        %2376 = vmatpush1.bf16.msra.mxu0 0
        %2377 = vmatprep.subr.bf16.mxu0 0
        %2378 = vmatpush1.bf16.msra.mxu0 0
        %2379 = vmatprep.subr.bf16.mxu0 0
        %2380 = vmatpush1.bf16.msra.mxu0 %v1503
        %2381 = vmatprep.subr.bf16.mxu0 0
        %2382 = vmatpush1.bf16.msra.mxu0 %v1502
        %2383 = vmatprep.subr.bf16.mxu0 0
        %2384 = vmatpush2.bf16.msra.mxu0 0
        %2385 = vmatprep.subr.bf16.mxu0 0
        %2386 = vmatpush2.bf16.msra.mxu0 0
        %2387 = vmatprep.subr.bf16.mxu0 0
        %2388 = vmatpush2.bf16.msra.mxu0 0
        %2389 = vmatprep.subr.bf16.mxu0 0
        %2390 = vmatpush2.bf16.msra.mxu0 0
        %2391 = vmatprep.subr.bf16.mxu0 0
        %2392 = vmatpush2.bf16.msra.mxu0 0
        %2393 = vmatprep.subr.bf16.mxu0 0
        %2394 = vmatpush2.bf16.msra.mxu0 0
        %2395 = vmatprep.subr.bf16.mxu0 0
        %2396 = vmatpush2.bf16.msra.mxu0 0
        %2397 = vmatprep.subr.bf16.mxu0 0
        %2398 = vmatpush2.bf16.msra.mxu0 0
        %2399 = vmatprep.mubr.bf16.mxu0 0
        %2400 = vmatmul.mubr.bf16.gmra.mxu0 %v2365
        %v2401 = vpop.f32.mrf.mxu0
        %v2402 = vadd.f32 %v1492, %v2401
        %v2403 = vpop.f32.mrf.mxu0
        %v2404 = vpop.f32.mrf.mxu0
        %v2405 = vpop.f32.mrf.mxu0
        %2406 = vdwg.mxu0
        %v2407 = vadd.f32 %v2402, %v1766
        %v2408 = vsel %vm863, %v2407, 0.0
        %2409 = vadd.xlane.f32.xlu0 %v2408
        %v2410 = vpop.xlane.xlu0 %2409
        %v2411 = vmul.f32 %v2410, %v1553
        %v2412 = vsub.f32 %v2407, %v2411
        %v2413 = vmul.f32 %v2412, %v2412
        %v2414 = vsel %vm863, %v2413, 0.0
        %2415 = vadd.xlane.f32.xlu0 %v2414
        %v2416 = vpop.xlane.xlu0 %2415
        %v2417 = vmul.f32 %v2416, %v1553
        %v2418 = vadd.f32 %v2417, 1e-05
        %v2419 = vrsqrt.pop %v2418
        %v2420 = vmul.f32 %v2412, %v2419
        %v2421 = vmul.f32 %v2420, %v1568
        %v2422 = vadd.f32 %v2421, %v1575
        %v2423 = vpack.c.bf16 %v2422, %v2422
        %v2425 = vsel %vm863, %v2423, 0
        %2427 = vmatprep.subr.bf16.mxu0 0
        %2428 = vmatpush1.bf16.msra.mxu0 0
        %2429 = vmatprep.subr.bf16.mxu0 0
        %2430 = vmatpush1.bf16.msra.mxu0 0
        %2431 = vmatprep.subr.bf16.mxu0 0
        %2432 = vmatpush1.bf16.msra.mxu0 0
        %2433 = vmatprep.subr.bf16.mxu0 0
        %2434 = vmatpush1.bf16.msra.mxu0 0
        %2435 = vmatprep.subr.bf16.mxu0 0
        %2436 = vmatpush1.bf16.msra.mxu0 0
        %2437 = vmatprep.subr.bf16.mxu0 0
        %2438 = vmatpush1.bf16.msra.mxu0 0
        %2439 = vmatprep.subr.bf16.mxu0 0
        %2440 = vmatpush1.bf16.msra.mxu0 %v1594
        %2441 = vmatprep.subr.bf16.mxu0 0
        %2442 = vmatpush1.bf16.msra.mxu0 %v1593
        %2443 = vmatprep.subr.bf16.mxu0 0
        %2444 = vmatpush2.bf16.msra.mxu0 0
        %2445 = vmatprep.subr.bf16.mxu0 0
        %2446 = vmatpush2.bf16.msra.mxu0 0
        %2447 = vmatprep.subr.bf16.mxu0 0
        %2448 = vmatpush2.bf16.msra.mxu0 0
        %2449 = vmatprep.subr.bf16.mxu0 0
        %2450 = vmatpush2.bf16.msra.mxu0 0
        %2451 = vmatprep.subr.bf16.mxu0 0
        %2452 = vmatpush2.bf16.msra.mxu0 0
        %2453 = vmatprep.subr.bf16.mxu0 0
        %2454 = vmatpush2.bf16.msra.mxu0 0
        %2455 = vmatprep.subr.bf16.mxu0 0
        %2456 = vmatpush2.bf16.msra.mxu0 0
        %2457 = vmatprep.subr.bf16.mxu0 0
        %2458 = vmatpush2.bf16.msra.mxu0 0
        %2459 = vmatprep.mubr.bf16.mxu0 0
        %2460 = vmatmul.mubr.bf16.gmra.mxu0 %v2425
        %v2461 = vpop.f32.mrf.mxu0
        %v2462 = vadd.f32 %v1583, %v2461
        %v2463 = vpop.f32.mrf.mxu0
        %v2464 = vpop.f32.mrf.mxu0
        %v2465 = vpop.f32.mrf.mxu0
        %2466 = vdwg.mxu0
        %v2467 = vmax.f32 %v2462, 0.0
        %v2468 = vpack.c.bf16 %v2467, %v2467
        %2469 = vmatprep.subr.bf16.mxu0 0
        %2470 = vmatpush1.bf16.msra.mxu0 %v1687
        %2471 = vmatprep.subr.bf16.mxu0 0
        %2472 = vmatpush1.bf16.msra.mxu0 %v1686
        %2473 = vmatprep.subr.bf16.mxu0 0
        %2474 = vmatpush1.bf16.msra.mxu0 %v1685
        %2475 = vmatprep.subr.bf16.mxu0 0
        %2476 = vmatpush1.bf16.msra.mxu0 %v1684
        %2477 = vmatprep.subr.bf16.mxu0 0
        %2478 = vmatpush1.bf16.msra.mxu0 %v1683
        %2479 = vmatprep.subr.bf16.mxu0 0
        %2480 = vmatpush1.bf16.msra.mxu0 %v1682
        %2481 = vmatprep.subr.bf16.mxu0 0
        %2482 = vmatpush1.bf16.msra.mxu0 %v1681
        %2483 = vmatprep.subr.bf16.mxu0 0
        %2484 = vmatpush1.bf16.msra.mxu0 %v1680
        %2485 = vmatprep.subr.bf16.mxu0 0
        %2486 = vmatpush2.bf16.msra.mxu0 0
        %2487 = vmatprep.subr.bf16.mxu0 0
        %2488 = vmatpush2.bf16.msra.mxu0 0
        %2489 = vmatprep.subr.bf16.mxu0 0
        %2490 = vmatpush2.bf16.msra.mxu0 0
        %2491 = vmatprep.subr.bf16.mxu0 0
        %2492 = vmatpush2.bf16.msra.mxu0 0
        %2493 = vmatprep.subr.bf16.mxu0 0
        %2494 = vmatpush2.bf16.msra.mxu0 0
        %2495 = vmatprep.subr.bf16.mxu0 0
        %2496 = vmatpush2.bf16.msra.mxu0 0
        %2497 = vmatprep.subr.bf16.mxu0 0
        %2498 = vmatpush2.bf16.msra.mxu0 0
        %2499 = vmatprep.subr.bf16.mxu0 0
        %2500 = vmatpush2.bf16.msra.mxu0 0
        %2501 = vmatprep.mubr.bf16.mxu0 0
        %2502 = vmatmul.mubr.bf16.gmra.mxu0 %v2468
        %v2503 = vpop.f32.mrf.mxu0
        %v2504 = vadd.f32 %v1646, %v2503
        %v2505 = vpop.f32.mrf.mxu0
        %v2506 = vpop.f32.mrf.mxu0
        %v2507 = vpop.f32.mrf.mxu0
        %2508 = vdwg.mxu0
        %v2509 = vadd.f32 %v2504, %v2422
        %v2510 = vsel %vm863, %v2509, 0.0
        %2511 = vadd.xlane.f32.xlu0 %v2510
        %v2512 = vpop.xlane.xlu0 %2511
        %v2513 = vmul.f32 %v2512, %v1553
        %v2514 = vsub.f32 %v2509, %v2513
        %v2515 = vmul.f32 %v2514, %v2514
        %v2516 = vsel %vm863, %v2515, 0.0
        %2517 = vadd.xlane.f32.xlu0 %v2516
        %v2518 = vpop.xlane.xlu0 %2517
        %v2519 = vmul.f32 %v2518, %v1553
        %v2520 = vadd.f32 %v2519, 1e-05
        %v2521 = vrsqrt.pop %v2520
        %v2522 = vmul.f32 %v2514, %v2521
        %v2523 = vmul.f32 %v2522, %v1754
        %v2524 = vadd.f32 %v2523, %v1761
        %s2525 = scalar_lea.vmem %s767, 8 [#allocation14]
        %2526 = vst.msk [vmem:[%s2525] sm:$0xff] %vm863, %v2524
        %s2527 = sand.u32 %s468, 1
        %s2528 = scalar_lea.sflag [#allocation5], %s2527
        %s2529 = sand.u32 %s468, 1
        %s2530 = smul.addr %s2529, 16
        %s2531 = scalar_lea.vmem [#allocation14], %s2530
        %s2532 = sand.u32 %s494, 1
        %s2533 = scalar_lea.sflag [#allocation16], %s2532
        %s2534 = sand.u32 %s494, 1
        %s2535 = smul.addr %s2534, 16
        %s2536 = scalar_lea.vmem [#allocation15], %s2535
        // Predicated region
        $region121: #{tpu_custom_call.1} parent=95 // pred_check
          %p2537 = pneg %p478
        $region122: #{tpu_custom_call.1} parent=95 // pred_check_branch
          %2539 = sbr.rel (%p2537) target = $region124
        $region123: #{tpu_custom_call.1} parent=95 // pred_region
          %s2540 = smul.u32 2, %s46
          %s2542 = ssub.s32 256, 256
          %2543 = vsyncadd %s2528, %s2542
          %s2544 = smul.addr %s2540, 128
          %s2545 = scalar_lea.hbm %s19, %s2544
          %s2546 = sshll.u32 %s2531, 4
          %s2547 = int_to_ptr.vmem [resolvable:$true] %s2546
          %2552 = dma.vmem_to_hbm [thread:$0]  %s2547, 256, %s2545, %s2528, 128, 128, 8
        $region124: #{tpu_custom_call.1} parent=95 // pred_fallthru
          _
        // Predicated region
        $region125: #{tpu_custom_call.1} parent=95 // pred_check
          %p2553 = pneg %p504
        $region126: #{tpu_custom_call.1} parent=95 // pred_check_branch
          %2555 = sbr.rel (%p2553) target = $region128
        $region127: #{tpu_custom_call.1} parent=95 // pred_region
          %s2556 = smul.u32 2, %s46
          %s2558 = ssub.s32 256, 256
          %2559 = vsyncadd %s2533, %s2558
          %s2560 = smul.addr %s2556, 128
          %s2561 = scalar_lea.hbm %s20, %s2560
          %s2562 = sshll.u32 %s2536, 4
          %s2563 = int_to_ptr.vmem [resolvable:$true] %s2562
          %2568 = dma.vmem_to_hbm [thread:$0]  %s2563, 256, %s2561, %s2533, 128, 128, 8
        $region128: #{tpu_custom_call.1} parent=95 // pred_fallthru
          _
      $region96: #{tpu_custom_call.1} parent=5 // pred_fallthru
        _
      %p2569 = scmp.le.s32.totalorder 2, %s41
      // Predicated region
      $region129: #{tpu_custom_call.1} parent=5 // pred_check
        %p2570 = pneg %p2569
      $region130: #{tpu_custom_call.1} parent=5 // pred_check_branch
        %2572 = sbr.rel (%p2570) target = $region132
      $region131: #{tpu_custom_call.1} parent=5 // pred_region
        %s2573 = ssub.s32 %s41, 2
        // Predicated region
        $region133: #{tpu_custom_call.1} parent=131 // pred_check
          %p2574 = pneg %p484
        $region134: #{tpu_custom_call.1} parent=131 // pred_check_branch
          %2576 = sbr.rel (%p2574) target = $region136
        $region135: #{tpu_custom_call.1} parent=131 // pred_region
          %s2577 = sand.u32 %s469, 1
          %s2578 = scalar_lea.sflag [#allocation5], %s2577
          %s2579 = sand.u32 %s469, 1
          %s2580 = smul.addr %s2579, 16
          %s2581 = scalar_lea.vmem [#allocation14], %s2580
          %2582 = dma.done %s2578, 256
        $region136: #{tpu_custom_call.1} parent=131 // pred_fallthru
          _
        // Predicated region
        $region137: #{tpu_custom_call.1} parent=131 // pred_check
          %p2583 = pneg %p510
        $region138: #{tpu_custom_call.1} parent=131 // pred_check_branch
          %2585 = sbr.rel (%p2583) target = $region140
        $region139: #{tpu_custom_call.1} parent=131 // pred_region
          %s2586 = sand.u32 %s495, 1
          %s2587 = scalar_lea.sflag [#allocation16], %s2586
          %s2588 = sand.u32 %s495, 1
          %s2589 = smul.addr %s2588, 16
          %s2590 = scalar_lea.vmem [#allocation15], %s2589
          %2591 = dma.done %s2587, 256
        $region140: #{tpu_custom_call.1} parent=131 // pred_fallthru
          _
      $region132: #{tpu_custom_call.1} parent=5 // pred_fallthru
        _
    $region6: #{tpu_custom_call.1} parent=1 // loop_footer
      %s45 = sadd.s32 1, %s41
    $region7: #{tpu_custom_call.1} parent=1 // loop_footer_branch
      %40 = sbr.rel target = $region3
    $region8: #{tpu_custom_call.1} parent=1 // loop_exit
      _
    %2592 = vsyncpa [#allocation4], 1
    %s2593 = scalar_lea.sflag [#allocation4], 1
    %2594 = vsyncpa %s2593, 1
    %2595 = vsyncpa [#allocation7], 1
    %s2596 = scalar_lea.sflag [#allocation7], 1
    %2597 = vsyncpa %s2596, 1
    %2598 = vsyncpa [#allocation10], 1
    %2599 = vsyncpa [#allocation13], 1
    %2600 = vsyncpa [#allocation5], 1
    %s2601 = scalar_lea.sflag [#allocation5], 1
    %2602 = vsyncpa %s2601, 1
    %2603 = vsyncpa [#allocation16], 1
    %s2604 = scalar_lea.sflag [#allocation16], 1
    %2605 = vsyncpa %s2604, 1

</llo_original>
